<compile_context>
chip_gen: v5e
topology: v5e:2x2
jax: 0.10.0
libtpu: 0.0.40
codegen_flags: <defaults>
</compile_context>

<pallas_src>
import jax
import jax.numpy as jnp
from jax.experimental import pallas as pl
from jax.experimental.pallas import tpu as pltpu

IN_F = (1792 + 1) * 2          # 3586
H1, H2, OUT_F = 500, 100, 2
EPS = 1e-5


def _round_up(n, m):
    return ((n + m - 1) // m) * m


# lane-aligned (multiple-of-128) padded feature dims
IN_P = _round_up(IN_F, 128)    # 3712
H1_P = _round_up(H1, 128)      # 512
H2_P = _round_up(H2, 128)      # 128
OUT_P = _round_up(OUT_F, 128)  # 128


def mlp_kernel(x_ref, w1_ref, b1_ref, w2_ref, b2_ref, w3_ref, b3_ref, o_ref):
    # Eval-mode forward. BatchNorms pre-folded into Linear weights/biases, Dropout is
    # identity. x_ref is already bf16; MXU operands bf16, f32 accumulation / epilogue.
    # TODO(synk): train-mode Dropout / batch-statistic BatchNorm not implemented (eval only).
    h = jnp.dot(x_ref[...], w1_ref[...],
                preferred_element_type=jnp.float32) + b1_ref[...]
    h = jnp.maximum(h, 0.0)

    h = jnp.dot(h.astype(jnp.bfloat16), w2_ref[...],
                preferred_element_type=jnp.float32) + b2_ref[...]
    h = jnp.maximum(h, 0.0)

    o_ref[...] = (jnp.dot(h.astype(jnp.bfloat16), w3_ref[...],
                          preferred_element_type=jnp.float32)
                  + b3_ref[...]).astype(o_ref.dtype)


# ----------------------------- parameter handling -----------------------------

def init_raw_params(key):
    """Torch-like raw parameters (Linear W/b + BatchNorm gamma/beta/running stats)."""
    ks = jax.random.split(key, 18)

    def linear_init(kw, kb, fan_in, fan_out):
        bound = fan_in ** -0.5
        w = jax.random.uniform(kw, (fan_in, fan_out), jnp.float32, -bound, bound)
        b = jax.random.uniform(kb, (fan_out,), jnp.float32, -bound, bound)
        return w, b

    def bn_init(kg, kb, km, kv, f):
        # non-trivial BN params so the folding path is actually exercised
        gamma = jax.random.uniform(kg, (f,), jnp.float32, 0.5, 1.5)
        beta = 0.1 * jax.random.normal(kb, (f,), jnp.float32)
        mean = 0.1 * jax.random.normal(km, (f,), jnp.float32)
        var = jax.random.uniform(kv, (f,), jnp.float32, 0.5, 1.5)
        return gamma, beta, mean, var

    bn0 = bn_init(*ks[0:4], IN_F)
    w1, b1 = linear_init(ks[4], ks[5], IN_F, H1)
    bn1 = bn_init(*ks[6:10], H1)
    w2, b2 = linear_init(ks[10], ks[11], H1, H2)
    bn2 = bn_init(*ks[12:16], H2)
    w3, b3 = linear_init(ks[16], ks[17], H2, OUT_F)
    return dict(bn0=bn0, l1=(w1, b1), bn1=bn1, l2=(w2, b2), bn2=bn2, l3=(w3, b3))


def _bn_scale_shift(gamma, beta, mean, var, eps=EPS):
    s = gamma / jnp.sqrt(var + eps)
    t = beta - mean * s
    return s, t


def _pad_w(w, rows, cols):
    return jnp.zeros((rows, cols), jnp.float32).at[:w.shape[0], :w.shape[1]].set(w)


def _pad_b(b, cols):
    return jnp.zeros((1, cols), jnp.float32).at[0, :b.shape[0]].set(b)


def prepare_params(raw):
    """Fold BNs into the Linears (f32), pad to lane-aligned shapes, cast weights to bf16."""
    s0, t0 = _bn_scale_shift(*raw["bn0"])
    s1, t1 = _bn_scale_shift(*raw["bn1"])
    s2, t2 = _bn_scale_shift(*raw["bn2"])
    w1, b1 = raw["l1"]
    w2, b2 = raw["l2"]
    w3, b3 = raw["l3"]

    # fold BN0 (input side) and BN1 (output side) into Linear1:
    #   ((x*s0 + t0) @ W1 + b1) * s1 + t1  ==  x @ W1'' + b1''
    b1 = t0 @ w1 + b1
    w1 = s0[:, None] * w1
    w1 = w1 * s1[None, :]
    b1 = b1 * s1 + t1

    # fold BN2 (output side) into Linear2
    w2 = w2 * s2[None, :]
    b2 = b2 * s2 + t2

    w1p = _pad_w(w1, IN_P, H1_P).astype(jnp.bfloat16)
    b1p = _pad_b(b1, H1_P)
    w2p = _pad_w(w2, H1_P, H2_P).astype(jnp.bfloat16)
    b2p = _pad_b(b2, H2_P)
    w3p = _pad_w(w3, H2_P, OUT_P).astype(jnp.bfloat16)
    b3p = _pad_b(b3, OUT_P)
    return (w1p, b1p, w2p, b2p, w3p, b3p)


# --------------------------------- forward ------------------------------------

def mymodel_forward(x, kparams, tm=512):
    w1, b1, w2, b2, w3, b3 = kparams
    B = x.shape[0]

    # Pick the batch tile:
    #  * large batch: big TM (512) to amortize per-grid-step overhead,
    #  * small/medium batch: split into >=2 tiles so both v7x TensorCores get work,
    #  * tiny batch (<=8 rows): single minimal sublane-aligned tile.
    bp8 = _round_up(max(B, 8), 8)
    if bp8 >= 2 * tm:
        TM = tm
    elif bp8 > 8:
        TM = _round_up((bp8 + 1) // 2, 8)
    else:
        TM = bp8
    Bp = _round_up(bp8, TM)

    # fused zero-pad + bf16 cast of the activation stream (halves x HBM traffic)
    xp = jnp.zeros((Bp, IN_P), jnp.bfloat16).at[:B, :IN_F].set(x.astype(jnp.bfloat16))

    out = pl.pallas_call(
        mlp_kernel,
        out_shape=jax.ShapeDtypeStruct((Bp, OUT_P), jnp.float32),
        grid=(Bp // TM,),
        in_specs=[
            pl.BlockSpec((TM, IN_P), lambda i: (i, 0)),     # bf16 activation tiles stream
            pl.BlockSpec((IN_P, H1_P), lambda i: (0, 0)),   # weights VMEM-resident
            pl.BlockSpec((1, H1_P), lambda i: (0, 0)),
            pl.BlockSpec((H1_P, H2_P), lambda i: (0, 0)),
            pl.BlockSpec((1, H2_P), lambda i: (0, 0)),
            pl.BlockSpec((H2_P, OUT_P), lambda i: (0, 0)),
            pl.BlockSpec((1, OUT_P), lambda i: (0, 0)),
        ],
        out_specs=pl.BlockSpec((TM, OUT_P), lambda i: (i, 0)),
        compiler_params=pltpu.CompilerParams(
            dimension_semantics=("parallel",),   # shard batch tiles across TCs on v7x
            vmem_limit_bytes=48 << 20,           # ~18 MiB footprint at TM=512; <64 MiB v7x
        ),
    )(xp, w1, b1, w2, b2, w3, b3)

    return out[:B, :OUT_F]


def reference_forward(x, raw):
    """Pure-JAX eval-mode reference of the original nn.Sequential (f32 throughout)."""
    def bn(h, g, be, m, v):
        return (h - m) / jnp.sqrt(v + EPS) * g + be

    w1, b1 = raw["l1"]
    w2, b2 = raw["l2"]
    w3, b3 = raw["l3"]
    h = bn(x, *raw["bn0"])
    h = jnp.maximum(bn(h @ w1 + b1, *raw["bn1"]), 0.0)
    h = jnp.maximum(bn(h @ w2 + b2, *raw["bn2"]), 0.0)
    return h @ w3 + b3


if __name__ == "__main__":
    key = jax.random.PRNGKey(0)
    kx, kp = jax.random.split(key)

    B = 8
    x = jax.random.normal(kx, (B, IN_F), jnp.float32)

    raw = init_raw_params(kp)
    kparams = prepare_params(raw)

    out = jax.block_until_ready(mymodel_forward(x, kparams))
    ref = reference_forward(x, raw)

    assert out.shape == (B, OUT_F)
    # bf16 x / bf16 weights over K=3586 -> ~1e-2 level error vs the f32 reference
    max_err = float(jnp.max(jnp.abs(out - ref)))
    assert jnp.allclose(out, ref, atol=5e-2, rtol=5e-2), f"max abs err {max_err}"

    print("KERNEL_OK")
</pallas_src>

<mosaic_0001>
module attributes {stable_mosaic.version = 11 : i64} {
  func.func @mlp_kernel(%arg0: i32, %arg1: memref<8x3712xbf16, #tpu.memory_space<vmem>>, %arg2: memref<3712x512xbf16, #tpu.memory_space<vmem>>, %arg3: memref<1x512xf32, #tpu.memory_space<vmem>>, %arg4: memref<512x128xbf16, #tpu.memory_space<vmem>>, %arg5: memref<1x128xf32, #tpu.memory_space<vmem>>, %arg6: memref<128x128xbf16, #tpu.memory_space<vmem>>, %arg7: memref<1x128xf32, #tpu.memory_space<vmem>>, %arg8: memref<8x128xf32, #tpu.memory_space<vmem>>) attributes {dimension_semantics = [#tpu.dimension_semantics<parallel>], iteration_bounds = array<i64: 1>, scalar_prefetch = 0 : i64, scratch_operands = 0 : i64, tpu.core_type = #tpu.core_type<tc>, window_params = [{transform_indices = @transform_0, window_bounds = array<i64: 8, 3712>}, {pipeline_mode = #tpu.pipeline_mode<synchronous>, transform_indices = @transform_1, window_bounds = array<i64: 3712, 512>}, {pipeline_mode = #tpu.pipeline_mode<synchronous>, transform_indices = @transform_2, window_bounds = array<i64: 1, 512>}, {pipeline_mode = #tpu.pipeline_mode<synchronous>, transform_indices = @transform_3, window_bounds = array<i64: 512, 128>}, {pipeline_mode = #tpu.pipeline_mode<synchronous>, transform_indices = @transform_4, window_bounds = array<i64: 1, 128>}, {pipeline_mode = #tpu.pipeline_mode<synchronous>, transform_indices = @transform_5, window_bounds = array<i64: 128, 128>}, {pipeline_mode = #tpu.pipeline_mode<synchronous>, transform_indices = @transform_6, window_bounds = array<i64: 1, 128>}, {transform_indices = @transform_7, window_bounds = array<i64: 8, 128>}]} {
    %c0 = arith.constant 0 : index
    %c0_0 = arith.constant 0 : index
    %0 = vector.load %arg1[%c0, %c0_0] : memref<8x3712xbf16, #tpu.memory_space<vmem>>, vector<8x3712xbf16>
    %c0_1 = arith.constant 0 : index
    %c0_2 = arith.constant 0 : index
    %1 = vector.load %arg2[%c0_1, %c0_2] : memref<3712x512xbf16, #tpu.memory_space<vmem>>, vector<3712x512xbf16>
    %cst = arith.constant dense<0.000000e+00> : vector<8x512xf32>
    %2 = tpu.matmul %0, %1, %cst {dimension_numbers = #tpu.dot_dimension_numbers<[1], [0], [0], [1], [0, 0, 1, 1], [], []>} : vector<8x3712xbf16>, vector<3712x512xbf16>, vector<8x512xf32> -> vector<8x512xf32>
    %c0_3 = arith.constant 0 : index
    %c0_4 = arith.constant 0 : index
    %3 = vector.load %arg3[%c0_3, %c0_4] : memref<1x512xf32, #tpu.memory_space<vmem>>, vector<1x512xf32>
    %4 = vector.broadcast %3 : vector<1x512xf32> to vector<8x512xf32>
    %5 = arith.addf %2, %4 : vector<8x512xf32>
    %cst_5 = arith.constant 0.000000e+00 : f32
    %6 = vector.broadcast %cst_5 : f32 to vector<8x512xf32>
    %7 = arith.maximumf %5, %6 : vector<8x512xf32>
    %8 = arith.truncf %7 : vector<8x512xf32> to vector<8x512xbf16>
    %c0_6 = arith.constant 0 : index
    %c0_7 = arith.constant 0 : index
    %9 = vector.load %arg4[%c0_6, %c0_7] : memref<512x128xbf16, #tpu.memory_space<vmem>>, vector<512x128xbf16>
    %cst_8 = arith.constant dense<0.000000e+00> : vector<8x128xf32>
    %10 = tpu.matmul %8, %9, %cst_8 {dimension_numbers = #tpu.dot_dimension_numbers<[1], [0], [0], [1], [0, 0, 1, 1], [], []>} : vector<8x512xbf16>, vector<512x128xbf16>, vector<8x128xf32> -> vector<8x128xf32>
    %c0_9 = arith.constant 0 : index
    %c0_10 = arith.constant 0 : index
    %11 = vector.load %arg5[%c0_9, %c0_10] : memref<1x128xf32, #tpu.memory_space<vmem>>, vector<1x128xf32>
    %12 = vector.broadcast %11 : vector<1x128xf32> to vector<8x128xf32>
    %13 = arith.addf %10, %12 : vector<8x128xf32>
    %cst_11 = arith.constant 0.000000e+00 : f32
    %14 = vector.broadcast %cst_11 : f32 to vector<8x128xf32>
    %15 = arith.maximumf %13, %14 : vector<8x128xf32>
    %16 = arith.truncf %15 : vector<8x128xf32> to vector<8x128xbf16>
    %c0_12 = arith.constant 0 : index
    %c0_13 = arith.constant 0 : index
    %17 = vector.load %arg6[%c0_12, %c0_13] : memref<128x128xbf16, #tpu.memory_space<vmem>>, vector<128x128xbf16>
    %cst_14 = arith.constant dense<0.000000e+00> : vector<8x128xf32>
    %18 = tpu.matmul %16, %17, %cst_14 {dimension_numbers = #tpu.dot_dimension_numbers<[1], [0], [0], [1], [0, 0, 1, 1], [], []>} : vector<8x128xbf16>, vector<128x128xbf16>, vector<8x128xf32> -> vector<8x128xf32>
    %c0_15 = arith.constant 0 : index
    %c0_16 = arith.constant 0 : index
    %19 = vector.load %arg7[%c0_15, %c0_16] : memref<1x128xf32, #tpu.memory_space<vmem>>, vector<1x128xf32>
    %20 = vector.broadcast %19 : vector<1x128xf32> to vector<8x128xf32>
    %21 = arith.addf %18, %20 : vector<8x128xf32>
    %c0_17 = arith.constant 0 : index
    %c0_18 = arith.constant 0 : index
    %22 = vector.load %arg8[%c0_17, %c0_18] : memref<8x128xf32, #tpu.memory_space<vmem>>, vector<8x128xf32>
    tpu.vector_store %arg8[%c0_17, %c0_18], %21 {strides = array<i32>} : memref<8x128xf32, #tpu.memory_space<vmem>>, vector<8x128xf32>,
    return
  }
  func.func @transform_0(%arg0: i32) -> (i32, i32) {
    %c0_i32 = arith.constant 0 : i32
    %c0_i32_0 = arith.constant 0 : i32
    return %arg0, %c0_i32 : i32, i32
  }
  func.func @transform_1(%arg0: i32) -> (i32, i32) {
    %c0_i32 = arith.constant 0 : i32
    %c0_i32_0 = arith.constant 0 : i32
    %c0_i32_1 = arith.constant 0 : i32
    return %c0_i32, %c0_i32_0 : i32, i32
  }
  func.func @transform_2(%arg0: i32) -> (i32, i32) {
    %c0_i32 = arith.constant 0 : i32
    %c0_i32_0 = arith.constant 0 : i32
    %c0_i32_1 = arith.constant 0 : i32
    return %c0_i32, %c0_i32_0 : i32, i32
  }
  func.func @transform_3(%arg0: i32) -> (i32, i32) {
    %c0_i32 = arith.constant 0 : i32
    %c0_i32_0 = arith.constant 0 : i32
    %c0_i32_1 = arith.constant 0 : i32
    return %c0_i32, %c0_i32_0 : i32, i32
  }
  func.func @transform_4(%arg0: i32) -> (i32, i32) {
    %c0_i32 = arith.constant 0 : i32
    %c0_i32_0 = arith.constant 0 : i32
    %c0_i32_1 = arith.constant 0 : i32
    return %c0_i32, %c0_i32_0 : i32, i32
  }
  func.func @transform_5(%arg0: i32) -> (i32, i32) {
    %c0_i32 = arith.constant 0 : i32
    %c0_i32_0 = arith.constant 0 : i32
    %c0_i32_1 = arith.constant 0 : i32
    return %c0_i32, %c0_i32_0 : i32, i32
  }
  func.func @transform_6(%arg0: i32) -> (i32, i32) {
    %c0_i32 = arith.constant 0 : i32
    %c0_i32_0 = arith.constant 0 : i32
    %c0_i32_1 = arith.constant 0 : i32
    return %c0_i32, %c0_i32_0 : i32, i32
  }
  func.func @transform_7(%arg0: i32) -> (i32, i32) {
    %c0_i32 = arith.constant 0 : i32
    %c0_i32_0 = arith.constant 0 : i32
    return %arg0, %c0_i32 : i32, i32
  }
}

</mosaic_0001>

<llo_original>
// kernel: tpu_custom_call.1
$region0: #{tpu_custom_call.1}
  #allocation0 [shape = 'u32[]', space=smem, size = 0x4, offset = 0x4, fixed_abs, tag = 'smem constant byte address 0x4 - core index']
  #allocation1 [shape = 'u32[72,128]{1,0:T(1,128)}', space=vmem, size = 0x9000, scoped, tag = 'internal scratch']
  %s0 = inlined_call_operand.hbm [shape: bf16[8,3712], index: 0, kind: input, shape index: {}]
  %s1 = inlined_call_operand.hbm [shape: bf16[3712,512], index: 1, kind: input, shape index: {}]
  %s2 = inlined_call_operand.hbm [shape: f32[1,512], index: 2, kind: input, shape index: {}]
  %s3 = inlined_call_operand.hbm [shape: bf16[512,128], index: 3, kind: input, shape index: {}]
  %s4 = inlined_call_operand.hbm [shape: f32[1,128], index: 4, kind: input, shape index: {}]
  %s5 = inlined_call_operand.hbm [shape: bf16[128,128], index: 5, kind: input, shape index: {}]
  %s6 = inlined_call_operand.hbm [shape: f32[1,128], index: 6, kind: input, shape index: {}]
  %s7 = inlined_call_operand.hbm [shape: f32[8,128], index: 7, kind: output, shape index: {}]
  %s8 = sld [smem:[#allocation0]]
  $region66: #{tpu_custom_call.1} parent=0
    _
  %s10 = ssub.s32 1, %s8
  %s11 = scalar_select 0, %s10, %s8
  $region1: #{tpu_custom_call.1} parent=0
    #allocation2 [shape = 'u8[59392]{0}', space=vmem, size = 0xe800, scoped, tag = 'input window, operand 0, single buffered']
    #allocation3 [shape = 's32[1]{0}', space=sflag, size = 0x4, scoped, tag = 'scoped memory for tpu_custom_call.1']
    #allocation4 [shape = 's32[1]{0}', space=sflag, size = 0x4, scoped, tag = 'scoped memory for tpu_custom_call.1']
    #allocation5 [shape = 'u8[3801088]{0}', space=vmem, size = 0x3a0000, scoped, tag = 'input window, operand 1, single buffered']
    #allocation6 [shape = 's32[1]{0}', space=sflag, size = 0x4, scoped, tag = 'scoped memory for tpu_custom_call.1']
    #allocation7 [shape = 'u8[2048]{0}', space=vmem, size = 0x800, scoped, tag = 'input window, operand 2, single buffered']
    #allocation8 [shape = 'u8[131072]{0}', space=vmem, size = 0x20000, scoped, tag = 'input window, operand 3, single buffered']
    #allocation9 [shape = 's32[1]{0}', space=sflag, size = 0x4, scoped, tag = 'scoped memory for tpu_custom_call.1']
    #allocation10 [shape = 'u8[512]{0}', space=vmem, size = 0x400, scoped, tag = 'input window, operand 4, single buffered']
    #allocation11 [shape = 'u8[32768]{0}', space=vmem, size = 0x8000, scoped, tag = 'input window, operand 5, single buffered']
    #allocation12 [shape = 's32[1]{0}', space=sflag, size = 0x4, scoped, tag = 'scoped memory for tpu_custom_call.1']
    #allocation13 [shape = 'u8[512]{0}', space=vmem, size = 0x400, scoped, tag = 'input window, operand 6, single buffered']
    #allocation14 [shape = 'u8[4096]{0}', space=vmem, size = 0x1000, scoped, tag = 'output window, operand 0, single buffered']
    %12 = vsyncpa [#allocation3], 0
    %13 = vsyncpa [#allocation6], 0
    %14 = vsyncpa [#allocation9], 0
    %15 = vsyncpa [#allocation12], 0
    %16 = vsyncpa [#allocation4], 0
    // Predicated region
    $region2: #{tpu_custom_call.1} parent=1 // pred_check
      _
    $region3: #{tpu_custom_call.1} parent=1 // pred_check_branch
      %18 = sbr.rel (0) target = $region5
    $region4: #{tpu_custom_call.1} parent=1 // pred_region
      %20 = vsyncadd [#allocation3], 0
      %s22 = sshll.u32 %s0, 4
      %s23 = int_to_ptr.hbm [resolvable:$true] %s22
      %s24 = sshll.u32 [#allocation2], 4
      %s25 = int_to_ptr.vmem [resolvable:$true] %s24
      %27 = dma.hbm_to_vmem [thread:$0]  %s23, 1856, %s25, [#allocation3]
    $region5: #{tpu_custom_call.1} parent=1 // pred_fallthru
      _
    // Predicated region
    $region6: #{tpu_custom_call.1} parent=1 // pred_check
      _
    $region7: #{tpu_custom_call.1} parent=1 // pred_check_branch
      %29 = sbr.rel (0) target = $region9
    $region8: #{tpu_custom_call.1} parent=1 // pred_region
      %31 = vsyncadd [#allocation6], 0
      %s32 = sshll.u32 %s1, 4
      %s33 = int_to_ptr.hbm [resolvable:$true] %s32
      %s34 = sshll.u32 [#allocation5], 4
      %s35 = int_to_ptr.vmem [resolvable:$true] %s34
      %40 = dma.hbm_to_vmem [thread:$0]  %s33, 118784, %s35, [#allocation6], 256, 256, 16
    $region9: #{tpu_custom_call.1} parent=1 // pred_fallthru
      _
    // Predicated region
    $region10: #{tpu_custom_call.1} parent=1 // pred_check
      _
    $region11: #{tpu_custom_call.1} parent=1 // pred_check_branch
      %42 = sbr.rel (0) target = $region13
    $region12: #{tpu_custom_call.1} parent=1 // pred_region
      %44 = vsyncadd [#allocation6], 0
      %s46 = sshll.u32 %s2, 4
      %s47 = int_to_ptr.hbm [resolvable:$true] %s46
      %s48 = sshll.u32 [#allocation7], 4
      %s49 = int_to_ptr.vmem [resolvable:$true] %s48
      %51 = dma.hbm_to_vmem [thread:$0]  %s47, 64, %s49, [#allocation6]
    $region13: #{tpu_custom_call.1} parent=1 // pred_fallthru
      _
    // Predicated region
    $region14: #{tpu_custom_call.1} parent=1 // pred_check
      _
    $region15: #{tpu_custom_call.1} parent=1 // pred_check_branch
      %53 = sbr.rel (0) target = $region17
    $region16: #{tpu_custom_call.1} parent=1 // pred_region
      %55 = vsyncadd [#allocation9], 0
      %s56 = sshll.u32 %s3, 4
      %s57 = int_to_ptr.hbm [resolvable:$true] %s56
      %s58 = sshll.u32 [#allocation8], 4
      %s59 = int_to_ptr.vmem [resolvable:$true] %s58
      %64 = dma.hbm_to_vmem [thread:$0]  %s57, 4096, %s59, [#allocation9], 64, 64, 4
    $region17: #{tpu_custom_call.1} parent=1 // pred_fallthru
      _
    // Predicated region
    $region18: #{tpu_custom_call.1} parent=1 // pred_check
      _
    $region19: #{tpu_custom_call.1} parent=1 // pred_check_branch
      %66 = sbr.rel (0) target = $region21
    $region20: #{tpu_custom_call.1} parent=1 // pred_region
      %68 = vsyncadd [#allocation9], 0
      %s70 = sshll.u32 %s4, 4
      %s71 = int_to_ptr.hbm [resolvable:$true] %s70
      %s72 = sshll.u32 [#allocation10], 4
      %s73 = int_to_ptr.vmem [resolvable:$true] %s72
      %75 = dma.hbm_to_vmem [thread:$0]  %s71, 16, %s73, [#allocation9]
    $region21: #{tpu_custom_call.1} parent=1 // pred_fallthru
      _
    // Predicated region
    $region22: #{tpu_custom_call.1} parent=1 // pred_check
      _
    $region23: #{tpu_custom_call.1} parent=1 // pred_check_branch
      %77 = sbr.rel (0) target = $region25
    $region24: #{tpu_custom_call.1} parent=1 // pred_region
      %79 = vsyncadd [#allocation12], 0
      %s80 = sshll.u32 %s5, 4
      %s81 = int_to_ptr.hbm [resolvable:$true] %s80
      %s82 = sshll.u32 [#allocation11], 4
      %s83 = int_to_ptr.vmem [resolvable:$true] %s82
      %88 = dma.hbm_to_vmem [thread:$0]  %s81, 1024, %s83, [#allocation12], 64, 64, 4
    $region25: #{tpu_custom_call.1} parent=1 // pred_fallthru
      _
    // Predicated region
    $region26: #{tpu_custom_call.1} parent=1 // pred_check
      _
    $region27: #{tpu_custom_call.1} parent=1 // pred_check_branch
      %90 = sbr.rel (0) target = $region29
    $region28: #{tpu_custom_call.1} parent=1 // pred_region
      %92 = vsyncadd [#allocation12], 0
      %s94 = sshll.u32 %s6, 4
      %s95 = int_to_ptr.hbm [resolvable:$true] %s94
      %s96 = sshll.u32 [#allocation13], 4
      %s97 = int_to_ptr.vmem [resolvable:$true] %s96
      %99 = dma.hbm_to_vmem [thread:$0]  %s95, 16, %s97, [#allocation12]
    $region29: #{tpu_custom_call.1} parent=1 // pred_fallthru
      _
    // Predicated region
    $region30: #{tpu_custom_call.1} parent=1 // pred_check
      _
    $region31: #{tpu_custom_call.1} parent=1 // pred_check_branch
      %101 = sbr.rel (0) target = $region33
    $region32: #{tpu_custom_call.1} parent=1 // pred_region
      %103 = dma.done [#allocation3], 1856
    $region33: #{tpu_custom_call.1} parent=1 // pred_fallthru
      _
    // Predicated region
    $region34: #{tpu_custom_call.1} parent=1 // pred_check
      _
    $region35: #{tpu_custom_call.1} parent=1 // pred_check_branch
      %105 = sbr.rel (0) target = $region37
    $region36: #{tpu_custom_call.1} parent=1 // pred_region
      %107 = dma.done [#allocation6], 118784
    $region37: #{tpu_custom_call.1} parent=1 // pred_fallthru
      _
    // Predicated region
    $region38: #{tpu_custom_call.1} parent=1 // pred_check
      _
    $region39: #{tpu_custom_call.1} parent=1 // pred_check_branch
      %109 = sbr.rel (0) target = $region41
    $region40: #{tpu_custom_call.1} parent=1 // pred_region
      %111 = dma.done [#allocation6], 64
    $region41: #{tpu_custom_call.1} parent=1 // pred_fallthru
      _
    // Predicated region
    $region42: #{tpu_custom_call.1} parent=1 // pred_check
      _
    $region43: #{tpu_custom_call.1} parent=1 // pred_check_branch
      %113 = sbr.rel (0) target = $region45
    $region44: #{tpu_custom_call.1} parent=1 // pred_region
      %115 = dma.done [#allocation9], 4096
    $region45: #{tpu_custom_call.1} parent=1 // pred_fallthru
      _
    // Predicated region
    $region46: #{tpu_custom_call.1} parent=1 // pred_check
      _
    $region47: #{tpu_custom_call.1} parent=1 // pred_check_branch
      %117 = sbr.rel (0) target = $region49
    $region48: #{tpu_custom_call.1} parent=1 // pred_region
      %119 = dma.done [#allocation9], 16
    $region49: #{tpu_custom_call.1} parent=1 // pred_fallthru
      _
    // Predicated region
    $region50: #{tpu_custom_call.1} parent=1 // pred_check
      _
    $region51: #{tpu_custom_call.1} parent=1 // pred_check_branch
      %121 = sbr.rel (0) target = $region53
    $region52: #{tpu_custom_call.1} parent=1 // pred_region
      %123 = dma.done [#allocation12], 1024
    $region53: #{tpu_custom_call.1} parent=1 // pred_fallthru
      _
    // Predicated region
    $region54: #{tpu_custom_call.1} parent=1 // pred_check
      _
    $region55: #{tpu_custom_call.1} parent=1 // pred_check_branch
      %125 = sbr.rel (0) target = $region57
    $region56: #{tpu_custom_call.1} parent=1 // pred_region
      %127 = dma.done [#allocation12], 16
    $region57: #{tpu_custom_call.1} parent=1 // pred_fallthru
      _
    %v128 = vld [vmem:[#allocation2] sm:$0xff]
    %v129 = vld [vmem:[#allocation2 + $0x8] sm:$0xff]
    %v130 = vld [vmem:[#allocation2 + $0x10] sm:$0xff]
    %v131 = vld [vmem:[#allocation2 + $0x18] sm:$0xff]
    %v132 = vld [vmem:[#allocation2 + $0x20] sm:$0xff]
    %v133 = vld [vmem:[#allocation2 + $0x28] sm:$0xff]
    %v134 = vld [vmem:[#allocation2 + $0x30] sm:$0xff]
    %v135 = vld [vmem:[#allocation2 + $0x38] sm:$0xff]
    %v136 = vld [vmem:[#allocation2 + $0x40] sm:$0xff]
    %v137 = vld [vmem:[#allocation2 + $0x48] sm:$0xff]
    %v138 = vld [vmem:[#allocation2 + $0x50] sm:$0xff]
    %v139 = vld [vmem:[#allocation2 + $0x58] sm:$0xff]
    %v140 = vld [vmem:[#allocation2 + $0x60] sm:$0xff]
    %v141 = vld [vmem:[#allocation2 + $0x68] sm:$0xff]
    %v142 = vld [vmem:[#allocation2 + $0x70] sm:$0xf]
    %v143 = vld [vmem:[#allocation5] sm:$0xff]
    %v144 = vld [vmem:[#allocation5 + $0x8] sm:$0xff]
    %v145 = vld [vmem:[#allocation5 + $0x10] sm:$0xff]
    %v146 = vld [vmem:[#allocation5 + $0x18] sm:$0xff]
    %v147 = vld [vmem:[#allocation5 + $0x20] sm:$0xff]
    %v148 = vld [vmem:[#allocation5 + $0x28] sm:$0xff]
    %v149 = vld [vmem:[#allocation5 + $0x30] sm:$0xff]
    %v150 = vld [vmem:[#allocation5 + $0x38] sm:$0xff]
    %v151 = vld [vmem:[#allocation5 + $0x40] sm:$0xff]
    %v152 = vld [vmem:[#allocation5 + $0x48] sm:$0xff]
    %v153 = vld [vmem:[#allocation5 + $0x50] sm:$0xff]
    %v154 = vld [vmem:[#allocation5 + $0x58] sm:$0xff]
    %v155 = vld [vmem:[#allocation5 + $0x60] sm:$0xff]
    %v156 = vld [vmem:[#allocation5 + $0x68] sm:$0xff]
    %v157 = vld [vmem:[#allocation5 + $0x70] sm:$0xff]
    %v158 = vld [vmem:[#allocation5 + $0x78] sm:$0xff]
    %v159 = vld [vmem:[#allocation5 + $0x80] sm:$0xff]
    %v160 = vld [vmem:[#allocation5 + $0x88] sm:$0xff]
    %v161 = vld [vmem:[#allocation5 + $0x90] sm:$0xff]
    %v162 = vld [vmem:[#allocation5 + $0x98] sm:$0xff]
    %v163 = vld [vmem:[#allocation5 + $0xa0] sm:$0xff]
    %v164 = vld [vmem:[#allocation5 + $0xa8] sm:$0xff]
    %v165 = vld [vmem:[#allocation5 + $0xb0] sm:$0xff]
    %v166 = vld [vmem:[#allocation5 + $0xb8] sm:$0xff]
    %v167 = vld [vmem:[#allocation5 + $0xc0] sm:$0xff]
    %v168 = vld [vmem:[#allocation5 + $0xc8] sm:$0xff]
    %v169 = vld [vmem:[#allocation5 + $0xd0] sm:$0xff]
    %v170 = vld [vmem:[#allocation5 + $0xd8] sm:$0xff]
    %v171 = vld [vmem:[#allocation5 + $0xe0] sm:$0xff]
    %v172 = vld [vmem:[#allocation5 + $0xe8] sm:$0xff]
    %v173 = vld [vmem:[#allocation5 + $0xf0] sm:$0xff]
    %v174 = vld [vmem:[#allocation5 + $0xf8] sm:$0xff]
    %v175 = vld [vmem:[#allocation5 + $0x100] sm:$0xff]
    %v176 = vld [vmem:[#allocation5 + $0x108] sm:$0xff]
    %v177 = vld [vmem:[#allocation5 + $0x110] sm:$0xff]
    %v178 = vld [vmem:[#allocation5 + $0x118] sm:$0xff]
    %v179 = vld [vmem:[#allocation5 + $0x120] sm:$0xff]
    %v180 = vld [vmem:[#allocation5 + $0x128] sm:$0xff]
    %v181 = vld [vmem:[#allocation5 + $0x130] sm:$0xff]
    %v182 = vld [vmem:[#allocation5 + $0x138] sm:$0xff]
    %v183 = vld [vmem:[#allocation5 + $0x140] sm:$0xff]
    %v184 = vld [vmem:[#allocation5 + $0x148] sm:$0xff]
    %v185 = vld [vmem:[#allocation5 + $0x150] sm:$0xff]
    %v186 = vld [vmem:[#allocation5 + $0x158] sm:$0xff]
    %v187 = vld [vmem:[#allocation5 + $0x160] sm:$0xff]
    %v188 = vld [vmem:[#allocation5 + $0x168] sm:$0xff]
    %v189 = vld [vmem:[#allocation5 + $0x170] sm:$0xff]
    %v190 = vld [vmem:[#allocation5 + $0x178] sm:$0xff]
    %v191 = vld [vmem:[#allocation5 + $0x180] sm:$0xff]
    %v192 = vld [vmem:[#allocation5 + $0x188] sm:$0xff]
    %v193 = vld [vmem:[#allocation5 + $0x190] sm:$0xff]
    %v194 = vld [vmem:[#allocation5 + $0x198] sm:$0xff]
    %v195 = vld [vmem:[#allocation5 + $0x1a0] sm:$0xff]
    %v196 = vld [vmem:[#allocation5 + $0x1a8] sm:$0xff]
    %v197 = vld [vmem:[#allocation5 + $0x1b0] sm:$0xff]
    %v198 = vld [vmem:[#allocation5 + $0x1b8] sm:$0xff]
    %v199 = vld [vmem:[#allocation5 + $0x1c0] sm:$0xff]
    %v200 = vld [vmem:[#allocation5 + $0x1c8] sm:$0xff]
    %v201 = vld [vmem:[#allocation5 + $0x1d0] sm:$0xff]
    %v202 = vld [vmem:[#allocation5 + $0x1d8] sm:$0xff]
    %v203 = vld [vmem:[#allocation5 + $0x1e0] sm:$0xff]
    %v204 = vld [vmem:[#allocation5 + $0x1e8] sm:$0xff]
    %v205 = vld [vmem:[#allocation5 + $0x1f0] sm:$0xff]
    %v206 = vld [vmem:[#allocation5 + $0x1f8] sm:$0xff]
    %v207 = vld [vmem:[#allocation5 + $0x200] sm:$0xff]
    %v208 = vld [vmem:[#allocation5 + $0x208] sm:$0xff]
    %v209 = vld [vmem:[#allocation5 + $0x210] sm:$0xff]
    %v210 = vld [vmem:[#allocation5 + $0x218] sm:$0xff]
    %v211 = vld [vmem:[#allocation5 + $0x220] sm:$0xff]
    %v212 = vld [vmem:[#allocation5 + $0x228] sm:$0xff]
    %v213 = vld [vmem:[#allocation5 + $0x230] sm:$0xff]
    %v214 = vld [vmem:[#allocation5 + $0x238] sm:$0xff]
    %v215 = vld [vmem:[#allocation5 + $0x240] sm:$0xff]
    %v216 = vld [vmem:[#allocation5 + $0x248] sm:$0xff]
    %v217 = vld [vmem:[#allocation5 + $0x250] sm:$0xff]
    %v218 = vld [vmem:[#allocation5 + $0x258] sm:$0xff]
    %v219 = vld [vmem:[#allocation5 + $0x260] sm:$0xff]
    %v220 = vld [vmem:[#allocation5 + $0x268] sm:$0xff]
    %v221 = vld [vmem:[#allocation5 + $0x270] sm:$0xff]
    %v222 = vld [vmem:[#allocation5 + $0x278] sm:$0xff]
    %v223 = vld [vmem:[#allocation5 + $0x280] sm:$0xff]
    %v224 = vld [vmem:[#allocation5 + $0x288] sm:$0xff]
    %v225 = vld [vmem:[#allocation5 + $0x290] sm:$0xff]
    %v226 = vld [vmem:[#allocation5 + $0x298] sm:$0xff]
    %v227 = vld [vmem:[#allocation5 + $0x2a0] sm:$0xff]
    %v228 = vld [vmem:[#allocation5 + $0x2a8] sm:$0xff]
    %v229 = vld [vmem:[#allocation5 + $0x2b0] sm:$0xff]
    %v230 = vld [vmem:[#allocation5 + $0x2b8] sm:$0xff]
    %v231 = vld [vmem:[#allocation5 + $0x2c0] sm:$0xff]
    %v232 = vld [vmem:[#allocation5 + $0x2c8] sm:$0xff]
    %v233 = vld [vmem:[#allocation5 + $0x2d0] sm:$0xff]
    %v234 = vld [vmem:[#allocation5 + $0x2d8] sm:$0xff]
    %v235 = vld [vmem:[#allocation5 + $0x2e0] sm:$0xff]
    %v236 = vld [vmem:[#allocation5 + $0x2e8] sm:$0xff]
    %v237 = vld [vmem:[#allocation5 + $0x2f0] sm:$0xff]
    %v238 = vld [vmem:[#allocation5 + $0x2f8] sm:$0xff]
    %v239 = vld [vmem:[#allocation5 + $0x300] sm:$0xff]
    %v240 = vld [vmem:[#allocation5 + $0x308] sm:$0xff]
    %v241 = vld [vmem:[#allocation5 + $0x310] sm:$0xff]
    %v242 = vld [vmem:[#allocation5 + $0x318] sm:$0xff]
    %v243 = vld [vmem:[#allocation5 + $0x320] sm:$0xff]
    %v244 = vld [vmem:[#allocation5 + $0x328] sm:$0xff]
    %v245 = vld [vmem:[#allocation5 + $0x330] sm:$0xff]
    %v246 = vld [vmem:[#allocation5 + $0x338] sm:$0xff]
    %v247 = vld [vmem:[#allocation5 + $0x340] sm:$0xff]
    %v248 = vld [vmem:[#allocation5 + $0x348] sm:$0xff]
    %v249 = vld [vmem:[#allocation5 + $0x350] sm:$0xff]
    %v250 = vld [vmem:[#allocation5 + $0x358] sm:$0xff]
    %v251 = vld [vmem:[#allocation5 + $0x360] sm:$0xff]
    %v252 = vld [vmem:[#allocation5 + $0x368] sm:$0xff]
    %v253 = vld [vmem:[#allocation5 + $0x370] sm:$0xff]
    %v254 = vld [vmem:[#allocation5 + $0x378] sm:$0xff]
    %v255 = vld [vmem:[#allocation5 + $0x380] sm:$0xff]
    %v256 = vld [vmem:[#allocation5 + $0x388] sm:$0xff]
    %v257 = vld [vmem:[#allocation5 + $0x390] sm:$0xff]
    %v258 = vld [vmem:[#allocation5 + $0x398] sm:$0xff]
    %v259 = vld [vmem:[#allocation5 + $0x3a0] sm:$0xff]
    %v260 = vld [vmem:[#allocation5 + $0x3a8] sm:$0xff]
    %v261 = vld [vmem:[#allocation5 + $0x3b0] sm:$0xff]
    %v262 = vld [vmem:[#allocation5 + $0x3b8] sm:$0xff]
    %v263 = vld [vmem:[#allocation5 + $0x3c0] sm:$0xff]
    %v264 = vld [vmem:[#allocation5 + $0x3c8] sm:$0xff]
    %v265 = vld [vmem:[#allocation5 + $0x3d0] sm:$0xff]
    %v266 = vld [vmem:[#allocation5 + $0x3d8] sm:$0xff]
    %v267 = vld [vmem:[#allocation5 + $0x3e0] sm:$0xff]
    %v268 = vld [vmem:[#allocation5 + $0x3e8] sm:$0xff]
    %v269 = vld [vmem:[#allocation5 + $0x3f0] sm:$0xff]
    %v270 = vld [vmem:[#allocation5 + $0x3f8] sm:$0xff]
    %v271 = vld [vmem:[#allocation5 + $0x400] sm:$0xff]
    %v272 = vld [vmem:[#allocation5 + $0x408] sm:$0xff]
    %v273 = vld [vmem:[#allocation5 + $0x410] sm:$0xff]
    %v274 = vld [vmem:[#allocation5 + $0x418] sm:$0xff]
    %v275 = vld [vmem:[#allocation5 + $0x420] sm:$0xff]
    %v276 = vld [vmem:[#allocation5 + $0x428] sm:$0xff]
    %v277 = vld [vmem:[#allocation5 + $0x430] sm:$0xff]
    %v278 = vld [vmem:[#allocation5 + $0x438] sm:$0xff]
    %v279 = vld [vmem:[#allocation5 + $0x440] sm:$0xff]
    %v280 = vld [vmem:[#allocation5 + $0x448] sm:$0xff]
    %v281 = vld [vmem:[#allocation5 + $0x450] sm:$0xff]
    %v282 = vld [vmem:[#allocation5 + $0x458] sm:$0xff]
    %v283 = vld [vmem:[#allocation5 + $0x460] sm:$0xff]
    %v284 = vld [vmem:[#allocation5 + $0x468] sm:$0xff]
    %v285 = vld [vmem:[#allocation5 + $0x470] sm:$0xff]
    %v286 = vld [vmem:[#allocation5 + $0x478] sm:$0xff]
    %v287 = vld [vmem:[#allocation5 + $0x480] sm:$0xff]
    %v288 = vld [vmem:[#allocation5 + $0x488] sm:$0xff]
    %v289 = vld [vmem:[#allocation5 + $0x490] sm:$0xff]
    %v290 = vld [vmem:[#allocation5 + $0x498] sm:$0xff]
    %v291 = vld [vmem:[#allocation5 + $0x4a0] sm:$0xff]
    %v292 = vld [vmem:[#allocation5 + $0x4a8] sm:$0xff]
    %v293 = vld [vmem:[#allocation5 + $0x4b0] sm:$0xff]
    %v294 = vld [vmem:[#allocation5 + $0x4b8] sm:$0xff]
    %v295 = vld [vmem:[#allocation5 + $0x4c0] sm:$0xff]
    %v296 = vld [vmem:[#allocation5 + $0x4c8] sm:$0xff]
    %v297 = vld [vmem:[#allocation5 + $0x4d0] sm:$0xff]
    %v298 = vld [vmem:[#allocation5 + $0x4d8] sm:$0xff]
    %v299 = vld [vmem:[#allocation5 + $0x4e0] sm:$0xff]
    %v300 = vld [vmem:[#allocation5 + $0x4e8] sm:$0xff]
    %v301 = vld [vmem:[#allocation5 + $0x4f0] sm:$0xff]
    %v302 = vld [vmem:[#allocation5 + $0x4f8] sm:$0xff]
    %v303 = vld [vmem:[#allocation5 + $0x500] sm:$0xff]
    %v304 = vld [vmem:[#allocation5 + $0x508] sm:$0xff]
    %v305 = vld [vmem:[#allocation5 + $0x510] sm:$0xff]
    %v306 = vld [vmem:[#allocation5 + $0x518] sm:$0xff]
    %v307 = vld [vmem:[#allocation5 + $0x520] sm:$0xff]
    %v308 = vld [vmem:[#allocation5 + $0x528] sm:$0xff]
    %v309 = vld [vmem:[#allocation5 + $0x530] sm:$0xff]
    %v310 = vld [vmem:[#allocation5 + $0x538] sm:$0xff]
    %v311 = vld [vmem:[#allocation5 + $0x540] sm:$0xff]
    %v312 = vld [vmem:[#allocation5 + $0x548] sm:$0xff]
    %v313 = vld [vmem:[#allocation5 + $0x550] sm:$0xff]
    %v314 = vld [vmem:[#allocation5 + $0x558] sm:$0xff]
    %v315 = vld [vmem:[#allocation5 + $0x560] sm:$0xff]
    %v316 = vld [vmem:[#allocation5 + $0x568] sm:$0xff]
    %v317 = vld [vmem:[#allocation5 + $0x570] sm:$0xff]
    %v318 = vld [vmem:[#allocation5 + $0x578] sm:$0xff]
    %v319 = vld [vmem:[#allocation5 + $0x580] sm:$0xff]
    %v320 = vld [vmem:[#allocation5 + $0x588] sm:$0xff]
    %v321 = vld [vmem:[#allocation5 + $0x590] sm:$0xff]
    %v322 = vld [vmem:[#allocation5 + $0x598] sm:$0xff]
    %v323 = vld [vmem:[#allocation5 + $0x5a0] sm:$0xff]
    %v324 = vld [vmem:[#allocation5 + $0x5a8] sm:$0xff]
    %v325 = vld [vmem:[#allocation5 + $0x5b0] sm:$0xff]
    %v326 = vld [vmem:[#allocation5 + $0x5b8] sm:$0xff]
    %v327 = vld [vmem:[#allocation5 + $0x5c0] sm:$0xff]
    %v328 = vld [vmem:[#allocation5 + $0x5c8] sm:$0xff]
    %v329 = vld [vmem:[#allocation5 + $0x5d0] sm:$0xff]
    %v330 = vld [vmem:[#allocation5 + $0x5d8] sm:$0xff]
    %v331 = vld [vmem:[#allocation5 + $0x5e0] sm:$0xff]
    %v332 = vld [vmem:[#allocation5 + $0x5e8] sm:$0xff]
    %v333 = vld [vmem:[#allocation5 + $0x5f0] sm:$0xff]
    %v334 = vld [vmem:[#allocation5 + $0x5f8] sm:$0xff]
    %v335 = vld [vmem:[#allocation5 + $0x600] sm:$0xff]
    %v336 = vld [vmem:[#allocation5 + $0x608] sm:$0xff]
    %v337 = vld [vmem:[#allocation5 + $0x610] sm:$0xff]
    %v338 = vld [vmem:[#allocation5 + $0x618] sm:$0xff]
    %v339 = vld [vmem:[#allocation5 + $0x620] sm:$0xff]
    %v340 = vld [vmem:[#allocation5 + $0x628] sm:$0xff]
    %v341 = vld [vmem:[#allocation5 + $0x630] sm:$0xff]
    %v342 = vld [vmem:[#allocation5 + $0x638] sm:$0xff]
    %v343 = vld [vmem:[#allocation5 + $0x640] sm:$0xff]
    %v344 = vld [vmem:[#allocation5 + $0x648] sm:$0xff]
    %v345 = vld [vmem:[#allocation5 + $0x650] sm:$0xff]
    %v346 = vld [vmem:[#allocation5 + $0x658] sm:$0xff]
    %v347 = vld [vmem:[#allocation5 + $0x660] sm:$0xff]
    %v348 = vld [vmem:[#allocation5 + $0x668] sm:$0xff]
    %v349 = vld [vmem:[#allocation5 + $0x670] sm:$0xff]
    %v350 = vld [vmem:[#allocation5 + $0x678] sm:$0xff]
    %v351 = vld [vmem:[#allocation5 + $0x680] sm:$0xff]
    %v352 = vld [vmem:[#allocation5 + $0x688] sm:$0xff]
    %v353 = vld [vmem:[#allocation5 + $0x690] sm:$0xff]
    %v354 = vld [vmem:[#allocation5 + $0x698] sm:$0xff]
    %v355 = vld [vmem:[#allocation5 + $0x6a0] sm:$0xff]
    %v356 = vld [vmem:[#allocation5 + $0x6a8] sm:$0xff]
    %v357 = vld [vmem:[#allocation5 + $0x6b0] sm:$0xff]
    %v358 = vld [vmem:[#allocation5 + $0x6b8] sm:$0xff]
    %v359 = vld [vmem:[#allocation5 + $0x6c0] sm:$0xff]
    %v360 = vld [vmem:[#allocation5 + $0x6c8] sm:$0xff]
    %v361 = vld [vmem:[#allocation5 + $0x6d0] sm:$0xff]
    %v362 = vld [vmem:[#allocation5 + $0x6d8] sm:$0xff]
    %v363 = vld [vmem:[#allocation5 + $0x6e0] sm:$0xff]
    %v364 = vld [vmem:[#allocation5 + $0x6e8] sm:$0xff]
    %v365 = vld [vmem:[#allocation5 + $0x6f0] sm:$0xff]
    %v366 = vld [vmem:[#allocation5 + $0x6f8] sm:$0xff]
    %v367 = vld [vmem:[#allocation5 + $0x700] sm:$0xff]
    %v368 = vld [vmem:[#allocation5 + $0x708] sm:$0xff]
    %v369 = vld [vmem:[#allocation5 + $0x710] sm:$0xff]
    %v370 = vld [vmem:[#allocation5 + $0x718] sm:$0xff]
    %v371 = vld [vmem:[#allocation5 + $0x720] sm:$0xff]
    %v372 = vld [vmem:[#allocation5 + $0x728] sm:$0xff]
    %v373 = vld [vmem:[#allocation5 + $0x730] sm:$0xff]
    %v374 = vld [vmem:[#allocation5 + $0x738] sm:$0xff]
    %v375 = vld [vmem:[#allocation5 + $0x740] sm:$0xff]
    %v376 = vld [vmem:[#allocation5 + $0x748] sm:$0xff]
    %v377 = vld [vmem:[#allocation5 + $0x750] sm:$0xff]
    %v378 = vld [vmem:[#allocation5 + $0x758] sm:$0xff]
    %v379 = vld [vmem:[#allocation5 + $0x760] sm:$0xff]
    %v380 = vld [vmem:[#allocation5 + $0x768] sm:$0xff]
    %v381 = vld [vmem:[#allocation5 + $0x770] sm:$0xff]
    %v382 = vld [vmem:[#allocation5 + $0x778] sm:$0xff]
    %v383 = vld [vmem:[#allocation5 + $0x780] sm:$0xff]
    %v384 = vld [vmem:[#allocation5 + $0x788] sm:$0xff]
    %v385 = vld [vmem:[#allocation5 + $0x790] sm:$0xff]
    %v386 = vld [vmem:[#allocation5 + $0x798] sm:$0xff]
    %v387 = vld [vmem:[#allocation5 + $0x7a0] sm:$0xff]
    %v388 = vld [vmem:[#allocation5 + $0x7a8] sm:$0xff]
    %v389 = vld [vmem:[#allocation5 + $0x7b0] sm:$0xff]
    %v390 = vld [vmem:[#allocation5 + $0x7b8] sm:$0xff]
    %v391 = vld [vmem:[#allocation5 + $0x7c0] sm:$0xff]
    %v392 = vld [vmem:[#allocation5 + $0x7c8] sm:$0xff]
    %v393 = vld [vmem:[#allocation5 + $0x7d0] sm:$0xff]
    %v394 = vld [vmem:[#allocation5 + $0x7d8] sm:$0xff]
    %v395 = vld [vmem:[#allocation5 + $0x7e0] sm:$0xff]
    %v396 = vld [vmem:[#allocation5 + $0x7e8] sm:$0xff]
    %v397 = vld [vmem:[#allocation5 + $0x7f0] sm:$0xff]
    %v398 = vld [vmem:[#allocation5 + $0x7f8] sm:$0xff]
    %v399 = vld [vmem:[#allocation5 + $0x800] sm:$0xff]
    %v400 = vld [vmem:[#allocation5 + $0x808] sm:$0xff]
    %v401 = vld [vmem:[#allocation5 + $0x810] sm:$0xff]
    %v402 = vld [vmem:[#allocation5 + $0x818] sm:$0xff]
    %v403 = vld [vmem:[#allocation5 + $0x820] sm:$0xff]
    %v404 = vld [vmem:[#allocation5 + $0x828] sm:$0xff]
    %v405 = vld [vmem:[#allocation5 + $0x830] sm:$0xff]
    %v406 = vld [vmem:[#allocation5 + $0x838] sm:$0xff]
    %v407 = vld [vmem:[#allocation5 + $0x840] sm:$0xff]
    %v408 = vld [vmem:[#allocation5 + $0x848] sm:$0xff]
    %v409 = vld [vmem:[#allocation5 + $0x850] sm:$0xff]
    %v410 = vld [vmem:[#allocation5 + $0x858] sm:$0xff]
    %v411 = vld [vmem:[#allocation5 + $0x860] sm:$0xff]
    %v412 = vld [vmem:[#allocation5 + $0x868] sm:$0xff]
    %v413 = vld [vmem:[#allocation5 + $0x870] sm:$0xff]
    %v414 = vld [vmem:[#allocation5 + $0x878] sm:$0xff]
    %v415 = vld [vmem:[#allocation5 + $0x880] sm:$0xff]
    %v416 = vld [vmem:[#allocation5 + $0x888] sm:$0xff]
    %v417 = vld [vmem:[#allocation5 + $0x890] sm:$0xff]
    %v418 = vld [vmem:[#allocation5 + $0x898] sm:$0xff]
    %v419 = vld [vmem:[#allocation5 + $0x8a0] sm:$0xff]
    %v420 = vld [vmem:[#allocation5 + $0x8a8] sm:$0xff]
    %v421 = vld [vmem:[#allocation5 + $0x8b0] sm:$0xff]
    %v422 = vld [vmem:[#allocation5 + $0x8b8] sm:$0xff]
    %v423 = vld [vmem:[#allocation5 + $0x8c0] sm:$0xff]
    %v424 = vld [vmem:[#allocation5 + $0x8c8] sm:$0xff]
    %v425 = vld [vmem:[#allocation5 + $0x8d0] sm:$0xff]
    %v426 = vld [vmem:[#allocation5 + $0x8d8] sm:$0xff]
    %v427 = vld [vmem:[#allocation5 + $0x8e0] sm:$0xff]
    %v428 = vld [vmem:[#allocation5 + $0x8e8] sm:$0xff]
    %v429 = vld [vmem:[#allocation5 + $0x8f0] sm:$0xff]
    %v430 = vld [vmem:[#allocation5 + $0x8f8] sm:$0xff]
    %v431 = vld [vmem:[#allocation5 + $0x900] sm:$0xff]
    %v432 = vld [vmem:[#allocation5 + $0x908] sm:$0xff]
    %v433 = vld [vmem:[#allocation5 + $0x910] sm:$0xff]
    %v434 = vld [vmem:[#allocation5 + $0x918] sm:$0xff]
    %v435 = vld [vmem:[#allocation5 + $0x920] sm:$0xff]
    %v436 = vld [vmem:[#allocation5 + $0x928] sm:$0xff]
    %v437 = vld [vmem:[#allocation5 + $0x930] sm:$0xff]
    %v438 = vld [vmem:[#allocation5 + $0x938] sm:$0xff]
    %v439 = vld [vmem:[#allocation5 + $0x940] sm:$0xff]
    %v440 = vld [vmem:[#allocation5 + $0x948] sm:$0xff]
    %v441 = vld [vmem:[#allocation5 + $0x950] sm:$0xff]
    %v442 = vld [vmem:[#allocation5 + $0x958] sm:$0xff]
    %v443 = vld [vmem:[#allocation5 + $0x960] sm:$0xff]
    %v444 = vld [vmem:[#allocation5 + $0x968] sm:$0xff]
    %v445 = vld [vmem:[#allocation5 + $0x970] sm:$0xff]
    %v446 = vld [vmem:[#allocation5 + $0x978] sm:$0xff]
    %v447 = vld [vmem:[#allocation5 + $0x980] sm:$0xff]
    %v448 = vld [vmem:[#allocation5 + $0x988] sm:$0xff]
    %v449 = vld [vmem:[#allocation5 + $0x990] sm:$0xff]
    %v450 = vld [vmem:[#allocation5 + $0x998] sm:$0xff]
    %v451 = vld [vmem:[#allocation5 + $0x9a0] sm:$0xff]
    %v452 = vld [vmem:[#allocation5 + $0x9a8] sm:$0xff]
    %v453 = vld [vmem:[#allocation5 + $0x9b0] sm:$0xff]
    %v454 = vld [vmem:[#allocation5 + $0x9b8] sm:$0xff]
    %v455 = vld [vmem:[#allocation5 + $0x9c0] sm:$0xff]
    %v456 = vld [vmem:[#allocation5 + $0x9c8] sm:$0xff]
    %v457 = vld [vmem:[#allocation5 + $0x9d0] sm:$0xff]
    %v458 = vld [vmem:[#allocation5 + $0x9d8] sm:$0xff]
    %v459 = vld [vmem:[#allocation5 + $0x9e0] sm:$0xff]
    %v460 = vld [vmem:[#allocation5 + $0x9e8] sm:$0xff]
    %v461 = vld [vmem:[#allocation5 + $0x9f0] sm:$0xff]
    %v462 = vld [vmem:[#allocation5 + $0x9f8] sm:$0xff]
    %v463 = vld [vmem:[#allocation5 + $0xa00] sm:$0xff]
    %v464 = vld [vmem:[#allocation5 + $0xa08] sm:$0xff]
    %v465 = vld [vmem:[#allocation5 + $0xa10] sm:$0xff]
    %v466 = vld [vmem:[#allocation5 + $0xa18] sm:$0xff]
    %v467 = vld [vmem:[#allocation5 + $0xa20] sm:$0xff]
    %v468 = vld [vmem:[#allocation5 + $0xa28] sm:$0xff]
    %v469 = vld [vmem:[#allocation5 + $0xa30] sm:$0xff]
    %v470 = vld [vmem:[#allocation5 + $0xa38] sm:$0xff]
    %v471 = vld [vmem:[#allocation5 + $0xa40] sm:$0xff]
    %v472 = vld [vmem:[#allocation5 + $0xa48] sm:$0xff]
    %v473 = vld [vmem:[#allocation5 + $0xa50] sm:$0xff]
    %v474 = vld [vmem:[#allocation5 + $0xa58] sm:$0xff]
    %v475 = vld [vmem:[#allocation5 + $0xa60] sm:$0xff]
    %v476 = vld [vmem:[#allocation5 + $0xa68] sm:$0xff]
    %v477 = vld [vmem:[#allocation5 + $0xa70] sm:$0xff]
    %v478 = vld [vmem:[#allocation5 + $0xa78] sm:$0xff]
    %v479 = vld [vmem:[#allocation5 + $0xa80] sm:$0xff]
    %v480 = vld [vmem:[#allocation5 + $0xa88] sm:$0xff]
    %v481 = vld [vmem:[#allocation5 + $0xa90] sm:$0xff]
    %v482 = vld [vmem:[#allocation5 + $0xa98] sm:$0xff]
    %v483 = vld [vmem:[#allocation5 + $0xaa0] sm:$0xff]
    %v484 = vld [vmem:[#allocation5 + $0xaa8] sm:$0xff]
    %v485 = vld [vmem:[#allocation5 + $0xab0] sm:$0xff]
    %v486 = vld [vmem:[#allocation5 + $0xab8] sm:$0xff]
    %v487 = vld [vmem:[#allocation5 + $0xac0] sm:$0xff]
    %v488 = vld [vmem:[#allocation5 + $0xac8] sm:$0xff]
    %v489 = vld [vmem:[#allocation5 + $0xad0] sm:$0xff]
    %v490 = vld [vmem:[#allocation5 + $0xad8] sm:$0xff]
    %v491 = vld [vmem:[#allocation5 + $0xae0] sm:$0xff]
    %v492 = vld [vmem:[#allocation5 + $0xae8] sm:$0xff]
    %v493 = vld [vmem:[#allocation5 + $0xaf0] sm:$0xff]
    %v494 = vld [vmem:[#allocation5 + $0xaf8] sm:$0xff]
    %v495 = vld [vmem:[#allocation5 + $0xb00] sm:$0xff]
    %v496 = vld [vmem:[#allocation5 + $0xb08] sm:$0xff]
    %v497 = vld [vmem:[#allocation5 + $0xb10] sm:$0xff]
    %v498 = vld [vmem:[#allocation5 + $0xb18] sm:$0xff]
    %v499 = vld [vmem:[#allocation5 + $0xb20] sm:$0xff]
    %v500 = vld [vmem:[#allocation5 + $0xb28] sm:$0xff]
    %v501 = vld [vmem:[#allocation5 + $0xb30] sm:$0xff]
    %v502 = vld [vmem:[#allocation5 + $0xb38] sm:$0xff]
    %v503 = vld [vmem:[#allocation5 + $0xb40] sm:$0xff]
    %v504 = vld [vmem:[#allocation5 + $0xb48] sm:$0xff]
    %v505 = vld [vmem:[#allocation5 + $0xb50] sm:$0xff]
    %v506 = vld [vmem:[#allocation5 + $0xb58] sm:$0xff]
    %v507 = vld [vmem:[#allocation5 + $0xb60] sm:$0xff]
    %v508 = vld [vmem:[#allocation5 + $0xb68] sm:$0xff]
    %v509 = vld [vmem:[#allocation5 + $0xb70] sm:$0xff]
    %v510 = vld [vmem:[#allocation5 + $0xb78] sm:$0xff]
    %v511 = vld [vmem:[#allocation5 + $0xb80] sm:$0xff]
    %v512 = vld [vmem:[#allocation5 + $0xb88] sm:$0xff]
    %v513 = vld [vmem:[#allocation5 + $0xb90] sm:$0xff]
    %v514 = vld [vmem:[#allocation5 + $0xb98] sm:$0xff]
    %v515 = vld [vmem:[#allocation5 + $0xba0] sm:$0xff]
    %v516 = vld [vmem:[#allocation5 + $0xba8] sm:$0xff]
    %v517 = vld [vmem:[#allocation5 + $0xbb0] sm:$0xff]
    %v518 = vld [vmem:[#allocation5 + $0xbb8] sm:$0xff]
    %v519 = vld [vmem:[#allocation5 + $0xbc0] sm:$0xff]
    %v520 = vld [vmem:[#allocation5 + $0xbc8] sm:$0xff]
    %v521 = vld [vmem:[#allocation5 + $0xbd0] sm:$0xff]
    %v522 = vld [vmem:[#allocation5 + $0xbd8] sm:$0xff]
    %v523 = vld [vmem:[#allocation5 + $0xbe0] sm:$0xff]
    %v524 = vld [vmem:[#allocation5 + $0xbe8] sm:$0xff]
    %v525 = vld [vmem:[#allocation5 + $0xbf0] sm:$0xff]
    %v526 = vld [vmem:[#allocation5 + $0xbf8] sm:$0xff]
    %v527 = vld [vmem:[#allocation5 + $0xc00] sm:$0xff]
    %v528 = vld [vmem:[#allocation5 + $0xc08] sm:$0xff]
    %v529 = vld [vmem:[#allocation5 + $0xc10] sm:$0xff]
    %v530 = vld [vmem:[#allocation5 + $0xc18] sm:$0xff]
    %v531 = vld [vmem:[#allocation5 + $0xc20] sm:$0xff]
    %v532 = vld [vmem:[#allocation5 + $0xc28] sm:$0xff]
    %v533 = vld [vmem:[#allocation5 + $0xc30] sm:$0xff]
    %v534 = vld [vmem:[#allocation5 + $0xc38] sm:$0xff]
    %v535 = vld [vmem:[#allocation5 + $0xc40] sm:$0xff]
    %v536 = vld [vmem:[#allocation5 + $0xc48] sm:$0xff]
    %v537 = vld [vmem:[#allocation5 + $0xc50] sm:$0xff]
    %v538 = vld [vmem:[#allocation5 + $0xc58] sm:$0xff]
    %v539 = vld [vmem:[#allocation5 + $0xc60] sm:$0xff]
    %v540 = vld [vmem:[#allocation5 + $0xc68] sm:$0xff]
    %v541 = vld [vmem:[#allocation5 + $0xc70] sm:$0xff]
    %v542 = vld [vmem:[#allocation5 + $0xc78] sm:$0xff]
    %v543 = vld [vmem:[#allocation5 + $0xc80] sm:$0xff]
    %v544 = vld [vmem:[#allocation5 + $0xc88] sm:$0xff]
    %v545 = vld [vmem:[#allocation5 + $0xc90] sm:$0xff]
    %v546 = vld [vmem:[#allocation5 + $0xc98] sm:$0xff]
    %v547 = vld [vmem:[#allocation5 + $0xca0] sm:$0xff]
    %v548 = vld [vmem:[#allocation5 + $0xca8] sm:$0xff]
    %v549 = vld [vmem:[#allocation5 + $0xcb0] sm:$0xff]
    %v550 = vld [vmem:[#allocation5 + $0xcb8] sm:$0xff]
    %v551 = vld [vmem:[#allocation5 + $0xcc0] sm:$0xff]
    %v552 = vld [vmem:[#allocation5 + $0xcc8] sm:$0xff]
    %v553 = vld [vmem:[#allocation5 + $0xcd0] sm:$0xff]
    %v554 = vld [vmem:[#allocation5 + $0xcd8] sm:$0xff]
    %v555 = vld [vmem:[#allocation5 + $0xce0] sm:$0xff]
    %v556 = vld [vmem:[#allocation5 + $0xce8] sm:$0xff]
    %v557 = vld [vmem:[#allocation5 + $0xcf0] sm:$0xff]
    %v558 = vld [vmem:[#allocation5 + $0xcf8] sm:$0xff]
    %v559 = vld [vmem:[#allocation5 + $0xd00] sm:$0xff]
    %v560 = vld [vmem:[#allocation5 + $0xd08] sm:$0xff]
    %v561 = vld [vmem:[#allocation5 + $0xd10] sm:$0xff]
    %v562 = vld [vmem:[#allocation5 + $0xd18] sm:$0xff]
    %v563 = vld [vmem:[#allocation5 + $0xd20] sm:$0xff]
    %v564 = vld [vmem:[#allocation5 + $0xd28] sm:$0xff]
    %v565 = vld [vmem:[#allocation5 + $0xd30] sm:$0xff]
    %v566 = vld [vmem:[#allocation5 + $0xd38] sm:$0xff]
    %v567 = vld [vmem:[#allocation5 + $0xd40] sm:$0xff]
    %v568 = vld [vmem:[#allocation5 + $0xd48] sm:$0xff]
    %v569 = vld [vmem:[#allocation5 + $0xd50] sm:$0xff]
    %v570 = vld [vmem:[#allocation5 + $0xd58] sm:$0xff]
    %v571 = vld [vmem:[#allocation5 + $0xd60] sm:$0xff]
    %v572 = vld [vmem:[#allocation5 + $0xd68] sm:$0xff]
    %v573 = vld [vmem:[#allocation5 + $0xd70] sm:$0xff]
    %v574 = vld [vmem:[#allocation5 + $0xd78] sm:$0xff]
    %v575 = vld [vmem:[#allocation5 + $0xd80] sm:$0xff]
    %v576 = vld [vmem:[#allocation5 + $0xd88] sm:$0xff]
    %v577 = vld [vmem:[#allocation5 + $0xd90] sm:$0xff]
    %v578 = vld [vmem:[#allocation5 + $0xd98] sm:$0xff]
    %v579 = vld [vmem:[#allocation5 + $0xda0] sm:$0xff]
    %v580 = vld [vmem:[#allocation5 + $0xda8] sm:$0xff]
    %v581 = vld [vmem:[#allocation5 + $0xdb0] sm:$0xff]
    %v582 = vld [vmem:[#allocation5 + $0xdb8] sm:$0xff]
    %v583 = vld [vmem:[#allocation5 + $0xdc0] sm:$0xff]
    %v584 = vld [vmem:[#allocation5 + $0xdc8] sm:$0xff]
    %v585 = vld [vmem:[#allocation5 + $0xdd0] sm:$0xff]
    %v586 = vld [vmem:[#allocation5 + $0xdd8] sm:$0xff]
    %v587 = vld [vmem:[#allocation5 + $0xde0] sm:$0xff]
    %v588 = vld [vmem:[#allocation5 + $0xde8] sm:$0xff]
    %v589 = vld [vmem:[#allocation5 + $0xdf0] sm:$0xff]
    %v590 = vld [vmem:[#allocation5 + $0xdf8] sm:$0xff]
    %v591 = vld [vmem:[#allocation5 + $0xe00] sm:$0xff]
    %v592 = vld [vmem:[#allocation5 + $0xe08] sm:$0xff]
    %v593 = vld [vmem:[#allocation5 + $0xe10] sm:$0xff]
    %v594 = vld [vmem:[#allocation5 + $0xe18] sm:$0xff]
    %v595 = vld [vmem:[#allocation5 + $0xe20] sm:$0xff]
    %v596 = vld [vmem:[#allocation5 + $0xe28] sm:$0xff]
    %v597 = vld [vmem:[#allocation5 + $0xe30] sm:$0xff]
    %v598 = vld [vmem:[#allocation5 + $0xe38] sm:$0xff]
    %v599 = vld [vmem:[#allocation5 + $0xe40] sm:$0xff]
    %v600 = vld [vmem:[#allocation5 + $0xe48] sm:$0xff]
    %v601 = vld [vmem:[#allocation5 + $0xe50] sm:$0xff]
    %v602 = vld [vmem:[#allocation5 + $0xe58] sm:$0xff]
    %v603 = vld [vmem:[#allocation5 + $0xe60] sm:$0xff]
    %v604 = vld [vmem:[#allocation5 + $0xe68] sm:$0xff]
    %v605 = vld [vmem:[#allocation5 + $0xe70] sm:$0xff]
    %v606 = vld [vmem:[#allocation5 + $0xe78] sm:$0xff]
    %v607 = vld [vmem:[#allocation5 + $0xe80] sm:$0xff]
    %v608 = vld [vmem:[#allocation5 + $0xe88] sm:$0xff]
    %v609 = vld [vmem:[#allocation5 + $0xe90] sm:$0xff]
    %v610 = vld [vmem:[#allocation5 + $0xe98] sm:$0xff]
    %v611 = vld [vmem:[#allocation5 + $0xea0] sm:$0xff]
    %v612 = vld [vmem:[#allocation5 + $0xea8] sm:$0xff]
    %v613 = vld [vmem:[#allocation5 + $0xeb0] sm:$0xff]
    %v614 = vld [vmem:[#allocation5 + $0xeb8] sm:$0xff]
    %v615 = vld [vmem:[#allocation5 + $0xec0] sm:$0xff]
    %v616 = vld [vmem:[#allocation5 + $0xec8] sm:$0xff]
    %v617 = vld [vmem:[#allocation5 + $0xed0] sm:$0xff]
    %v618 = vld [vmem:[#allocation5 + $0xed8] sm:$0xff]
    %v619 = vld [vmem:[#allocation5 + $0xee0] sm:$0xff]
    %v620 = vld [vmem:[#allocation5 + $0xee8] sm:$0xff]
    %v621 = vld [vmem:[#allocation5 + $0xef0] sm:$0xff]
    %v622 = vld [vmem:[#allocation5 + $0xef8] sm:$0xff]
    %v623 = vld [vmem:[#allocation5 + $0xf00] sm:$0xff]
    %v624 = vld [vmem:[#allocation5 + $0xf08] sm:$0xff]
    %v625 = vld [vmem:[#allocation5 + $0xf10] sm:$0xff]
    %v626 = vld [vmem:[#allocation5 + $0xf18] sm:$0xff]
    %v627 = vld [vmem:[#allocation5 + $0xf20] sm:$0xff]
    %v628 = vld [vmem:[#allocation5 + $0xf28] sm:$0xff]
    %v629 = vld [vmem:[#allocation5 + $0xf30] sm:$0xff]
    %v630 = vld [vmem:[#allocation5 + $0xf38] sm:$0xff]
    %v631 = vld [vmem:[#allocation5 + $0xf40] sm:$0xff]
    %v632 = vld [vmem:[#allocation5 + $0xf48] sm:$0xff]
    %v633 = vld [vmem:[#allocation5 + $0xf50] sm:$0xff]
    %v634 = vld [vmem:[#allocation5 + $0xf58] sm:$0xff]
    %v635 = vld [vmem:[#allocation5 + $0xf60] sm:$0xff]
    %v636 = vld [vmem:[#allocation5 + $0xf68] sm:$0xff]
    %v637 = vld [vmem:[#allocation5 + $0xf70] sm:$0xff]
    %v638 = vld [vmem:[#allocation5 + $0xf78] sm:$0xff]
    %v639 = vld [vmem:[#allocation5 + $0xf80] sm:$0xff]
    %v640 = vld [vmem:[#allocation5 + $0xf88] sm:$0xff]
    %v641 = vld [vmem:[#allocation5 + $0xf90] sm:$0xff]
    %v642 = vld [vmem:[#allocation5 + $0xf98] sm:$0xff]
    %v643 = vld [vmem:[#allocation5 + $0xfa0] sm:$0xff]
    %v644 = vld [vmem:[#allocation5 + $0xfa8] sm:$0xff]
    %v645 = vld [vmem:[#allocation5 + $0xfb0] sm:$0xff]
    %v646 = vld [vmem:[#allocation5 + $0xfb8] sm:$0xff]
    %v647 = vld [vmem:[#allocation5 + $0xfc0] sm:$0xff]
    %v648 = vld [vmem:[#allocation5 + $0xfc8] sm:$0xff]
    %v649 = vld [vmem:[#allocation5 + $0xfd0] sm:$0xff]
    %v650 = vld [vmem:[#allocation5 + $0xfd8] sm:$0xff]
    %v651 = vld [vmem:[#allocation5 + $0xfe0] sm:$0xff]
    %v652 = vld [vmem:[#allocation5 + $0xfe8] sm:$0xff]
    %v653 = vld [vmem:[#allocation5 + $0xff0] sm:$0xff]
    %v654 = vld [vmem:[#allocation5 + $0xff8] sm:$0xff]
    %v655 = vld [vmem:[#allocation5 + $0x1000] sm:$0xff]
    %v656 = vld [vmem:[#allocation5 + $0x1008] sm:$0xff]
    %v657 = vld [vmem:[#allocation5 + $0x1010] sm:$0xff]
    %v658 = vld [vmem:[#allocation5 + $0x1018] sm:$0xff]
    %v659 = vld [vmem:[#allocation5 + $0x1020] sm:$0xff]
    %v660 = vld [vmem:[#allocation5 + $0x1028] sm:$0xff]
    %v661 = vld [vmem:[#allocation5 + $0x1030] sm:$0xff]
    %v662 = vld [vmem:[#allocation5 + $0x1038] sm:$0xff]
    %v663 = vld [vmem:[#allocation5 + $0x1040] sm:$0xff]
    %v664 = vld [vmem:[#allocation5 + $0x1048] sm:$0xff]
    %v665 = vld [vmem:[#allocation5 + $0x1050] sm:$0xff]
    %v666 = vld [vmem:[#allocation5 + $0x1058] sm:$0xff]
    %v667 = vld [vmem:[#allocation5 + $0x1060] sm:$0xff]
    %v668 = vld [vmem:[#allocation5 + $0x1068] sm:$0xff]
    %v669 = vld [vmem:[#allocation5 + $0x1070] sm:$0xff]
    %v670 = vld [vmem:[#allocation5 + $0x1078] sm:$0xff]
    %v671 = vld [vmem:[#allocation5 + $0x1080] sm:$0xff]
    %v672 = vld [vmem:[#allocation5 + $0x1088] sm:$0xff]
    %v673 = vld [vmem:[#allocation5 + $0x1090] sm:$0xff]
    %v674 = vld [vmem:[#allocation5 + $0x1098] sm:$0xff]
    %v675 = vld [vmem:[#allocation5 + $0x10a0] sm:$0xff]
    %v676 = vld [vmem:[#allocation5 + $0x10a8] sm:$0xff]
    %v677 = vld [vmem:[#allocation5 + $0x10b0] sm:$0xff]
    %v678 = vld [vmem:[#allocation5 + $0x10b8] sm:$0xff]
    %v679 = vld [vmem:[#allocation5 + $0x10c0] sm:$0xff]
    %v680 = vld [vmem:[#allocation5 + $0x10c8] sm:$0xff]
    %v681 = vld [vmem:[#allocation5 + $0x10d0] sm:$0xff]
    %v682 = vld [vmem:[#allocation5 + $0x10d8] sm:$0xff]
    %v683 = vld [vmem:[#allocation5 + $0x10e0] sm:$0xff]
    %v684 = vld [vmem:[#allocation5 + $0x10e8] sm:$0xff]
    %v685 = vld [vmem:[#allocation5 + $0x10f0] sm:$0xff]
    %v686 = vld [vmem:[#allocation5 + $0x10f8] sm:$0xff]
    %v687 = vld [vmem:[#allocation5 + $0x1100] sm:$0xff]
    %v688 = vld [vmem:[#allocation5 + $0x1108] sm:$0xff]
    %v689 = vld [vmem:[#allocation5 + $0x1110] sm:$0xff]
    %v690 = vld [vmem:[#allocation5 + $0x1118] sm:$0xff]
    %v691 = vld [vmem:[#allocation5 + $0x1120] sm:$0xff]
    %v692 = vld [vmem:[#allocation5 + $0x1128] sm:$0xff]
    %v693 = vld [vmem:[#allocation5 + $0x1130] sm:$0xff]
    %v694 = vld [vmem:[#allocation5 + $0x1138] sm:$0xff]
    %v695 = vld [vmem:[#allocation5 + $0x1140] sm:$0xff]
    %v696 = vld [vmem:[#allocation5 + $0x1148] sm:$0xff]
    %v697 = vld [vmem:[#allocation5 + $0x1150] sm:$0xff]
    %v698 = vld [vmem:[#allocation5 + $0x1158] sm:$0xff]
    %v699 = vld [vmem:[#allocation5 + $0x1160] sm:$0xff]
    %v700 = vld [vmem:[#allocation5 + $0x1168] sm:$0xff]
    %v701 = vld [vmem:[#allocation5 + $0x1170] sm:$0xff]
    %v702 = vld [vmem:[#allocation5 + $0x1178] sm:$0xff]
    %v703 = vld [vmem:[#allocation5 + $0x1180] sm:$0xff]
    %v704 = vld [vmem:[#allocation5 + $0x1188] sm:$0xff]
    %v705 = vld [vmem:[#allocation5 + $0x1190] sm:$0xff]
    %v706 = vld [vmem:[#allocation5 + $0x1198] sm:$0xff]
    %v707 = vld [vmem:[#allocation5 + $0x11a0] sm:$0xff]
    %v708 = vld [vmem:[#allocation5 + $0x11a8] sm:$0xff]
    %v709 = vld [vmem:[#allocation5 + $0x11b0] sm:$0xff]
    %v710 = vld [vmem:[#allocation5 + $0x11b8] sm:$0xff]
    %v711 = vld [vmem:[#allocation5 + $0x11c0] sm:$0xff]
    %v712 = vld [vmem:[#allocation5 + $0x11c8] sm:$0xff]
    %v713 = vld [vmem:[#allocation5 + $0x11d0] sm:$0xff]
    %v714 = vld [vmem:[#allocation5 + $0x11d8] sm:$0xff]
    %v715 = vld [vmem:[#allocation5 + $0x11e0] sm:$0xff]
    %v716 = vld [vmem:[#allocation5 + $0x11e8] sm:$0xff]
    %v717 = vld [vmem:[#allocation5 + $0x11f0] sm:$0xff]
    %v718 = vld [vmem:[#allocation5 + $0x11f8] sm:$0xff]
    %v719 = vld [vmem:[#allocation5 + $0x1200] sm:$0xff]
    %v720 = vld [vmem:[#allocation5 + $0x1208] sm:$0xff]
    %v721 = vld [vmem:[#allocation5 + $0x1210] sm:$0xff]
    %v722 = vld [vmem:[#allocation5 + $0x1218] sm:$0xff]
    %v723 = vld [vmem:[#allocation5 + $0x1220] sm:$0xff]
    %v724 = vld [vmem:[#allocation5 + $0x1228] sm:$0xff]
    %v725 = vld [vmem:[#allocation5 + $0x1230] sm:$0xff]
    %v726 = vld [vmem:[#allocation5 + $0x1238] sm:$0xff]
    %v727 = vld [vmem:[#allocation5 + $0x1240] sm:$0xff]
    %v728 = vld [vmem:[#allocation5 + $0x1248] sm:$0xff]
    %v729 = vld [vmem:[#allocation5 + $0x1250] sm:$0xff]
    %v730 = vld [vmem:[#allocation5 + $0x1258] sm:$0xff]
    %v731 = vld [vmem:[#allocation5 + $0x1260] sm:$0xff]
    %v732 = vld [vmem:[#allocation5 + $0x1268] sm:$0xff]
    %v733 = vld [vmem:[#allocation5 + $0x1270] sm:$0xff]
    %v734 = vld [vmem:[#allocation5 + $0x1278] sm:$0xff]
    %v735 = vld [vmem:[#allocation5 + $0x1280] sm:$0xff]
    %v736 = vld [vmem:[#allocation5 + $0x1288] sm:$0xff]
    %v737 = vld [vmem:[#allocation5 + $0x1290] sm:$0xff]
    %v738 = vld [vmem:[#allocation5 + $0x1298] sm:$0xff]
    %v739 = vld [vmem:[#allocation5 + $0x12a0] sm:$0xff]
    %v740 = vld [vmem:[#allocation5 + $0x12a8] sm:$0xff]
    %v741 = vld [vmem:[#allocation5 + $0x12b0] sm:$0xff]
    %v742 = vld [vmem:[#allocation5 + $0x12b8] sm:$0xff]
    %v743 = vld [vmem:[#allocation5 + $0x12c0] sm:$0xff]
    %v744 = vld [vmem:[#allocation5 + $0x12c8] sm:$0xff]
    %v745 = vld [vmem:[#allocation5 + $0x12d0] sm:$0xff]
    %v746 = vld [vmem:[#allocation5 + $0x12d8] sm:$0xff]
    %v747 = vld [vmem:[#allocation5 + $0x12e0] sm:$0xff]
    %v748 = vld [vmem:[#allocation5 + $0x12e8] sm:$0xff]
    %v749 = vld [vmem:[#allocation5 + $0x12f0] sm:$0xff]
    %v750 = vld [vmem:[#allocation5 + $0x12f8] sm:$0xff]
    %v751 = vld [vmem:[#allocation5 + $0x1300] sm:$0xff]
    %v752 = vld [vmem:[#allocation5 + $0x1308] sm:$0xff]
    %v753 = vld [vmem:[#allocation5 + $0x1310] sm:$0xff]
    %v754 = vld [vmem:[#allocation5 + $0x1318] sm:$0xff]
    %v755 = vld [vmem:[#allocation5 + $0x1320] sm:$0xff]
    %v756 = vld [vmem:[#allocation5 + $0x1328] sm:$0xff]
    %v757 = vld [vmem:[#allocation5 + $0x1330] sm:$0xff]
    %v758 = vld [vmem:[#allocation5 + $0x1338] sm:$0xff]
    %v759 = vld [vmem:[#allocation5 + $0x1340] sm:$0xff]
    %v760 = vld [vmem:[#allocation5 + $0x1348] sm:$0xff]
    %v761 = vld [vmem:[#allocation5 + $0x1350] sm:$0xff]
    %v762 = vld [vmem:[#allocation5 + $0x1358] sm:$0xff]
    %v763 = vld [vmem:[#allocation5 + $0x1360] sm:$0xff]
    %v764 = vld [vmem:[#allocation5 + $0x1368] sm:$0xff]
    %v765 = vld [vmem:[#allocation5 + $0x1370] sm:$0xff]
    %v766 = vld [vmem:[#allocation5 + $0x1378] sm:$0xff]
    %v767 = vld [vmem:[#allocation5 + $0x1380] sm:$0xff]
    %v768 = vld [vmem:[#allocation5 + $0x1388] sm:$0xff]
    %v769 = vld [vmem:[#allocation5 + $0x1390] sm:$0xff]
    %v770 = vld [vmem:[#allocation5 + $0x1398] sm:$0xff]
    %v771 = vld [vmem:[#allocation5 + $0x13a0] sm:$0xff]
    %v772 = vld [vmem:[#allocation5 + $0x13a8] sm:$0xff]
    %v773 = vld [vmem:[#allocation5 + $0x13b0] sm:$0xff]
    %v774 = vld [vmem:[#allocation5 + $0x13b8] sm:$0xff]
    %v775 = vld [vmem:[#allocation5 + $0x13c0] sm:$0xff]
    %v776 = vld [vmem:[#allocation5 + $0x13c8] sm:$0xff]
    %v777 = vld [vmem:[#allocation5 + $0x13d0] sm:$0xff]
    %v778 = vld [vmem:[#allocation5 + $0x13d8] sm:$0xff]
    %v779 = vld [vmem:[#allocation5 + $0x13e0] sm:$0xff]
    %v780 = vld [vmem:[#allocation5 + $0x13e8] sm:$0xff]
    %v781 = vld [vmem:[#allocation5 + $0x13f0] sm:$0xff]
    %v782 = vld [vmem:[#allocation5 + $0x13f8] sm:$0xff]
    %v783 = vld [vmem:[#allocation5 + $0x1400] sm:$0xff]
    %v784 = vld [vmem:[#allocation5 + $0x1408] sm:$0xff]
    %v785 = vld [vmem:[#allocation5 + $0x1410] sm:$0xff]
    %v786 = vld [vmem:[#allocation5 + $0x1418] sm:$0xff]
    %v787 = vld [vmem:[#allocation5 + $0x1420] sm:$0xff]
    %v788 = vld [vmem:[#allocation5 + $0x1428] sm:$0xff]
    %v789 = vld [vmem:[#allocation5 + $0x1430] sm:$0xff]
    %v790 = vld [vmem:[#allocation5 + $0x1438] sm:$0xff]
    %v791 = vld [vmem:[#allocation5 + $0x1440] sm:$0xff]
    %v792 = vld [vmem:[#allocation5 + $0x1448] sm:$0xff]
    %v793 = vld [vmem:[#allocation5 + $0x1450] sm:$0xff]
    %v794 = vld [vmem:[#allocation5 + $0x1458] sm:$0xff]
    %v795 = vld [vmem:[#allocation5 + $0x1460] sm:$0xff]
    %v796 = vld [vmem:[#allocation5 + $0x1468] sm:$0xff]
    %v797 = vld [vmem:[#allocation5 + $0x1470] sm:$0xff]
    %v798 = vld [vmem:[#allocation5 + $0x1478] sm:$0xff]
    %v799 = vld [vmem:[#allocation5 + $0x1480] sm:$0xff]
    %v800 = vld [vmem:[#allocation5 + $0x1488] sm:$0xff]
    %v801 = vld [vmem:[#allocation5 + $0x1490] sm:$0xff]
    %v802 = vld [vmem:[#allocation5 + $0x1498] sm:$0xff]
    %v803 = vld [vmem:[#allocation5 + $0x14a0] sm:$0xff]
    %v804 = vld [vmem:[#allocation5 + $0x14a8] sm:$0xff]
    %v805 = vld [vmem:[#allocation5 + $0x14b0] sm:$0xff]
    %v806 = vld [vmem:[#allocation5 + $0x14b8] sm:$0xff]
    %v807 = vld [vmem:[#allocation5 + $0x14c0] sm:$0xff]
    %v808 = vld [vmem:[#allocation5 + $0x14c8] sm:$0xff]
    %v809 = vld [vmem:[#allocation5 + $0x14d0] sm:$0xff]
    %v810 = vld [vmem:[#allocation5 + $0x14d8] sm:$0xff]
    %v811 = vld [vmem:[#allocation5 + $0x14e0] sm:$0xff]
    %v812 = vld [vmem:[#allocation5 + $0x14e8] sm:$0xff]
    %v813 = vld [vmem:[#allocation5 + $0x14f0] sm:$0xff]
    %v814 = vld [vmem:[#allocation5 + $0x14f8] sm:$0xff]
    %v815 = vld [vmem:[#allocation5 + $0x1500] sm:$0xff]
    %v816 = vld [vmem:[#allocation5 + $0x1508] sm:$0xff]
    %v817 = vld [vmem:[#allocation5 + $0x1510] sm:$0xff]
    %v818 = vld [vmem:[#allocation5 + $0x1518] sm:$0xff]
    %v819 = vld [vmem:[#allocation5 + $0x1520] sm:$0xff]
    %v820 = vld [vmem:[#allocation5 + $0x1528] sm:$0xff]
    %v821 = vld [vmem:[#allocation5 + $0x1530] sm:$0xff]
    %v822 = vld [vmem:[#allocation5 + $0x1538] sm:$0xff]
    %v823 = vld [vmem:[#allocation5 + $0x1540] sm:$0xff]
    %v824 = vld [vmem:[#allocation5 + $0x1548] sm:$0xff]
    %v825 = vld [vmem:[#allocation5 + $0x1550] sm:$0xff]
    %v826 = vld [vmem:[#allocation5 + $0x1558] sm:$0xff]
    %v827 = vld [vmem:[#allocation5 + $0x1560] sm:$0xff]
    %v828 = vld [vmem:[#allocation5 + $0x1568] sm:$0xff]
    %v829 = vld [vmem:[#allocation5 + $0x1570] sm:$0xff]
    %v830 = vld [vmem:[#allocation5 + $0x1578] sm:$0xff]
    %v831 = vld [vmem:[#allocation5 + $0x1580] sm:$0xff]
    %v832 = vld [vmem:[#allocation5 + $0x1588] sm:$0xff]
    %v833 = vld [vmem:[#allocation5 + $0x1590] sm:$0xff]
    %v834 = vld [vmem:[#allocation5 + $0x1598] sm:$0xff]
    %v835 = vld [vmem:[#allocation5 + $0x15a0] sm:$0xff]
    %v836 = vld [vmem:[#allocation5 + $0x15a8] sm:$0xff]
    %v837 = vld [vmem:[#allocation5 + $0x15b0] sm:$0xff]
    %v838 = vld [vmem:[#allocation5 + $0x15b8] sm:$0xff]
    %v839 = vld [vmem:[#allocation5 + $0x15c0] sm:$0xff]
    %v840 = vld [vmem:[#allocation5 + $0x15c8] sm:$0xff]
    %v841 = vld [vmem:[#allocation5 + $0x15d0] sm:$0xff]
    %v842 = vld [vmem:[#allocation5 + $0x15d8] sm:$0xff]
    %v843 = vld [vmem:[#allocation5 + $0x15e0] sm:$0xff]
    %v844 = vld [vmem:[#allocation5 + $0x15e8] sm:$0xff]
    %v845 = vld [vmem:[#allocation5 + $0x15f0] sm:$0xff]
    %v846 = vld [vmem:[#allocation5 + $0x15f8] sm:$0xff]
    %v847 = vld [vmem:[#allocation5 + $0x1600] sm:$0xff]
    %v848 = vld [vmem:[#allocation5 + $0x1608] sm:$0xff]
    %v849 = vld [vmem:[#allocation5 + $0x1610] sm:$0xff]
    %v850 = vld [vmem:[#allocation5 + $0x1618] sm:$0xff]
    %v851 = vld [vmem:[#allocation5 + $0x1620] sm:$0xff]
    %v852 = vld [vmem:[#allocation5 + $0x1628] sm:$0xff]
    %v853 = vld [vmem:[#allocation5 + $0x1630] sm:$0xff]
    %v854 = vld [vmem:[#allocation5 + $0x1638] sm:$0xff]
    %v855 = vld [vmem:[#allocation5 + $0x1640] sm:$0xff]
    %v856 = vld [vmem:[#allocation5 + $0x1648] sm:$0xff]
    %v857 = vld [vmem:[#allocation5 + $0x1650] sm:$0xff]
    %v858 = vld [vmem:[#allocation5 + $0x1658] sm:$0xff]
    %v859 = vld [vmem:[#allocation5 + $0x1660] sm:$0xff]
    %v860 = vld [vmem:[#allocation5 + $0x1668] sm:$0xff]
    %v861 = vld [vmem:[#allocation5 + $0x1670] sm:$0xff]
    %v862 = vld [vmem:[#allocation5 + $0x1678] sm:$0xff]
    %v863 = vld [vmem:[#allocation5 + $0x1680] sm:$0xff]
    %v864 = vld [vmem:[#allocation5 + $0x1688] sm:$0xff]
    %v865 = vld [vmem:[#allocation5 + $0x1690] sm:$0xff]
    %v866 = vld [vmem:[#allocation5 + $0x1698] sm:$0xff]
    %v867 = vld [vmem:[#allocation5 + $0x16a0] sm:$0xff]
    %v868 = vld [vmem:[#allocation5 + $0x16a8] sm:$0xff]
    %v869 = vld [vmem:[#allocation5 + $0x16b0] sm:$0xff]
    %v870 = vld [vmem:[#allocation5 + $0x16b8] sm:$0xff]
    %v871 = vld [vmem:[#allocation5 + $0x16c0] sm:$0xff]
    %v872 = vld [vmem:[#allocation5 + $0x16c8] sm:$0xff]
    %v873 = vld [vmem:[#allocation5 + $0x16d0] sm:$0xff]
    %v874 = vld [vmem:[#allocation5 + $0x16d8] sm:$0xff]
    %v875 = vld [vmem:[#allocation5 + $0x16e0] sm:$0xff]
    %v876 = vld [vmem:[#allocation5 + $0x16e8] sm:$0xff]
    %v877 = vld [vmem:[#allocation5 + $0x16f0] sm:$0xff]
    %v878 = vld [vmem:[#allocation5 + $0x16f8] sm:$0xff]
    %v879 = vld [vmem:[#allocation5 + $0x1700] sm:$0xff]
    %v880 = vld [vmem:[#allocation5 + $0x1708] sm:$0xff]
    %v881 = vld [vmem:[#allocation5 + $0x1710] sm:$0xff]
    %v882 = vld [vmem:[#allocation5 + $0x1718] sm:$0xff]
    %v883 = vld [vmem:[#allocation5 + $0x1720] sm:$0xff]
    %v884 = vld [vmem:[#allocation5 + $0x1728] sm:$0xff]
    %v885 = vld [vmem:[#allocation5 + $0x1730] sm:$0xff]
    %v886 = vld [vmem:[#allocation5 + $0x1738] sm:$0xff]
    %v887 = vld [vmem:[#allocation5 + $0x1740] sm:$0xff]
    %v888 = vld [vmem:[#allocation5 + $0x1748] sm:$0xff]
    %v889 = vld [vmem:[#allocation5 + $0x1750] sm:$0xff]
    %v890 = vld [vmem:[#allocation5 + $0x1758] sm:$0xff]
    %v891 = vld [vmem:[#allocation5 + $0x1760] sm:$0xff]
    %v892 = vld [vmem:[#allocation5 + $0x1768] sm:$0xff]
    %v893 = vld [vmem:[#allocation5 + $0x1770] sm:$0xff]
    %v894 = vld [vmem:[#allocation5 + $0x1778] sm:$0xff]
    %v895 = vld [vmem:[#allocation5 + $0x1780] sm:$0xff]
    %v896 = vld [vmem:[#allocation5 + $0x1788] sm:$0xff]
    %v897 = vld [vmem:[#allocation5 + $0x1790] sm:$0xff]
    %v898 = vld [vmem:[#allocation5 + $0x1798] sm:$0xff]
    %v899 = vld [vmem:[#allocation5 + $0x17a0] sm:$0xff]
    %v900 = vld [vmem:[#allocation5 + $0x17a8] sm:$0xff]
    %v901 = vld [vmem:[#allocation5 + $0x17b0] sm:$0xff]
    %v902 = vld [vmem:[#allocation5 + $0x17b8] sm:$0xff]
    %v903 = vld [vmem:[#allocation5 + $0x17c0] sm:$0xff]
    %v904 = vld [vmem:[#allocation5 + $0x17c8] sm:$0xff]
    %v905 = vld [vmem:[#allocation5 + $0x17d0] sm:$0xff]
    %v906 = vld [vmem:[#allocation5 + $0x17d8] sm:$0xff]
    %v907 = vld [vmem:[#allocation5 + $0x17e0] sm:$0xff]
    %v908 = vld [vmem:[#allocation5 + $0x17e8] sm:$0xff]
    %v909 = vld [vmem:[#allocation5 + $0x17f0] sm:$0xff]
    %v910 = vld [vmem:[#allocation5 + $0x17f8] sm:$0xff]
    %v911 = vld [vmem:[#allocation5 + $0x1800] sm:$0xff]
    %v912 = vld [vmem:[#allocation5 + $0x1808] sm:$0xff]
    %v913 = vld [vmem:[#allocation5 + $0x1810] sm:$0xff]
    %v914 = vld [vmem:[#allocation5 + $0x1818] sm:$0xff]
    %v915 = vld [vmem:[#allocation5 + $0x1820] sm:$0xff]
    %v916 = vld [vmem:[#allocation5 + $0x1828] sm:$0xff]
    %v917 = vld [vmem:[#allocation5 + $0x1830] sm:$0xff]
    %v918 = vld [vmem:[#allocation5 + $0x1838] sm:$0xff]
    %v919 = vld [vmem:[#allocation5 + $0x1840] sm:$0xff]
    %v920 = vld [vmem:[#allocation5 + $0x1848] sm:$0xff]
    %v921 = vld [vmem:[#allocation5 + $0x1850] sm:$0xff]
    %v922 = vld [vmem:[#allocation5 + $0x1858] sm:$0xff]
    %v923 = vld [vmem:[#allocation5 + $0x1860] sm:$0xff]
    %v924 = vld [vmem:[#allocation5 + $0x1868] sm:$0xff]
    %v925 = vld [vmem:[#allocation5 + $0x1870] sm:$0xff]
    %v926 = vld [vmem:[#allocation5 + $0x1878] sm:$0xff]
    %v927 = vld [vmem:[#allocation5 + $0x1880] sm:$0xff]
    %v928 = vld [vmem:[#allocation5 + $0x1888] sm:$0xff]
    %v929 = vld [vmem:[#allocation5 + $0x1890] sm:$0xff]
    %v930 = vld [vmem:[#allocation5 + $0x1898] sm:$0xff]
    %v931 = vld [vmem:[#allocation5 + $0x18a0] sm:$0xff]
    %v932 = vld [vmem:[#allocation5 + $0x18a8] sm:$0xff]
    %v933 = vld [vmem:[#allocation5 + $0x18b0] sm:$0xff]
    %v934 = vld [vmem:[#allocation5 + $0x18b8] sm:$0xff]
    %v935 = vld [vmem:[#allocation5 + $0x18c0] sm:$0xff]
    %v936 = vld [vmem:[#allocation5 + $0x18c8] sm:$0xff]
    %v937 = vld [vmem:[#allocation5 + $0x18d0] sm:$0xff]
    %v938 = vld [vmem:[#allocation5 + $0x18d8] sm:$0xff]
    %v939 = vld [vmem:[#allocation5 + $0x18e0] sm:$0xff]
    %v940 = vld [vmem:[#allocation5 + $0x18e8] sm:$0xff]
    %v941 = vld [vmem:[#allocation5 + $0x18f0] sm:$0xff]
    %v942 = vld [vmem:[#allocation5 + $0x18f8] sm:$0xff]
    %v943 = vld [vmem:[#allocation5 + $0x1900] sm:$0xff]
    %v944 = vld [vmem:[#allocation5 + $0x1908] sm:$0xff]
    %v945 = vld [vmem:[#allocation5 + $0x1910] sm:$0xff]
    %v946 = vld [vmem:[#allocation5 + $0x1918] sm:$0xff]
    %v947 = vld [vmem:[#allocation5 + $0x1920] sm:$0xff]
    %v948 = vld [vmem:[#allocation5 + $0x1928] sm:$0xff]
    %v949 = vld [vmem:[#allocation5 + $0x1930] sm:$0xff]
    %v950 = vld [vmem:[#allocation5 + $0x1938] sm:$0xff]
    %v951 = vld [vmem:[#allocation5 + $0x1940] sm:$0xff]
    %v952 = vld [vmem:[#allocation5 + $0x1948] sm:$0xff]
    %v953 = vld [vmem:[#allocation5 + $0x1950] sm:$0xff]
    %v954 = vld [vmem:[#allocation5 + $0x1958] sm:$0xff]
    %v955 = vld [vmem:[#allocation5 + $0x1960] sm:$0xff]
    %v956 = vld [vmem:[#allocation5 + $0x1968] sm:$0xff]
    %v957 = vld [vmem:[#allocation5 + $0x1970] sm:$0xff]
    %v958 = vld [vmem:[#allocation5 + $0x1978] sm:$0xff]
    %v959 = vld [vmem:[#allocation5 + $0x1980] sm:$0xff]
    %v960 = vld [vmem:[#allocation5 + $0x1988] sm:$0xff]
    %v961 = vld [vmem:[#allocation5 + $0x1990] sm:$0xff]
    %v962 = vld [vmem:[#allocation5 + $0x1998] sm:$0xff]
    %v963 = vld [vmem:[#allocation5 + $0x19a0] sm:$0xff]
    %v964 = vld [vmem:[#allocation5 + $0x19a8] sm:$0xff]
    %v965 = vld [vmem:[#allocation5 + $0x19b0] sm:$0xff]
    %v966 = vld [vmem:[#allocation5 + $0x19b8] sm:$0xff]
    %v967 = vld [vmem:[#allocation5 + $0x19c0] sm:$0xff]
    %v968 = vld [vmem:[#allocation5 + $0x19c8] sm:$0xff]
    %v969 = vld [vmem:[#allocation5 + $0x19d0] sm:$0xff]
    %v970 = vld [vmem:[#allocation5 + $0x19d8] sm:$0xff]
    %v971 = vld [vmem:[#allocation5 + $0x19e0] sm:$0xff]
    %v972 = vld [vmem:[#allocation5 + $0x19e8] sm:$0xff]
    %v973 = vld [vmem:[#allocation5 + $0x19f0] sm:$0xff]
    %v974 = vld [vmem:[#allocation5 + $0x19f8] sm:$0xff]
    %v975 = vld [vmem:[#allocation5 + $0x1a00] sm:$0xff]
    %v976 = vld [vmem:[#allocation5 + $0x1a08] sm:$0xff]
    %v977 = vld [vmem:[#allocation5 + $0x1a10] sm:$0xff]
    %v978 = vld [vmem:[#allocation5 + $0x1a18] sm:$0xff]
    %v979 = vld [vmem:[#allocation5 + $0x1a20] sm:$0xff]
    %v980 = vld [vmem:[#allocation5 + $0x1a28] sm:$0xff]
    %v981 = vld [vmem:[#allocation5 + $0x1a30] sm:$0xff]
    %v982 = vld [vmem:[#allocation5 + $0x1a38] sm:$0xff]
    %v983 = vld [vmem:[#allocation5 + $0x1a40] sm:$0xff]
    %v984 = vld [vmem:[#allocation5 + $0x1a48] sm:$0xff]
    %v985 = vld [vmem:[#allocation5 + $0x1a50] sm:$0xff]
    %v986 = vld [vmem:[#allocation5 + $0x1a58] sm:$0xff]
    %v987 = vld [vmem:[#allocation5 + $0x1a60] sm:$0xff]
    %v988 = vld [vmem:[#allocation5 + $0x1a68] sm:$0xff]
    %v989 = vld [vmem:[#allocation5 + $0x1a70] sm:$0xff]
    %v990 = vld [vmem:[#allocation5 + $0x1a78] sm:$0xff]
    %v991 = vld [vmem:[#allocation5 + $0x1a80] sm:$0xff]
    %v992 = vld [vmem:[#allocation5 + $0x1a88] sm:$0xff]
    %v993 = vld [vmem:[#allocation5 + $0x1a90] sm:$0xff]
    %v994 = vld [vmem:[#allocation5 + $0x1a98] sm:$0xff]
    %v995 = vld [vmem:[#allocation5 + $0x1aa0] sm:$0xff]
    %v996 = vld [vmem:[#allocation5 + $0x1aa8] sm:$0xff]
    %v997 = vld [vmem:[#allocation5 + $0x1ab0] sm:$0xff]
    %v998 = vld [vmem:[#allocation5 + $0x1ab8] sm:$0xff]
    %v999 = vld [vmem:[#allocation5 + $0x1ac0] sm:$0xff]
    %v1000 = vld [vmem:[#allocation5 + $0x1ac8] sm:$0xff]
    %v1001 = vld [vmem:[#allocation5 + $0x1ad0] sm:$0xff]
    %v1002 = vld [vmem:[#allocation5 + $0x1ad8] sm:$0xff]
    %v1003 = vld [vmem:[#allocation5 + $0x1ae0] sm:$0xff]
    %v1004 = vld [vmem:[#allocation5 + $0x1ae8] sm:$0xff]
    %v1005 = vld [vmem:[#allocation5 + $0x1af0] sm:$0xff]
    %v1006 = vld [vmem:[#allocation5 + $0x1af8] sm:$0xff]
    %v1007 = vld [vmem:[#allocation5 + $0x1b00] sm:$0xff]
    %v1008 = vld [vmem:[#allocation5 + $0x1b08] sm:$0xff]
    %v1009 = vld [vmem:[#allocation5 + $0x1b10] sm:$0xff]
    %v1010 = vld [vmem:[#allocation5 + $0x1b18] sm:$0xff]
    %v1011 = vld [vmem:[#allocation5 + $0x1b20] sm:$0xff]
    %v1012 = vld [vmem:[#allocation5 + $0x1b28] sm:$0xff]
    %v1013 = vld [vmem:[#allocation5 + $0x1b30] sm:$0xff]
    %v1014 = vld [vmem:[#allocation5 + $0x1b38] sm:$0xff]
    %v1015 = vld [vmem:[#allocation5 + $0x1b40] sm:$0xff]
    %v1016 = vld [vmem:[#allocation5 + $0x1b48] sm:$0xff]
    %v1017 = vld [vmem:[#allocation5 + $0x1b50] sm:$0xff]
    %v1018 = vld [vmem:[#allocation5 + $0x1b58] sm:$0xff]
    %v1019 = vld [vmem:[#allocation5 + $0x1b60] sm:$0xff]
    %v1020 = vld [vmem:[#allocation5 + $0x1b68] sm:$0xff]
    %v1021 = vld [vmem:[#allocation5 + $0x1b70] sm:$0xff]
    %v1022 = vld [vmem:[#allocation5 + $0x1b78] sm:$0xff]
    %v1023 = vld [vmem:[#allocation5 + $0x1b80] sm:$0xff]
    %v1024 = vld [vmem:[#allocation5 + $0x1b88] sm:$0xff]
    %v1025 = vld [vmem:[#allocation5 + $0x1b90] sm:$0xff]
    %v1026 = vld [vmem:[#allocation5 + $0x1b98] sm:$0xff]
    %v1027 = vld [vmem:[#allocation5 + $0x1ba0] sm:$0xff]
    %v1028 = vld [vmem:[#allocation5 + $0x1ba8] sm:$0xff]
    %v1029 = vld [vmem:[#allocation5 + $0x1bb0] sm:$0xff]
    %v1030 = vld [vmem:[#allocation5 + $0x1bb8] sm:$0xff]
    %v1031 = vld [vmem:[#allocation5 + $0x1bc0] sm:$0xff]
    %v1032 = vld [vmem:[#allocation5 + $0x1bc8] sm:$0xff]
    %v1033 = vld [vmem:[#allocation5 + $0x1bd0] sm:$0xff]
    %v1034 = vld [vmem:[#allocation5 + $0x1bd8] sm:$0xff]
    %v1035 = vld [vmem:[#allocation5 + $0x1be0] sm:$0xff]
    %v1036 = vld [vmem:[#allocation5 + $0x1be8] sm:$0xff]
    %v1037 = vld [vmem:[#allocation5 + $0x1bf0] sm:$0xff]
    %v1038 = vld [vmem:[#allocation5 + $0x1bf8] sm:$0xff]
    %v1039 = vld [vmem:[#allocation5 + $0x1c00] sm:$0xff]
    %v1040 = vld [vmem:[#allocation5 + $0x1c08] sm:$0xff]
    %v1041 = vld [vmem:[#allocation5 + $0x1c10] sm:$0xff]
    %v1042 = vld [vmem:[#allocation5 + $0x1c18] sm:$0xff]
    %v1043 = vld [vmem:[#allocation5 + $0x1c20] sm:$0xff]
    %v1044 = vld [vmem:[#allocation5 + $0x1c28] sm:$0xff]
    %v1045 = vld [vmem:[#allocation5 + $0x1c30] sm:$0xff]
    %v1046 = vld [vmem:[#allocation5 + $0x1c38] sm:$0xff]
    %v1047 = vld [vmem:[#allocation5 + $0x1c40] sm:$0xff]
    %v1048 = vld [vmem:[#allocation5 + $0x1c48] sm:$0xff]
    %v1049 = vld [vmem:[#allocation5 + $0x1c50] sm:$0xff]
    %v1050 = vld [vmem:[#allocation5 + $0x1c58] sm:$0xff]
    %v1051 = vld [vmem:[#allocation5 + $0x1c60] sm:$0xff]
    %v1052 = vld [vmem:[#allocation5 + $0x1c68] sm:$0xff]
    %v1053 = vld [vmem:[#allocation5 + $0x1c70] sm:$0xff]
    %v1054 = vld [vmem:[#allocation5 + $0x1c78] sm:$0xff]
    %v1055 = vld [vmem:[#allocation5 + $0x1c80] sm:$0xff]
    %v1056 = vld [vmem:[#allocation5 + $0x1c88] sm:$0xff]
    %v1057 = vld [vmem:[#allocation5 + $0x1c90] sm:$0xff]
    %v1058 = vld [vmem:[#allocation5 + $0x1c98] sm:$0xff]
    %v1059 = vld [vmem:[#allocation5 + $0x1ca0] sm:$0xff]
    %v1060 = vld [vmem:[#allocation5 + $0x1ca8] sm:$0xff]
    %v1061 = vld [vmem:[#allocation5 + $0x1cb0] sm:$0xff]
    %v1062 = vld [vmem:[#allocation5 + $0x1cb8] sm:$0xff]
    %v1063 = vld [vmem:[#allocation5 + $0x1cc0] sm:$0xff]
    %v1064 = vld [vmem:[#allocation5 + $0x1cc8] sm:$0xff]
    %v1065 = vld [vmem:[#allocation5 + $0x1cd0] sm:$0xff]
    %v1066 = vld [vmem:[#allocation5 + $0x1cd8] sm:$0xff]
    %v1067 = vld [vmem:[#allocation5 + $0x1ce0] sm:$0xff]
    %v1068 = vld [vmem:[#allocation5 + $0x1ce8] sm:$0xff]
    %v1069 = vld [vmem:[#allocation5 + $0x1cf0] sm:$0xff]
    %v1070 = vld [vmem:[#allocation5 + $0x1cf8] sm:$0xff]
    %v1071 = vld [vmem:[#allocation7] sm:$0xf]
    %v1073 = vperm.slane %v1071, 0
    %v1074 = vperm.slane %v1071, 1
    %v1075 = vperm.slane %v1071, 2
    %v1076 = vperm.slane %v1071, 3
    %v1096 = vunpack.c.l.b16 %v128
    %v1097 = vunpack.c.h.b16 %v128
    %v1098 = vunpack.c.l.b16 %v129
    %v1099 = vunpack.c.h.b16 %v129
    %v1100 = vunpack.c.l.b16 %v130
    %v1101 = vunpack.c.h.b16 %v130
    %v1102 = vunpack.c.l.b16 %v131
    %v1103 = vunpack.c.h.b16 %v131
    %v1104 = vunpack.c.l.b16 %v132
    %v1105 = vunpack.c.h.b16 %v132
    %v1106 = vunpack.c.l.b16 %v133
    %v1107 = vunpack.c.h.b16 %v133
    %v1108 = vunpack.c.l.b16 %v134
    %v1109 = vunpack.c.h.b16 %v134
    %v1110 = vunpack.c.l.b16 %v135
    %v1111 = vunpack.c.h.b16 %v135
    %v1112 = vunpack.c.l.b16 %v136
    %v1113 = vunpack.c.h.b16 %v136
    %v1114 = vunpack.c.l.b16 %v137
    %v1115 = vunpack.c.h.b16 %v137
    %v1116 = vunpack.c.l.b16 %v138
    %v1117 = vunpack.c.h.b16 %v138
    %v1118 = vunpack.c.l.b16 %v139
    %v1119 = vunpack.c.h.b16 %v139
    %v1120 = vunpack.c.l.b16 %v140
    %v1121 = vunpack.c.h.b16 %v140
    %v1122 = vunpack.c.l.b16 %v141
    %v1123 = vunpack.c.h.b16 %v141
    %v1124 = vunpack.c.l.b16 %v142
    %v1125 = vpack.c.b16 %v1096, %v1096
    %v1126 = vpack.c.b16 %v1097, %v1097
    %v1127 = vpack.c.b16 %v1098, %v1098
    %v1128 = vpack.c.b16 %v1099, %v1099
    %v1129 = vpack.c.b16 %v1100, %v1100
    %v1130 = vpack.c.b16 %v1101, %v1101
    %v1131 = vpack.c.b16 %v1102, %v1102
    %v1132 = vpack.c.b16 %v1103, %v1103
    %v1133 = vpack.c.b16 %v1104, %v1104
    %v1134 = vpack.c.b16 %v1105, %v1105
    %v1135 = vpack.c.b16 %v1106, %v1106
    %v1136 = vpack.c.b16 %v1107, %v1107
    %v1137 = vpack.c.b16 %v1108, %v1108
    %v1138 = vpack.c.b16 %v1109, %v1109
    %v1139 = vpack.c.b16 %v1110, %v1110
    %v1140 = vpack.c.b16 %v1111, %v1111
    %v1141 = vpack.c.b16 %v1112, %v1112
    %v1142 = vpack.c.b16 %v1113, %v1113
    %v1143 = vpack.c.b16 %v1114, %v1114
    %v1144 = vpack.c.b16 %v1115, %v1115
    %v1145 = vpack.c.b16 %v1116, %v1116
    %v1146 = vpack.c.b16 %v1117, %v1117
    %v1147 = vpack.c.b16 %v1118, %v1118
    %v1148 = vpack.c.b16 %v1119, %v1119
    %v1149 = vpack.c.b16 %v1120, %v1120
    %v1150 = vpack.c.b16 %v1121, %v1121
    %v1151 = vpack.c.b16 %v1122, %v1122
    %v1152 = vpack.c.b16 %v1123, %v1123
    %v1153 = vpack.c.b16 %v1124, %v1124
    %v2111 = vunpack.c.l.b16 %v143
    %v2112 = vunpack.c.h.b16 %v143
    %v2113 = vunpack.c.l.b16 %v144
    %v2114 = vunpack.c.h.b16 %v144
    %v2115 = vunpack.c.l.b16 %v145
    %v2116 = vunpack.c.h.b16 %v145
    %v2117 = vunpack.c.l.b16 %v146
    %v2118 = vunpack.c.h.b16 %v146
    %v2119 = vunpack.c.l.b16 %v147
    %v2120 = vunpack.c.h.b16 %v147
    %v2121 = vunpack.c.l.b16 %v148
    %v2122 = vunpack.c.h.b16 %v148
    %v2123 = vunpack.c.l.b16 %v149
    %v2124 = vunpack.c.h.b16 %v149
    %v2125 = vunpack.c.l.b16 %v150
    %v2126 = vunpack.c.h.b16 %v150
    %v2127 = vunpack.c.l.b16 %v151
    %v2128 = vunpack.c.h.b16 %v151
    %v2129 = vunpack.c.l.b16 %v152
    %v2130 = vunpack.c.h.b16 %v152
    %v2131 = vunpack.c.l.b16 %v153
    %v2132 = vunpack.c.h.b16 %v153
    %v2133 = vunpack.c.l.b16 %v154
    %v2134 = vunpack.c.h.b16 %v154
    %v2135 = vunpack.c.l.b16 %v155
    %v2136 = vunpack.c.h.b16 %v155
    %v2137 = vunpack.c.l.b16 %v156
    %v2138 = vunpack.c.h.b16 %v156
    %v2139 = vunpack.c.l.b16 %v157
    %v2140 = vunpack.c.h.b16 %v157
    %v2141 = vunpack.c.l.b16 %v158
    %v2142 = vunpack.c.h.b16 %v158
    %v2143 = vunpack.c.l.b16 %v159
    %v2144 = vunpack.c.h.b16 %v159
    %v2145 = vunpack.c.l.b16 %v160
    %v2146 = vunpack.c.h.b16 %v160
    %v2147 = vunpack.c.l.b16 %v161
    %v2148 = vunpack.c.h.b16 %v161
    %v2149 = vunpack.c.l.b16 %v162
    %v2150 = vunpack.c.h.b16 %v162
    %v2151 = vunpack.c.l.b16 %v163
    %v2152 = vunpack.c.h.b16 %v163
    %v2153 = vunpack.c.l.b16 %v164
    %v2154 = vunpack.c.h.b16 %v164
    %v2155 = vunpack.c.l.b16 %v165
    %v2156 = vunpack.c.h.b16 %v165
    %v2157 = vunpack.c.l.b16 %v166
    %v2158 = vunpack.c.h.b16 %v166
    %v2159 = vunpack.c.l.b16 %v167
    %v2160 = vunpack.c.h.b16 %v167
    %v2161 = vunpack.c.l.b16 %v168
    %v2162 = vunpack.c.h.b16 %v168
    %v2163 = vunpack.c.l.b16 %v169
    %v2164 = vunpack.c.h.b16 %v169
    %v2165 = vunpack.c.l.b16 %v170
    %v2166 = vunpack.c.h.b16 %v170
    %v2167 = vunpack.c.l.b16 %v171
    %v2168 = vunpack.c.h.b16 %v171
    %v2169 = vunpack.c.l.b16 %v172
    %v2170 = vunpack.c.h.b16 %v172
    %v2171 = vunpack.c.l.b16 %v173
    %v2172 = vunpack.c.h.b16 %v173
    %v2173 = vunpack.c.l.b16 %v174
    %v2174 = vunpack.c.h.b16 %v174
    %v2175 = vunpack.c.l.b16 %v175
    %v2176 = vunpack.c.h.b16 %v175
    %v2177 = vunpack.c.l.b16 %v176
    %v2178 = vunpack.c.h.b16 %v176
    %v2179 = vunpack.c.l.b16 %v177
    %v2180 = vunpack.c.h.b16 %v177
    %v2181 = vunpack.c.l.b16 %v178
    %v2182 = vunpack.c.h.b16 %v178
    %v2183 = vunpack.c.l.b16 %v179
    %v2184 = vunpack.c.h.b16 %v179
    %v2185 = vunpack.c.l.b16 %v180
    %v2186 = vunpack.c.h.b16 %v180
    %v2187 = vunpack.c.l.b16 %v181
    %v2188 = vunpack.c.h.b16 %v181
    %v2189 = vunpack.c.l.b16 %v182
    %v2190 = vunpack.c.h.b16 %v182
    %v2191 = vunpack.c.l.b16 %v183
    %v2192 = vunpack.c.h.b16 %v183
    %v2193 = vunpack.c.l.b16 %v184
    %v2194 = vunpack.c.h.b16 %v184
    %v2195 = vunpack.c.l.b16 %v185
    %v2196 = vunpack.c.h.b16 %v185
    %v2197 = vunpack.c.l.b16 %v186
    %v2198 = vunpack.c.h.b16 %v186
    %v2199 = vunpack.c.l.b16 %v187
    %v2200 = vunpack.c.h.b16 %v187
    %v2201 = vunpack.c.l.b16 %v188
    %v2202 = vunpack.c.h.b16 %v188
    %v2203 = vunpack.c.l.b16 %v189
    %v2204 = vunpack.c.h.b16 %v189
    %v2205 = vunpack.c.l.b16 %v190
    %v2206 = vunpack.c.h.b16 %v190
    %v2207 = vunpack.c.l.b16 %v191
    %v2208 = vunpack.c.h.b16 %v191
    %v2209 = vunpack.c.l.b16 %v192
    %v2210 = vunpack.c.h.b16 %v192
    %v2211 = vunpack.c.l.b16 %v193
    %v2212 = vunpack.c.h.b16 %v193
    %v2213 = vunpack.c.l.b16 %v194
    %v2214 = vunpack.c.h.b16 %v194
    %v2215 = vunpack.c.l.b16 %v195
    %v2216 = vunpack.c.h.b16 %v195
    %v2217 = vunpack.c.l.b16 %v196
    %v2218 = vunpack.c.h.b16 %v196
    %v2219 = vunpack.c.l.b16 %v197
    %v2220 = vunpack.c.h.b16 %v197
    %v2221 = vunpack.c.l.b16 %v198
    %v2222 = vunpack.c.h.b16 %v198
    %v2223 = vunpack.c.l.b16 %v199
    %v2224 = vunpack.c.h.b16 %v199
    %v2225 = vunpack.c.l.b16 %v200
    %v2226 = vunpack.c.h.b16 %v200
    %v2227 = vunpack.c.l.b16 %v201
    %v2228 = vunpack.c.h.b16 %v201
    %v2229 = vunpack.c.l.b16 %v202
    %v2230 = vunpack.c.h.b16 %v202
    %v2231 = vunpack.c.l.b16 %v203
    %v2232 = vunpack.c.h.b16 %v203
    %v2233 = vunpack.c.l.b16 %v204
    %v2234 = vunpack.c.h.b16 %v204
    %v2235 = vunpack.c.l.b16 %v205
    %v2236 = vunpack.c.h.b16 %v205
    %v2237 = vunpack.c.l.b16 %v206
    %v2238 = vunpack.c.h.b16 %v206
    %v2239 = vunpack.c.l.b16 %v207
    %v2240 = vunpack.c.h.b16 %v207
    %v2241 = vunpack.c.l.b16 %v208
    %v2242 = vunpack.c.h.b16 %v208
    %v2243 = vunpack.c.l.b16 %v209
    %v2244 = vunpack.c.h.b16 %v209
    %v2245 = vunpack.c.l.b16 %v210
    %v2246 = vunpack.c.h.b16 %v210
    %v2247 = vunpack.c.l.b16 %v211
    %v2248 = vunpack.c.h.b16 %v211
    %v2249 = vunpack.c.l.b16 %v212
    %v2250 = vunpack.c.h.b16 %v212
    %v2251 = vunpack.c.l.b16 %v213
    %v2252 = vunpack.c.h.b16 %v213
    %v2253 = vunpack.c.l.b16 %v214
    %v2254 = vunpack.c.h.b16 %v214
    %v2255 = vunpack.c.l.b16 %v215
    %v2256 = vunpack.c.h.b16 %v215
    %v2257 = vunpack.c.l.b16 %v216
    %v2258 = vunpack.c.h.b16 %v216
    %v2259 = vunpack.c.l.b16 %v217
    %v2260 = vunpack.c.h.b16 %v217
    %v2261 = vunpack.c.l.b16 %v218
    %v2262 = vunpack.c.h.b16 %v218
    %v2263 = vunpack.c.l.b16 %v219
    %v2264 = vunpack.c.h.b16 %v219
    %v2265 = vunpack.c.l.b16 %v220
    %v2266 = vunpack.c.h.b16 %v220
    %v2267 = vunpack.c.l.b16 %v221
    %v2268 = vunpack.c.h.b16 %v221
    %v2269 = vunpack.c.l.b16 %v222
    %v2270 = vunpack.c.h.b16 %v222
    %v2271 = vunpack.c.l.b16 %v223
    %v2272 = vunpack.c.h.b16 %v223
    %v2273 = vunpack.c.l.b16 %v224
    %v2274 = vunpack.c.h.b16 %v224
    %v2275 = vunpack.c.l.b16 %v225
    %v2276 = vunpack.c.h.b16 %v225
    %v2277 = vunpack.c.l.b16 %v226
    %v2278 = vunpack.c.h.b16 %v226
    %v2279 = vunpack.c.l.b16 %v227
    %v2280 = vunpack.c.h.b16 %v227
    %v2281 = vunpack.c.l.b16 %v228
    %v2282 = vunpack.c.h.b16 %v228
    %v2283 = vunpack.c.l.b16 %v229
    %v2284 = vunpack.c.h.b16 %v229
    %v2285 = vunpack.c.l.b16 %v230
    %v2286 = vunpack.c.h.b16 %v230
    %v2287 = vunpack.c.l.b16 %v231
    %v2288 = vunpack.c.h.b16 %v231
    %v2289 = vunpack.c.l.b16 %v232
    %v2290 = vunpack.c.h.b16 %v232
    %v2291 = vunpack.c.l.b16 %v233
    %v2292 = vunpack.c.h.b16 %v233
    %v2293 = vunpack.c.l.b16 %v234
    %v2294 = vunpack.c.h.b16 %v234
    %v2295 = vunpack.c.l.b16 %v235
    %v2296 = vunpack.c.h.b16 %v235
    %v2297 = vunpack.c.l.b16 %v236
    %v2298 = vunpack.c.h.b16 %v236
    %v2299 = vunpack.c.l.b16 %v237
    %v2300 = vunpack.c.h.b16 %v237
    %v2301 = vunpack.c.l.b16 %v238
    %v2302 = vunpack.c.h.b16 %v238
    %v2303 = vunpack.c.l.b16 %v239
    %v2304 = vunpack.c.h.b16 %v239
    %v2305 = vunpack.c.l.b16 %v240
    %v2306 = vunpack.c.h.b16 %v240
    %v2307 = vunpack.c.l.b16 %v241
    %v2308 = vunpack.c.h.b16 %v241
    %v2309 = vunpack.c.l.b16 %v242
    %v2310 = vunpack.c.h.b16 %v242
    %v2311 = vunpack.c.l.b16 %v243
    %v2312 = vunpack.c.h.b16 %v243
    %v2313 = vunpack.c.l.b16 %v244
    %v2314 = vunpack.c.h.b16 %v244
    %v2315 = vunpack.c.l.b16 %v245
    %v2316 = vunpack.c.h.b16 %v245
    %v2317 = vunpack.c.l.b16 %v246
    %v2318 = vunpack.c.h.b16 %v246
    %v2319 = vunpack.c.l.b16 %v247
    %v2320 = vunpack.c.h.b16 %v247
    %v2321 = vunpack.c.l.b16 %v248
    %v2322 = vunpack.c.h.b16 %v248
    %v2323 = vunpack.c.l.b16 %v249
    %v2324 = vunpack.c.h.b16 %v249
    %v2325 = vunpack.c.l.b16 %v250
    %v2326 = vunpack.c.h.b16 %v250
    %v2327 = vunpack.c.l.b16 %v251
    %v2328 = vunpack.c.h.b16 %v251
    %v2329 = vunpack.c.l.b16 %v252
    %v2330 = vunpack.c.h.b16 %v252
    %v2331 = vunpack.c.l.b16 %v253
    %v2332 = vunpack.c.h.b16 %v253
    %v2333 = vunpack.c.l.b16 %v254
    %v2334 = vunpack.c.h.b16 %v254
    %v2335 = vunpack.c.l.b16 %v255
    %v2336 = vunpack.c.h.b16 %v255
    %v2337 = vunpack.c.l.b16 %v256
    %v2338 = vunpack.c.h.b16 %v256
    %v2339 = vunpack.c.l.b16 %v257
    %v2340 = vunpack.c.h.b16 %v257
    %v2341 = vunpack.c.l.b16 %v258
    %v2342 = vunpack.c.h.b16 %v258
    %v2343 = vunpack.c.l.b16 %v259
    %v2344 = vunpack.c.h.b16 %v259
    %v2345 = vunpack.c.l.b16 %v260
    %v2346 = vunpack.c.h.b16 %v260
    %v2347 = vunpack.c.l.b16 %v261
    %v2348 = vunpack.c.h.b16 %v261
    %v2349 = vunpack.c.l.b16 %v262
    %v2350 = vunpack.c.h.b16 %v262
    %v2351 = vunpack.c.l.b16 %v263
    %v2352 = vunpack.c.h.b16 %v263
    %v2353 = vunpack.c.l.b16 %v264
    %v2354 = vunpack.c.h.b16 %v264
    %v2355 = vunpack.c.l.b16 %v265
    %v2356 = vunpack.c.h.b16 %v265
    %v2357 = vunpack.c.l.b16 %v266
    %v2358 = vunpack.c.h.b16 %v266
    %v2359 = vunpack.c.l.b16 %v267
    %v2360 = vunpack.c.h.b16 %v267
    %v2361 = vunpack.c.l.b16 %v268
    %v2362 = vunpack.c.h.b16 %v268
    %v2363 = vunpack.c.l.b16 %v269
    %v2364 = vunpack.c.h.b16 %v269
    %v2365 = vunpack.c.l.b16 %v270
    %v2366 = vunpack.c.h.b16 %v270
    %v2367 = vunpack.c.l.b16 %v271
    %v2368 = vunpack.c.h.b16 %v271
    %v2369 = vunpack.c.l.b16 %v272
    %v2370 = vunpack.c.h.b16 %v272
    %v2371 = vunpack.c.l.b16 %v273
    %v2372 = vunpack.c.h.b16 %v273
    %v2373 = vunpack.c.l.b16 %v274
    %v2374 = vunpack.c.h.b16 %v274
    %v2375 = vunpack.c.l.b16 %v275
    %v2376 = vunpack.c.h.b16 %v275
    %v2377 = vunpack.c.l.b16 %v276
    %v2378 = vunpack.c.h.b16 %v276
    %v2379 = vunpack.c.l.b16 %v277
    %v2380 = vunpack.c.h.b16 %v277
    %v2381 = vunpack.c.l.b16 %v278
    %v2382 = vunpack.c.h.b16 %v278
    %v2383 = vunpack.c.l.b16 %v279
    %v2384 = vunpack.c.h.b16 %v279
    %v2385 = vunpack.c.l.b16 %v280
    %v2386 = vunpack.c.h.b16 %v280
    %v2387 = vunpack.c.l.b16 %v281
    %v2388 = vunpack.c.h.b16 %v281
    %v2389 = vunpack.c.l.b16 %v282
    %v2390 = vunpack.c.h.b16 %v282
    %v2391 = vunpack.c.l.b16 %v283
    %v2392 = vunpack.c.h.b16 %v283
    %v2393 = vunpack.c.l.b16 %v284
    %v2394 = vunpack.c.h.b16 %v284
    %v2395 = vunpack.c.l.b16 %v285
    %v2396 = vunpack.c.h.b16 %v285
    %v2397 = vunpack.c.l.b16 %v286
    %v2398 = vunpack.c.h.b16 %v286
    %v2399 = vunpack.c.l.b16 %v287
    %v2400 = vunpack.c.h.b16 %v287
    %v2401 = vunpack.c.l.b16 %v288
    %v2402 = vunpack.c.h.b16 %v288
    %v2403 = vunpack.c.l.b16 %v289
    %v2404 = vunpack.c.h.b16 %v289
    %v2405 = vunpack.c.l.b16 %v290
    %v2406 = vunpack.c.h.b16 %v290
    %v2407 = vunpack.c.l.b16 %v291
    %v2408 = vunpack.c.h.b16 %v291
    %v2409 = vunpack.c.l.b16 %v292
    %v2410 = vunpack.c.h.b16 %v292
    %v2411 = vunpack.c.l.b16 %v293
    %v2412 = vunpack.c.h.b16 %v293
    %v2413 = vunpack.c.l.b16 %v294
    %v2414 = vunpack.c.h.b16 %v294
    %v2415 = vunpack.c.l.b16 %v295
    %v2416 = vunpack.c.h.b16 %v295
    %v2417 = vunpack.c.l.b16 %v296
    %v2418 = vunpack.c.h.b16 %v296
    %v2419 = vunpack.c.l.b16 %v297
    %v2420 = vunpack.c.h.b16 %v297
    %v2421 = vunpack.c.l.b16 %v298
    %v2422 = vunpack.c.h.b16 %v298
    %v2423 = vunpack.c.l.b16 %v299
    %v2424 = vunpack.c.h.b16 %v299
    %v2425 = vunpack.c.l.b16 %v300
    %v2426 = vunpack.c.h.b16 %v300
    %v2427 = vunpack.c.l.b16 %v301
    %v2428 = vunpack.c.h.b16 %v301
    %v2429 = vunpack.c.l.b16 %v302
    %v2430 = vunpack.c.h.b16 %v302
    %v2431 = vunpack.c.l.b16 %v303
    %v2432 = vunpack.c.h.b16 %v303
    %v2433 = vunpack.c.l.b16 %v304
    %v2434 = vunpack.c.h.b16 %v304
    %v2435 = vunpack.c.l.b16 %v305
    %v2436 = vunpack.c.h.b16 %v305
    %v2437 = vunpack.c.l.b16 %v306
    %v2438 = vunpack.c.h.b16 %v306
    %v2439 = vunpack.c.l.b16 %v307
    %v2440 = vunpack.c.h.b16 %v307
    %v2441 = vunpack.c.l.b16 %v308
    %v2442 = vunpack.c.h.b16 %v308
    %v2443 = vunpack.c.l.b16 %v309
    %v2444 = vunpack.c.h.b16 %v309
    %v2445 = vunpack.c.l.b16 %v310
    %v2446 = vunpack.c.h.b16 %v310
    %v2447 = vunpack.c.l.b16 %v311
    %v2448 = vunpack.c.h.b16 %v311
    %v2449 = vunpack.c.l.b16 %v312
    %v2450 = vunpack.c.h.b16 %v312
    %v2451 = vunpack.c.l.b16 %v313
    %v2452 = vunpack.c.h.b16 %v313
    %v2453 = vunpack.c.l.b16 %v314
    %v2454 = vunpack.c.h.b16 %v314
    %v2455 = vunpack.c.l.b16 %v315
    %v2456 = vunpack.c.h.b16 %v315
    %v2457 = vunpack.c.l.b16 %v316
    %v2458 = vunpack.c.h.b16 %v316
    %v2459 = vunpack.c.l.b16 %v317
    %v2460 = vunpack.c.h.b16 %v317
    %v2461 = vunpack.c.l.b16 %v318
    %v2462 = vunpack.c.h.b16 %v318
    %v2463 = vunpack.c.l.b16 %v319
    %v2464 = vunpack.c.h.b16 %v319
    %v2465 = vunpack.c.l.b16 %v320
    %v2466 = vunpack.c.h.b16 %v320
    %v2467 = vunpack.c.l.b16 %v321
    %v2468 = vunpack.c.h.b16 %v321
    %v2469 = vunpack.c.l.b16 %v322
    %v2470 = vunpack.c.h.b16 %v322
    %v2471 = vunpack.c.l.b16 %v323
    %v2472 = vunpack.c.h.b16 %v323
    %v2473 = vunpack.c.l.b16 %v324
    %v2474 = vunpack.c.h.b16 %v324
    %v2475 = vunpack.c.l.b16 %v325
    %v2476 = vunpack.c.h.b16 %v325
    %v2477 = vunpack.c.l.b16 %v326
    %v2478 = vunpack.c.h.b16 %v326
    %v2479 = vunpack.c.l.b16 %v327
    %v2480 = vunpack.c.h.b16 %v327
    %v2481 = vunpack.c.l.b16 %v328
    %v2482 = vunpack.c.h.b16 %v328
    %v2483 = vunpack.c.l.b16 %v329
    %v2484 = vunpack.c.h.b16 %v329
    %v2485 = vunpack.c.l.b16 %v330
    %v2486 = vunpack.c.h.b16 %v330
    %v2487 = vunpack.c.l.b16 %v331
    %v2488 = vunpack.c.h.b16 %v331
    %v2489 = vunpack.c.l.b16 %v332
    %v2490 = vunpack.c.h.b16 %v332
    %v2491 = vunpack.c.l.b16 %v333
    %v2492 = vunpack.c.h.b16 %v333
    %v2493 = vunpack.c.l.b16 %v334
    %v2494 = vunpack.c.h.b16 %v334
    %v2495 = vunpack.c.l.b16 %v335
    %v2496 = vunpack.c.h.b16 %v335
    %v2497 = vunpack.c.l.b16 %v336
    %v2498 = vunpack.c.h.b16 %v336
    %v2499 = vunpack.c.l.b16 %v337
    %v2500 = vunpack.c.h.b16 %v337
    %v2501 = vunpack.c.l.b16 %v338
    %v2502 = vunpack.c.h.b16 %v338
    %v2503 = vunpack.c.l.b16 %v339
    %v2504 = vunpack.c.h.b16 %v339
    %v2505 = vunpack.c.l.b16 %v340
    %v2506 = vunpack.c.h.b16 %v340
    %v2507 = vunpack.c.l.b16 %v341
    %v2508 = vunpack.c.h.b16 %v341
    %v2509 = vunpack.c.l.b16 %v342
    %v2510 = vunpack.c.h.b16 %v342
    %v2511 = vunpack.c.l.b16 %v343
    %v2512 = vunpack.c.h.b16 %v343
    %v2513 = vunpack.c.l.b16 %v344
    %v2514 = vunpack.c.h.b16 %v344
    %v2515 = vunpack.c.l.b16 %v345
    %v2516 = vunpack.c.h.b16 %v345
    %v2517 = vunpack.c.l.b16 %v346
    %v2518 = vunpack.c.h.b16 %v346
    %v2519 = vunpack.c.l.b16 %v347
    %v2520 = vunpack.c.h.b16 %v347
    %v2521 = vunpack.c.l.b16 %v348
    %v2522 = vunpack.c.h.b16 %v348
    %v2523 = vunpack.c.l.b16 %v349
    %v2524 = vunpack.c.h.b16 %v349
    %v2525 = vunpack.c.l.b16 %v350
    %v2526 = vunpack.c.h.b16 %v350
    %v2527 = vunpack.c.l.b16 %v351
    %v2528 = vunpack.c.h.b16 %v351
    %v2529 = vunpack.c.l.b16 %v352
    %v2530 = vunpack.c.h.b16 %v352
    %v2531 = vunpack.c.l.b16 %v353
    %v2532 = vunpack.c.h.b16 %v353
    %v2533 = vunpack.c.l.b16 %v354
    %v2534 = vunpack.c.h.b16 %v354
    %v2535 = vunpack.c.l.b16 %v355
    %v2536 = vunpack.c.h.b16 %v355
    %v2537 = vunpack.c.l.b16 %v356
    %v2538 = vunpack.c.h.b16 %v356
    %v2539 = vunpack.c.l.b16 %v357
    %v2540 = vunpack.c.h.b16 %v357
    %v2541 = vunpack.c.l.b16 %v358
    %v2542 = vunpack.c.h.b16 %v358
    %v2543 = vunpack.c.l.b16 %v359
    %v2544 = vunpack.c.h.b16 %v359
    %v2545 = vunpack.c.l.b16 %v360
    %v2546 = vunpack.c.h.b16 %v360
    %v2547 = vunpack.c.l.b16 %v361
    %v2548 = vunpack.c.h.b16 %v361
    %v2549 = vunpack.c.l.b16 %v362
    %v2550 = vunpack.c.h.b16 %v362
    %v2551 = vunpack.c.l.b16 %v363
    %v2552 = vunpack.c.h.b16 %v363
    %v2553 = vunpack.c.l.b16 %v364
    %v2554 = vunpack.c.h.b16 %v364
    %v2555 = vunpack.c.l.b16 %v365
    %v2556 = vunpack.c.h.b16 %v365
    %v2557 = vunpack.c.l.b16 %v366
    %v2558 = vunpack.c.h.b16 %v366
    %v2559 = vunpack.c.l.b16 %v367
    %v2560 = vunpack.c.h.b16 %v367
    %v2561 = vunpack.c.l.b16 %v368
    %v2562 = vunpack.c.h.b16 %v368
    %v2563 = vunpack.c.l.b16 %v369
    %v2564 = vunpack.c.h.b16 %v369
    %v2565 = vunpack.c.l.b16 %v370
    %v2566 = vunpack.c.h.b16 %v370
    %v2567 = vunpack.c.l.b16 %v371
    %v2568 = vunpack.c.h.b16 %v371
    %v2569 = vunpack.c.l.b16 %v372
    %v2570 = vunpack.c.h.b16 %v372
    %v2571 = vunpack.c.l.b16 %v373
    %v2572 = vunpack.c.h.b16 %v373
    %v2573 = vunpack.c.l.b16 %v374
    %v2574 = vunpack.c.h.b16 %v374
    %v2575 = vunpack.c.l.b16 %v375
    %v2576 = vunpack.c.h.b16 %v375
    %v2577 = vunpack.c.l.b16 %v376
    %v2578 = vunpack.c.h.b16 %v376
    %v2579 = vunpack.c.l.b16 %v377
    %v2580 = vunpack.c.h.b16 %v377
    %v2581 = vunpack.c.l.b16 %v378
    %v2582 = vunpack.c.h.b16 %v378
    %v2583 = vunpack.c.l.b16 %v379
    %v2584 = vunpack.c.h.b16 %v379
    %v2585 = vunpack.c.l.b16 %v380
    %v2586 = vunpack.c.h.b16 %v380
    %v2587 = vunpack.c.l.b16 %v381
    %v2588 = vunpack.c.h.b16 %v381
    %v2589 = vunpack.c.l.b16 %v382
    %v2590 = vunpack.c.h.b16 %v382
    %v2591 = vunpack.c.l.b16 %v383
    %v2592 = vunpack.c.h.b16 %v383
    %v2593 = vunpack.c.l.b16 %v384
    %v2594 = vunpack.c.h.b16 %v384
    %v2595 = vunpack.c.l.b16 %v385
    %v2596 = vunpack.c.h.b16 %v385
    %v2597 = vunpack.c.l.b16 %v386
    %v2598 = vunpack.c.h.b16 %v386
    %v2599 = vunpack.c.l.b16 %v387
    %v2600 = vunpack.c.h.b16 %v387
    %v2601 = vunpack.c.l.b16 %v388
    %v2602 = vunpack.c.h.b16 %v388
    %v2603 = vunpack.c.l.b16 %v389
    %v2604 = vunpack.c.h.b16 %v389
    %v2605 = vunpack.c.l.b16 %v390
    %v2606 = vunpack.c.h.b16 %v390
    %v2607 = vunpack.c.l.b16 %v391
    %v2608 = vunpack.c.h.b16 %v391
    %v2609 = vunpack.c.l.b16 %v392
    %v2610 = vunpack.c.h.b16 %v392
    %v2611 = vunpack.c.l.b16 %v393
    %v2612 = vunpack.c.h.b16 %v393
    %v2613 = vunpack.c.l.b16 %v394
    %v2614 = vunpack.c.h.b16 %v394
    %v2615 = vunpack.c.l.b16 %v395
    %v2616 = vunpack.c.h.b16 %v395
    %v2617 = vunpack.c.l.b16 %v396
    %v2618 = vunpack.c.h.b16 %v396
    %v2619 = vunpack.c.l.b16 %v397
    %v2620 = vunpack.c.h.b16 %v397
    %v2621 = vunpack.c.l.b16 %v398
    %v2622 = vunpack.c.h.b16 %v398
    %v2623 = vunpack.c.l.b16 %v399
    %v2624 = vunpack.c.h.b16 %v399
    %v2625 = vunpack.c.l.b16 %v400
    %v2626 = vunpack.c.h.b16 %v400
    %v2627 = vunpack.c.l.b16 %v401
    %v2628 = vunpack.c.h.b16 %v401
    %v2629 = vunpack.c.l.b16 %v402
    %v2630 = vunpack.c.h.b16 %v402
    %v2631 = vunpack.c.l.b16 %v403
    %v2632 = vunpack.c.h.b16 %v403
    %v2633 = vunpack.c.l.b16 %v404
    %v2634 = vunpack.c.h.b16 %v404
    %v2635 = vunpack.c.l.b16 %v405
    %v2636 = vunpack.c.h.b16 %v405
    %v2637 = vunpack.c.l.b16 %v406
    %v2638 = vunpack.c.h.b16 %v406
    %v2639 = vunpack.c.l.b16 %v407
    %v2640 = vunpack.c.h.b16 %v407
    %v2641 = vunpack.c.l.b16 %v408
    %v2642 = vunpack.c.h.b16 %v408
    %v2643 = vunpack.c.l.b16 %v409
    %v2644 = vunpack.c.h.b16 %v409
    %v2645 = vunpack.c.l.b16 %v410
    %v2646 = vunpack.c.h.b16 %v410
    %v2647 = vunpack.c.l.b16 %v411
    %v2648 = vunpack.c.h.b16 %v411
    %v2649 = vunpack.c.l.b16 %v412
    %v2650 = vunpack.c.h.b16 %v412
    %v2651 = vunpack.c.l.b16 %v413
    %v2652 = vunpack.c.h.b16 %v413
    %v2653 = vunpack.c.l.b16 %v414
    %v2654 = vunpack.c.h.b16 %v414
    %v2655 = vunpack.c.l.b16 %v415
    %v2656 = vunpack.c.h.b16 %v415
    %v2657 = vunpack.c.l.b16 %v416
    %v2658 = vunpack.c.h.b16 %v416
    %v2659 = vunpack.c.l.b16 %v417
    %v2660 = vunpack.c.h.b16 %v417
    %v2661 = vunpack.c.l.b16 %v418
    %v2662 = vunpack.c.h.b16 %v418
    %v2663 = vunpack.c.l.b16 %v419
    %v2664 = vunpack.c.h.b16 %v419
    %v2665 = vunpack.c.l.b16 %v420
    %v2666 = vunpack.c.h.b16 %v420
    %v2667 = vunpack.c.l.b16 %v421
    %v2668 = vunpack.c.h.b16 %v421
    %v2669 = vunpack.c.l.b16 %v422
    %v2670 = vunpack.c.h.b16 %v422
    %v2671 = vunpack.c.l.b16 %v423
    %v2672 = vunpack.c.h.b16 %v423
    %v2673 = vunpack.c.l.b16 %v424
    %v2674 = vunpack.c.h.b16 %v424
    %v2675 = vunpack.c.l.b16 %v425
    %v2676 = vunpack.c.h.b16 %v425
    %v2677 = vunpack.c.l.b16 %v426
    %v2678 = vunpack.c.h.b16 %v426
    %v2679 = vunpack.c.l.b16 %v427
    %v2680 = vunpack.c.h.b16 %v427
    %v2681 = vunpack.c.l.b16 %v428
    %v2682 = vunpack.c.h.b16 %v428
    %v2683 = vunpack.c.l.b16 %v429
    %v2684 = vunpack.c.h.b16 %v429
    %v2685 = vunpack.c.l.b16 %v430
    %v2686 = vunpack.c.h.b16 %v430
    %v2687 = vunpack.c.l.b16 %v431
    %v2688 = vunpack.c.h.b16 %v431
    %v2689 = vunpack.c.l.b16 %v432
    %v2690 = vunpack.c.h.b16 %v432
    %v2691 = vunpack.c.l.b16 %v433
    %v2692 = vunpack.c.h.b16 %v433
    %v2693 = vunpack.c.l.b16 %v434
    %v2694 = vunpack.c.h.b16 %v434
    %v2695 = vunpack.c.l.b16 %v435
    %v2696 = vunpack.c.h.b16 %v435
    %v2697 = vunpack.c.l.b16 %v436
    %v2698 = vunpack.c.h.b16 %v436
    %v2699 = vunpack.c.l.b16 %v437
    %v2700 = vunpack.c.h.b16 %v437
    %v2701 = vunpack.c.l.b16 %v438
    %v2702 = vunpack.c.h.b16 %v438
    %v2703 = vunpack.c.l.b16 %v439
    %v2704 = vunpack.c.h.b16 %v439
    %v2705 = vunpack.c.l.b16 %v440
    %v2706 = vunpack.c.h.b16 %v440
    %v2707 = vunpack.c.l.b16 %v441
    %v2708 = vunpack.c.h.b16 %v441
    %v2709 = vunpack.c.l.b16 %v442
    %v2710 = vunpack.c.h.b16 %v442
    %v2711 = vunpack.c.l.b16 %v443
    %v2712 = vunpack.c.h.b16 %v443
    %v2713 = vunpack.c.l.b16 %v444
    %v2714 = vunpack.c.h.b16 %v444
    %v2715 = vunpack.c.l.b16 %v445
    %v2716 = vunpack.c.h.b16 %v445
    %v2717 = vunpack.c.l.b16 %v446
    %v2718 = vunpack.c.h.b16 %v446
    %v2719 = vunpack.c.l.b16 %v447
    %v2720 = vunpack.c.h.b16 %v447
    %v2721 = vunpack.c.l.b16 %v448
    %v2722 = vunpack.c.h.b16 %v448
    %v2723 = vunpack.c.l.b16 %v449
    %v2724 = vunpack.c.h.b16 %v449
    %v2725 = vunpack.c.l.b16 %v450
    %v2726 = vunpack.c.h.b16 %v450
    %v2727 = vunpack.c.l.b16 %v451
    %v2728 = vunpack.c.h.b16 %v451
    %v2729 = vunpack.c.l.b16 %v452
    %v2730 = vunpack.c.h.b16 %v452
    %v2731 = vunpack.c.l.b16 %v453
    %v2732 = vunpack.c.h.b16 %v453
    %v2733 = vunpack.c.l.b16 %v454
    %v2734 = vunpack.c.h.b16 %v454
    %v2735 = vunpack.c.l.b16 %v455
    %v2736 = vunpack.c.h.b16 %v455
    %v2737 = vunpack.c.l.b16 %v456
    %v2738 = vunpack.c.h.b16 %v456
    %v2739 = vunpack.c.l.b16 %v457
    %v2740 = vunpack.c.h.b16 %v457
    %v2741 = vunpack.c.l.b16 %v458
    %v2742 = vunpack.c.h.b16 %v458
    %v2743 = vunpack.c.l.b16 %v459
    %v2744 = vunpack.c.h.b16 %v459
    %v2745 = vunpack.c.l.b16 %v460
    %v2746 = vunpack.c.h.b16 %v460
    %v2747 = vunpack.c.l.b16 %v461
    %v2748 = vunpack.c.h.b16 %v461
    %v2749 = vunpack.c.l.b16 %v462
    %v2750 = vunpack.c.h.b16 %v462
    %v2751 = vunpack.c.l.b16 %v463
    %v2752 = vunpack.c.h.b16 %v463
    %v2753 = vunpack.c.l.b16 %v464
    %v2754 = vunpack.c.h.b16 %v464
    %v2755 = vunpack.c.l.b16 %v465
    %v2756 = vunpack.c.h.b16 %v465
    %v2757 = vunpack.c.l.b16 %v466
    %v2758 = vunpack.c.h.b16 %v466
    %v2759 = vunpack.c.l.b16 %v467
    %v2760 = vunpack.c.h.b16 %v467
    %v2761 = vunpack.c.l.b16 %v468
    %v2762 = vunpack.c.h.b16 %v468
    %v2763 = vunpack.c.l.b16 %v469
    %v2764 = vunpack.c.h.b16 %v469
    %v2765 = vunpack.c.l.b16 %v470
    %v2766 = vunpack.c.h.b16 %v470
    %v2767 = vunpack.c.l.b16 %v471
    %v2768 = vunpack.c.h.b16 %v471
    %v2769 = vunpack.c.l.b16 %v472
    %v2770 = vunpack.c.h.b16 %v472
    %v2771 = vunpack.c.l.b16 %v473
    %v2772 = vunpack.c.h.b16 %v473
    %v2773 = vunpack.c.l.b16 %v474
    %v2774 = vunpack.c.h.b16 %v474
    %v2775 = vunpack.c.l.b16 %v475
    %v2776 = vunpack.c.h.b16 %v475
    %v2777 = vunpack.c.l.b16 %v476
    %v2778 = vunpack.c.h.b16 %v476
    %v2779 = vunpack.c.l.b16 %v477
    %v2780 = vunpack.c.h.b16 %v477
    %v2781 = vunpack.c.l.b16 %v478
    %v2782 = vunpack.c.h.b16 %v478
    %v2783 = vunpack.c.l.b16 %v479
    %v2784 = vunpack.c.h.b16 %v479
    %v2785 = vunpack.c.l.b16 %v480
    %v2786 = vunpack.c.h.b16 %v480
    %v2787 = vunpack.c.l.b16 %v481
    %v2788 = vunpack.c.h.b16 %v481
    %v2789 = vunpack.c.l.b16 %v482
    %v2790 = vunpack.c.h.b16 %v482
    %v2791 = vunpack.c.l.b16 %v483
    %v2792 = vunpack.c.h.b16 %v483
    %v2793 = vunpack.c.l.b16 %v484
    %v2794 = vunpack.c.h.b16 %v484
    %v2795 = vunpack.c.l.b16 %v485
    %v2796 = vunpack.c.h.b16 %v485
    %v2797 = vunpack.c.l.b16 %v486
    %v2798 = vunpack.c.h.b16 %v486
    %v2799 = vunpack.c.l.b16 %v487
    %v2800 = vunpack.c.h.b16 %v487
    %v2801 = vunpack.c.l.b16 %v488
    %v2802 = vunpack.c.h.b16 %v488
    %v2803 = vunpack.c.l.b16 %v489
    %v2804 = vunpack.c.h.b16 %v489
    %v2805 = vunpack.c.l.b16 %v490
    %v2806 = vunpack.c.h.b16 %v490
    %v2807 = vunpack.c.l.b16 %v491
    %v2808 = vunpack.c.h.b16 %v491
    %v2809 = vunpack.c.l.b16 %v492
    %v2810 = vunpack.c.h.b16 %v492
    %v2811 = vunpack.c.l.b16 %v493
    %v2812 = vunpack.c.h.b16 %v493
    %v2813 = vunpack.c.l.b16 %v494
    %v2814 = vunpack.c.h.b16 %v494
    %v2815 = vunpack.c.l.b16 %v495
    %v2816 = vunpack.c.h.b16 %v495
    %v2817 = vunpack.c.l.b16 %v496
    %v2818 = vunpack.c.h.b16 %v496
    %v2819 = vunpack.c.l.b16 %v497
    %v2820 = vunpack.c.h.b16 %v497
    %v2821 = vunpack.c.l.b16 %v498
    %v2822 = vunpack.c.h.b16 %v498
    %v2823 = vunpack.c.l.b16 %v499
    %v2824 = vunpack.c.h.b16 %v499
    %v2825 = vunpack.c.l.b16 %v500
    %v2826 = vunpack.c.h.b16 %v500
    %v2827 = vunpack.c.l.b16 %v501
    %v2828 = vunpack.c.h.b16 %v501
    %v2829 = vunpack.c.l.b16 %v502
    %v2830 = vunpack.c.h.b16 %v502
    %v2831 = vunpack.c.l.b16 %v503
    %v2832 = vunpack.c.h.b16 %v503
    %v2833 = vunpack.c.l.b16 %v504
    %v2834 = vunpack.c.h.b16 %v504
    %v2835 = vunpack.c.l.b16 %v505
    %v2836 = vunpack.c.h.b16 %v505
    %v2837 = vunpack.c.l.b16 %v506
    %v2838 = vunpack.c.h.b16 %v506
    %v2839 = vunpack.c.l.b16 %v507
    %v2840 = vunpack.c.h.b16 %v507
    %v2841 = vunpack.c.l.b16 %v508
    %v2842 = vunpack.c.h.b16 %v508
    %v2843 = vunpack.c.l.b16 %v509
    %v2844 = vunpack.c.h.b16 %v509
    %v2845 = vunpack.c.l.b16 %v510
    %v2846 = vunpack.c.h.b16 %v510
    %v2847 = vunpack.c.l.b16 %v511
    %v2848 = vunpack.c.h.b16 %v511
    %v2849 = vunpack.c.l.b16 %v512
    %v2850 = vunpack.c.h.b16 %v512
    %v2851 = vunpack.c.l.b16 %v513
    %v2852 = vunpack.c.h.b16 %v513
    %v2853 = vunpack.c.l.b16 %v514
    %v2854 = vunpack.c.h.b16 %v514
    %v2855 = vunpack.c.l.b16 %v515
    %v2856 = vunpack.c.h.b16 %v515
    %v2857 = vunpack.c.l.b16 %v516
    %v2858 = vunpack.c.h.b16 %v516
    %v2859 = vunpack.c.l.b16 %v517
    %v2860 = vunpack.c.h.b16 %v517
    %v2861 = vunpack.c.l.b16 %v518
    %v2862 = vunpack.c.h.b16 %v518
    %v2863 = vunpack.c.l.b16 %v519
    %v2864 = vunpack.c.h.b16 %v519
    %v2865 = vunpack.c.l.b16 %v520
    %v2866 = vunpack.c.h.b16 %v520
    %v2867 = vunpack.c.l.b16 %v521
    %v2868 = vunpack.c.h.b16 %v521
    %v2869 = vunpack.c.l.b16 %v522
    %v2870 = vunpack.c.h.b16 %v522
    %v2871 = vunpack.c.l.b16 %v523
    %v2872 = vunpack.c.h.b16 %v523
    %v2873 = vunpack.c.l.b16 %v524
    %v2874 = vunpack.c.h.b16 %v524
    %v2875 = vunpack.c.l.b16 %v525
    %v2876 = vunpack.c.h.b16 %v525
    %v2877 = vunpack.c.l.b16 %v526
    %v2878 = vunpack.c.h.b16 %v526
    %v2879 = vunpack.c.l.b16 %v527
    %v2880 = vunpack.c.h.b16 %v527
    %v2881 = vunpack.c.l.b16 %v528
    %v2882 = vunpack.c.h.b16 %v528
    %v2883 = vunpack.c.l.b16 %v529
    %v2884 = vunpack.c.h.b16 %v529
    %v2885 = vunpack.c.l.b16 %v530
    %v2886 = vunpack.c.h.b16 %v530
    %v2887 = vunpack.c.l.b16 %v531
    %v2888 = vunpack.c.h.b16 %v531
    %v2889 = vunpack.c.l.b16 %v532
    %v2890 = vunpack.c.h.b16 %v532
    %v2891 = vunpack.c.l.b16 %v533
    %v2892 = vunpack.c.h.b16 %v533
    %v2893 = vunpack.c.l.b16 %v534
    %v2894 = vunpack.c.h.b16 %v534
    %v2895 = vunpack.c.l.b16 %v535
    %v2896 = vunpack.c.h.b16 %v535
    %v2897 = vunpack.c.l.b16 %v536
    %v2898 = vunpack.c.h.b16 %v536
    %v2899 = vunpack.c.l.b16 %v537
    %v2900 = vunpack.c.h.b16 %v537
    %v2901 = vunpack.c.l.b16 %v538
    %v2902 = vunpack.c.h.b16 %v538
    %v2903 = vunpack.c.l.b16 %v539
    %v2904 = vunpack.c.h.b16 %v539
    %v2905 = vunpack.c.l.b16 %v540
    %v2906 = vunpack.c.h.b16 %v540
    %v2907 = vunpack.c.l.b16 %v541
    %v2908 = vunpack.c.h.b16 %v541
    %v2909 = vunpack.c.l.b16 %v542
    %v2910 = vunpack.c.h.b16 %v542
    %v2911 = vunpack.c.l.b16 %v543
    %v2912 = vunpack.c.h.b16 %v543
    %v2913 = vunpack.c.l.b16 %v544
    %v2914 = vunpack.c.h.b16 %v544
    %v2915 = vunpack.c.l.b16 %v545
    %v2916 = vunpack.c.h.b16 %v545
    %v2917 = vunpack.c.l.b16 %v546
    %v2918 = vunpack.c.h.b16 %v546
    %v2919 = vunpack.c.l.b16 %v547
    %v2920 = vunpack.c.h.b16 %v547
    %v2921 = vunpack.c.l.b16 %v548
    %v2922 = vunpack.c.h.b16 %v548
    %v2923 = vunpack.c.l.b16 %v549
    %v2924 = vunpack.c.h.b16 %v549
    %v2925 = vunpack.c.l.b16 %v550
    %v2926 = vunpack.c.h.b16 %v550
    %v2927 = vunpack.c.l.b16 %v551
    %v2928 = vunpack.c.h.b16 %v551
    %v2929 = vunpack.c.l.b16 %v552
    %v2930 = vunpack.c.h.b16 %v552
    %v2931 = vunpack.c.l.b16 %v553
    %v2932 = vunpack.c.h.b16 %v553
    %v2933 = vunpack.c.l.b16 %v554
    %v2934 = vunpack.c.h.b16 %v554
    %v2935 = vunpack.c.l.b16 %v555
    %v2936 = vunpack.c.h.b16 %v555
    %v2937 = vunpack.c.l.b16 %v556
    %v2938 = vunpack.c.h.b16 %v556
    %v2939 = vunpack.c.l.b16 %v557
    %v2940 = vunpack.c.h.b16 %v557
    %v2941 = vunpack.c.l.b16 %v558
    %v2942 = vunpack.c.h.b16 %v558
    %v2943 = vunpack.c.l.b16 %v559
    %v2944 = vunpack.c.h.b16 %v559
    %v2945 = vunpack.c.l.b16 %v560
    %v2946 = vunpack.c.h.b16 %v560
    %v2947 = vunpack.c.l.b16 %v561
    %v2948 = vunpack.c.h.b16 %v561
    %v2949 = vunpack.c.l.b16 %v562
    %v2950 = vunpack.c.h.b16 %v562
    %v2951 = vunpack.c.l.b16 %v563
    %v2952 = vunpack.c.h.b16 %v563
    %v2953 = vunpack.c.l.b16 %v564
    %v2954 = vunpack.c.h.b16 %v564
    %v2955 = vunpack.c.l.b16 %v565
    %v2956 = vunpack.c.h.b16 %v565
    %v2957 = vunpack.c.l.b16 %v566
    %v2958 = vunpack.c.h.b16 %v566
    %v2959 = vunpack.c.l.b16 %v567
    %v2960 = vunpack.c.h.b16 %v567
    %v2961 = vunpack.c.l.b16 %v568
    %v2962 = vunpack.c.h.b16 %v568
    %v2963 = vunpack.c.l.b16 %v569
    %v2964 = vunpack.c.h.b16 %v569
    %v2965 = vunpack.c.l.b16 %v570
    %v2966 = vunpack.c.h.b16 %v570
    %v2967 = vunpack.c.l.b16 %v571
    %v2968 = vunpack.c.h.b16 %v571
    %v2969 = vunpack.c.l.b16 %v572
    %v2970 = vunpack.c.h.b16 %v572
    %v2971 = vunpack.c.l.b16 %v573
    %v2972 = vunpack.c.h.b16 %v573
    %v2973 = vunpack.c.l.b16 %v574
    %v2974 = vunpack.c.h.b16 %v574
    %v2975 = vunpack.c.l.b16 %v575
    %v2976 = vunpack.c.h.b16 %v575
    %v2977 = vunpack.c.l.b16 %v576
    %v2978 = vunpack.c.h.b16 %v576
    %v2979 = vunpack.c.l.b16 %v577
    %v2980 = vunpack.c.h.b16 %v577
    %v2981 = vunpack.c.l.b16 %v578
    %v2982 = vunpack.c.h.b16 %v578
    %v2983 = vunpack.c.l.b16 %v579
    %v2984 = vunpack.c.h.b16 %v579
    %v2985 = vunpack.c.l.b16 %v580
    %v2986 = vunpack.c.h.b16 %v580
    %v2987 = vunpack.c.l.b16 %v581
    %v2988 = vunpack.c.h.b16 %v581
    %v2989 = vunpack.c.l.b16 %v582
    %v2990 = vunpack.c.h.b16 %v582
    %v2991 = vunpack.c.l.b16 %v583
    %v2992 = vunpack.c.h.b16 %v583
    %v2993 = vunpack.c.l.b16 %v584
    %v2994 = vunpack.c.h.b16 %v584
    %v2995 = vunpack.c.l.b16 %v585
    %v2996 = vunpack.c.h.b16 %v585
    %v2997 = vunpack.c.l.b16 %v586
    %v2998 = vunpack.c.h.b16 %v586
    %v2999 = vunpack.c.l.b16 %v587
    %v3000 = vunpack.c.h.b16 %v587
    %v3001 = vunpack.c.l.b16 %v588
    %v3002 = vunpack.c.h.b16 %v588
    %v3003 = vunpack.c.l.b16 %v589
    %v3004 = vunpack.c.h.b16 %v589
    %v3005 = vunpack.c.l.b16 %v590
    %v3006 = vunpack.c.h.b16 %v590
    %v3007 = vunpack.c.l.b16 %v591
    %v3008 = vunpack.c.h.b16 %v591
    %v3009 = vunpack.c.l.b16 %v592
    %v3010 = vunpack.c.h.b16 %v592
    %v3011 = vunpack.c.l.b16 %v593
    %v3012 = vunpack.c.h.b16 %v593
    %v3013 = vunpack.c.l.b16 %v594
    %v3014 = vunpack.c.h.b16 %v594
    %v3015 = vunpack.c.l.b16 %v595
    %v3016 = vunpack.c.h.b16 %v595
    %v3017 = vunpack.c.l.b16 %v596
    %v3018 = vunpack.c.h.b16 %v596
    %v3019 = vunpack.c.l.b16 %v597
    %v3020 = vunpack.c.h.b16 %v597
    %v3021 = vunpack.c.l.b16 %v598
    %v3022 = vunpack.c.h.b16 %v598
    %v3023 = vunpack.c.l.b16 %v599
    %v3024 = vunpack.c.h.b16 %v599
    %v3025 = vunpack.c.l.b16 %v600
    %v3026 = vunpack.c.h.b16 %v600
    %v3027 = vunpack.c.l.b16 %v601
    %v3028 = vunpack.c.h.b16 %v601
    %v3029 = vunpack.c.l.b16 %v602
    %v3030 = vunpack.c.h.b16 %v602
    %v3031 = vunpack.c.l.b16 %v603
    %v3032 = vunpack.c.h.b16 %v603
    %v3033 = vunpack.c.l.b16 %v604
    %v3034 = vunpack.c.h.b16 %v604
    %v3035 = vunpack.c.l.b16 %v605
    %v3036 = vunpack.c.h.b16 %v605
    %v3037 = vunpack.c.l.b16 %v606
    %v3038 = vunpack.c.h.b16 %v606
    %v3039 = vunpack.c.l.b16 %v607
    %v3040 = vunpack.c.h.b16 %v607
    %v3041 = vunpack.c.l.b16 %v608
    %v3042 = vunpack.c.h.b16 %v608
    %v3043 = vunpack.c.l.b16 %v609
    %v3044 = vunpack.c.h.b16 %v609
    %v3045 = vunpack.c.l.b16 %v610
    %v3046 = vunpack.c.h.b16 %v610
    %v3047 = vunpack.c.l.b16 %v611
    %v3048 = vunpack.c.h.b16 %v611
    %v3049 = vunpack.c.l.b16 %v612
    %v3050 = vunpack.c.h.b16 %v612
    %v3051 = vunpack.c.l.b16 %v613
    %v3052 = vunpack.c.h.b16 %v613
    %v3053 = vunpack.c.l.b16 %v614
    %v3054 = vunpack.c.h.b16 %v614
    %v3055 = vunpack.c.l.b16 %v615
    %v3056 = vunpack.c.h.b16 %v615
    %v3057 = vunpack.c.l.b16 %v616
    %v3058 = vunpack.c.h.b16 %v616
    %v3059 = vunpack.c.l.b16 %v617
    %v3060 = vunpack.c.h.b16 %v617
    %v3061 = vunpack.c.l.b16 %v618
    %v3062 = vunpack.c.h.b16 %v618
    %v3063 = vunpack.c.l.b16 %v619
    %v3064 = vunpack.c.h.b16 %v619
    %v3065 = vunpack.c.l.b16 %v620
    %v3066 = vunpack.c.h.b16 %v620
    %v3067 = vunpack.c.l.b16 %v621
    %v3068 = vunpack.c.h.b16 %v621
    %v3069 = vunpack.c.l.b16 %v622
    %v3070 = vunpack.c.h.b16 %v622
    %v3071 = vunpack.c.l.b16 %v623
    %v3072 = vunpack.c.h.b16 %v623
    %v3073 = vunpack.c.l.b16 %v624
    %v3074 = vunpack.c.h.b16 %v624
    %v3075 = vunpack.c.l.b16 %v625
    %v3076 = vunpack.c.h.b16 %v625
    %v3077 = vunpack.c.l.b16 %v626
    %v3078 = vunpack.c.h.b16 %v626
    %v3079 = vunpack.c.l.b16 %v627
    %v3080 = vunpack.c.h.b16 %v627
    %v3081 = vunpack.c.l.b16 %v628
    %v3082 = vunpack.c.h.b16 %v628
    %v3083 = vunpack.c.l.b16 %v629
    %v3084 = vunpack.c.h.b16 %v629
    %v3085 = vunpack.c.l.b16 %v630
    %v3086 = vunpack.c.h.b16 %v630
    %v3087 = vunpack.c.l.b16 %v631
    %v3088 = vunpack.c.h.b16 %v631
    %v3089 = vunpack.c.l.b16 %v632
    %v3090 = vunpack.c.h.b16 %v632
    %v3091 = vunpack.c.l.b16 %v633
    %v3092 = vunpack.c.h.b16 %v633
    %v3093 = vunpack.c.l.b16 %v634
    %v3094 = vunpack.c.h.b16 %v634
    %v3095 = vunpack.c.l.b16 %v635
    %v3096 = vunpack.c.h.b16 %v635
    %v3097 = vunpack.c.l.b16 %v636
    %v3098 = vunpack.c.h.b16 %v636
    %v3099 = vunpack.c.l.b16 %v637
    %v3100 = vunpack.c.h.b16 %v637
    %v3101 = vunpack.c.l.b16 %v638
    %v3102 = vunpack.c.h.b16 %v638
    %v3103 = vunpack.c.l.b16 %v639
    %v3104 = vunpack.c.h.b16 %v639
    %v3105 = vunpack.c.l.b16 %v640
    %v3106 = vunpack.c.h.b16 %v640
    %v3107 = vunpack.c.l.b16 %v641
    %v3108 = vunpack.c.h.b16 %v641
    %v3109 = vunpack.c.l.b16 %v642
    %v3110 = vunpack.c.h.b16 %v642
    %v3111 = vunpack.c.l.b16 %v643
    %v3112 = vunpack.c.h.b16 %v643
    %v3113 = vunpack.c.l.b16 %v644
    %v3114 = vunpack.c.h.b16 %v644
    %v3115 = vunpack.c.l.b16 %v645
    %v3116 = vunpack.c.h.b16 %v645
    %v3117 = vunpack.c.l.b16 %v646
    %v3118 = vunpack.c.h.b16 %v646
    %v3119 = vunpack.c.l.b16 %v647
    %v3120 = vunpack.c.h.b16 %v647
    %v3121 = vunpack.c.l.b16 %v648
    %v3122 = vunpack.c.h.b16 %v648
    %v3123 = vunpack.c.l.b16 %v649
    %v3124 = vunpack.c.h.b16 %v649
    %v3125 = vunpack.c.l.b16 %v650
    %v3126 = vunpack.c.h.b16 %v650
    %v3127 = vunpack.c.l.b16 %v651
    %v3128 = vunpack.c.h.b16 %v651
    %v3129 = vunpack.c.l.b16 %v652
    %v3130 = vunpack.c.h.b16 %v652
    %v3131 = vunpack.c.l.b16 %v653
    %v3132 = vunpack.c.h.b16 %v653
    %v3133 = vunpack.c.l.b16 %v654
    %v3134 = vunpack.c.h.b16 %v654
    %v3135 = vunpack.c.l.b16 %v655
    %v3136 = vunpack.c.h.b16 %v655
    %v3137 = vunpack.c.l.b16 %v656
    %v3138 = vunpack.c.h.b16 %v656
    %v3139 = vunpack.c.l.b16 %v657
    %v3140 = vunpack.c.h.b16 %v657
    %v3141 = vunpack.c.l.b16 %v658
    %v3142 = vunpack.c.h.b16 %v658
    %v3143 = vunpack.c.l.b16 %v659
    %v3144 = vunpack.c.h.b16 %v659
    %v3145 = vunpack.c.l.b16 %v660
    %v3146 = vunpack.c.h.b16 %v660
    %v3147 = vunpack.c.l.b16 %v661
    %v3148 = vunpack.c.h.b16 %v661
    %v3149 = vunpack.c.l.b16 %v662
    %v3150 = vunpack.c.h.b16 %v662
    %v3151 = vunpack.c.l.b16 %v663
    %v3152 = vunpack.c.h.b16 %v663
    %v3153 = vunpack.c.l.b16 %v664
    %v3154 = vunpack.c.h.b16 %v664
    %v3155 = vunpack.c.l.b16 %v665
    %v3156 = vunpack.c.h.b16 %v665
    %v3157 = vunpack.c.l.b16 %v666
    %v3158 = vunpack.c.h.b16 %v666
    %v3159 = vunpack.c.l.b16 %v667
    %v3160 = vunpack.c.h.b16 %v667
    %v3161 = vunpack.c.l.b16 %v668
    %v3162 = vunpack.c.h.b16 %v668
    %v3163 = vunpack.c.l.b16 %v669
    %v3164 = vunpack.c.h.b16 %v669
    %v3165 = vunpack.c.l.b16 %v670
    %v3166 = vunpack.c.h.b16 %v670
    %v3167 = vunpack.c.l.b16 %v671
    %v3168 = vunpack.c.h.b16 %v671
    %v3169 = vunpack.c.l.b16 %v672
    %v3170 = vunpack.c.h.b16 %v672
    %v3171 = vunpack.c.l.b16 %v673
    %v3172 = vunpack.c.h.b16 %v673
    %v3173 = vunpack.c.l.b16 %v674
    %v3174 = vunpack.c.h.b16 %v674
    %v3175 = vunpack.c.l.b16 %v675
    %v3176 = vunpack.c.h.b16 %v675
    %v3177 = vunpack.c.l.b16 %v676
    %v3178 = vunpack.c.h.b16 %v676
    %v3179 = vunpack.c.l.b16 %v677
    %v3180 = vunpack.c.h.b16 %v677
    %v3181 = vunpack.c.l.b16 %v678
    %v3182 = vunpack.c.h.b16 %v678
    %v3183 = vunpack.c.l.b16 %v679
    %v3184 = vunpack.c.h.b16 %v679
    %v3185 = vunpack.c.l.b16 %v680
    %v3186 = vunpack.c.h.b16 %v680
    %v3187 = vunpack.c.l.b16 %v681
    %v3188 = vunpack.c.h.b16 %v681
    %v3189 = vunpack.c.l.b16 %v682
    %v3190 = vunpack.c.h.b16 %v682
    %v3191 = vunpack.c.l.b16 %v683
    %v3192 = vunpack.c.h.b16 %v683
    %v3193 = vunpack.c.l.b16 %v684
    %v3194 = vunpack.c.h.b16 %v684
    %v3195 = vunpack.c.l.b16 %v685
    %v3196 = vunpack.c.h.b16 %v685
    %v3197 = vunpack.c.l.b16 %v686
    %v3198 = vunpack.c.h.b16 %v686
    %v3199 = vunpack.c.l.b16 %v687
    %v3200 = vunpack.c.h.b16 %v687
    %v3201 = vunpack.c.l.b16 %v688
    %v3202 = vunpack.c.h.b16 %v688
    %v3203 = vunpack.c.l.b16 %v689
    %v3204 = vunpack.c.h.b16 %v689
    %v3205 = vunpack.c.l.b16 %v690
    %v3206 = vunpack.c.h.b16 %v690
    %v3207 = vunpack.c.l.b16 %v691
    %v3208 = vunpack.c.h.b16 %v691
    %v3209 = vunpack.c.l.b16 %v692
    %v3210 = vunpack.c.h.b16 %v692
    %v3211 = vunpack.c.l.b16 %v693
    %v3212 = vunpack.c.h.b16 %v693
    %v3213 = vunpack.c.l.b16 %v694
    %v3214 = vunpack.c.h.b16 %v694
    %v3215 = vunpack.c.l.b16 %v695
    %v3216 = vunpack.c.h.b16 %v695
    %v3217 = vunpack.c.l.b16 %v696
    %v3218 = vunpack.c.h.b16 %v696
    %v3219 = vunpack.c.l.b16 %v697
    %v3220 = vunpack.c.h.b16 %v697
    %v3221 = vunpack.c.l.b16 %v698
    %v3222 = vunpack.c.h.b16 %v698
    %v3223 = vunpack.c.l.b16 %v699
    %v3224 = vunpack.c.h.b16 %v699
    %v3225 = vunpack.c.l.b16 %v700
    %v3226 = vunpack.c.h.b16 %v700
    %v3227 = vunpack.c.l.b16 %v701
    %v3228 = vunpack.c.h.b16 %v701
    %v3229 = vunpack.c.l.b16 %v702
    %v3230 = vunpack.c.h.b16 %v702
    %v3231 = vunpack.c.l.b16 %v703
    %v3232 = vunpack.c.h.b16 %v703
    %v3233 = vunpack.c.l.b16 %v704
    %v3234 = vunpack.c.h.b16 %v704
    %v3235 = vunpack.c.l.b16 %v705
    %v3236 = vunpack.c.h.b16 %v705
    %v3237 = vunpack.c.l.b16 %v706
    %v3238 = vunpack.c.h.b16 %v706
    %v3239 = vunpack.c.l.b16 %v707
    %v3240 = vunpack.c.h.b16 %v707
    %v3241 = vunpack.c.l.b16 %v708
    %v3242 = vunpack.c.h.b16 %v708
    %v3243 = vunpack.c.l.b16 %v709
    %v3244 = vunpack.c.h.b16 %v709
    %v3245 = vunpack.c.l.b16 %v710
    %v3246 = vunpack.c.h.b16 %v710
    %v3247 = vunpack.c.l.b16 %v711
    %v3248 = vunpack.c.h.b16 %v711
    %v3249 = vunpack.c.l.b16 %v712
    %v3250 = vunpack.c.h.b16 %v712
    %v3251 = vunpack.c.l.b16 %v713
    %v3252 = vunpack.c.h.b16 %v713
    %v3253 = vunpack.c.l.b16 %v714
    %v3254 = vunpack.c.h.b16 %v714
    %v3255 = vunpack.c.l.b16 %v715
    %v3256 = vunpack.c.h.b16 %v715
    %v3257 = vunpack.c.l.b16 %v716
    %v3258 = vunpack.c.h.b16 %v716
    %v3259 = vunpack.c.l.b16 %v717
    %v3260 = vunpack.c.h.b16 %v717
    %v3261 = vunpack.c.l.b16 %v718
    %v3262 = vunpack.c.h.b16 %v718
    %v3263 = vunpack.c.l.b16 %v719
    %v3264 = vunpack.c.h.b16 %v719
    %v3265 = vunpack.c.l.b16 %v720
    %v3266 = vunpack.c.h.b16 %v720
    %v3267 = vunpack.c.l.b16 %v721
    %v3268 = vunpack.c.h.b16 %v721
    %v3269 = vunpack.c.l.b16 %v722
    %v3270 = vunpack.c.h.b16 %v722
    %v3271 = vunpack.c.l.b16 %v723
    %v3272 = vunpack.c.h.b16 %v723
    %v3273 = vunpack.c.l.b16 %v724
    %v3274 = vunpack.c.h.b16 %v724
    %v3275 = vunpack.c.l.b16 %v725
    %v3276 = vunpack.c.h.b16 %v725
    %v3277 = vunpack.c.l.b16 %v726
    %v3278 = vunpack.c.h.b16 %v726
    %v3279 = vunpack.c.l.b16 %v727
    %v3280 = vunpack.c.h.b16 %v727
    %v3281 = vunpack.c.l.b16 %v728
    %v3282 = vunpack.c.h.b16 %v728
    %v3283 = vunpack.c.l.b16 %v729
    %v3284 = vunpack.c.h.b16 %v729
    %v3285 = vunpack.c.l.b16 %v730
    %v3286 = vunpack.c.h.b16 %v730
    %v3287 = vunpack.c.l.b16 %v731
    %v3288 = vunpack.c.h.b16 %v731
    %v3289 = vunpack.c.l.b16 %v732
    %v3290 = vunpack.c.h.b16 %v732
    %v3291 = vunpack.c.l.b16 %v733
    %v3292 = vunpack.c.h.b16 %v733
    %v3293 = vunpack.c.l.b16 %v734
    %v3294 = vunpack.c.h.b16 %v734
    %v3295 = vunpack.c.l.b16 %v735
    %v3296 = vunpack.c.h.b16 %v735
    %v3297 = vunpack.c.l.b16 %v736
    %v3298 = vunpack.c.h.b16 %v736
    %v3299 = vunpack.c.l.b16 %v737
    %v3300 = vunpack.c.h.b16 %v737
    %v3301 = vunpack.c.l.b16 %v738
    %v3302 = vunpack.c.h.b16 %v738
    %v3303 = vunpack.c.l.b16 %v739
    %v3304 = vunpack.c.h.b16 %v739
    %v3305 = vunpack.c.l.b16 %v740
    %v3306 = vunpack.c.h.b16 %v740
    %v3307 = vunpack.c.l.b16 %v741
    %v3308 = vunpack.c.h.b16 %v741
    %v3309 = vunpack.c.l.b16 %v742
    %v3310 = vunpack.c.h.b16 %v742
    %v3311 = vunpack.c.l.b16 %v743
    %v3312 = vunpack.c.h.b16 %v743
    %v3313 = vunpack.c.l.b16 %v744
    %v3314 = vunpack.c.h.b16 %v744
    %v3315 = vunpack.c.l.b16 %v745
    %v3316 = vunpack.c.h.b16 %v745
    %v3317 = vunpack.c.l.b16 %v746
    %v3318 = vunpack.c.h.b16 %v746
    %v3319 = vunpack.c.l.b16 %v747
    %v3320 = vunpack.c.h.b16 %v747
    %v3321 = vunpack.c.l.b16 %v748
    %v3322 = vunpack.c.h.b16 %v748
    %v3323 = vunpack.c.l.b16 %v749
    %v3324 = vunpack.c.h.b16 %v749
    %v3325 = vunpack.c.l.b16 %v750
    %v3326 = vunpack.c.h.b16 %v750
    %v3327 = vunpack.c.l.b16 %v751
    %v3328 = vunpack.c.h.b16 %v751
    %v3329 = vunpack.c.l.b16 %v752
    %v3330 = vunpack.c.h.b16 %v752
    %v3331 = vunpack.c.l.b16 %v753
    %v3332 = vunpack.c.h.b16 %v753
    %v3333 = vunpack.c.l.b16 %v754
    %v3334 = vunpack.c.h.b16 %v754
    %v3335 = vunpack.c.l.b16 %v755
    %v3336 = vunpack.c.h.b16 %v755
    %v3337 = vunpack.c.l.b16 %v756
    %v3338 = vunpack.c.h.b16 %v756
    %v3339 = vunpack.c.l.b16 %v757
    %v3340 = vunpack.c.h.b16 %v757
    %v3341 = vunpack.c.l.b16 %v758
    %v3342 = vunpack.c.h.b16 %v758
    %v3343 = vunpack.c.l.b16 %v759
    %v3344 = vunpack.c.h.b16 %v759
    %v3345 = vunpack.c.l.b16 %v760
    %v3346 = vunpack.c.h.b16 %v760
    %v3347 = vunpack.c.l.b16 %v761
    %v3348 = vunpack.c.h.b16 %v761
    %v3349 = vunpack.c.l.b16 %v762
    %v3350 = vunpack.c.h.b16 %v762
    %v3351 = vunpack.c.l.b16 %v763
    %v3352 = vunpack.c.h.b16 %v763
    %v3353 = vunpack.c.l.b16 %v764
    %v3354 = vunpack.c.h.b16 %v764
    %v3355 = vunpack.c.l.b16 %v765
    %v3356 = vunpack.c.h.b16 %v765
    %v3357 = vunpack.c.l.b16 %v766
    %v3358 = vunpack.c.h.b16 %v766
    %v3359 = vunpack.c.l.b16 %v767
    %v3360 = vunpack.c.h.b16 %v767
    %v3361 = vunpack.c.l.b16 %v768
    %v3362 = vunpack.c.h.b16 %v768
    %v3363 = vunpack.c.l.b16 %v769
    %v3364 = vunpack.c.h.b16 %v769
    %v3365 = vunpack.c.l.b16 %v770
    %v3366 = vunpack.c.h.b16 %v770
    %v3367 = vunpack.c.l.b16 %v771
    %v3368 = vunpack.c.h.b16 %v771
    %v3369 = vunpack.c.l.b16 %v772
    %v3370 = vunpack.c.h.b16 %v772
    %v3371 = vunpack.c.l.b16 %v773
    %v3372 = vunpack.c.h.b16 %v773
    %v3373 = vunpack.c.l.b16 %v774
    %v3374 = vunpack.c.h.b16 %v774
    %v3375 = vunpack.c.l.b16 %v775
    %v3376 = vunpack.c.h.b16 %v775
    %v3377 = vunpack.c.l.b16 %v776
    %v3378 = vunpack.c.h.b16 %v776
    %v3379 = vunpack.c.l.b16 %v777
    %v3380 = vunpack.c.h.b16 %v777
    %v3381 = vunpack.c.l.b16 %v778
    %v3382 = vunpack.c.h.b16 %v778
    %v3383 = vunpack.c.l.b16 %v779
    %v3384 = vunpack.c.h.b16 %v779
    %v3385 = vunpack.c.l.b16 %v780
    %v3386 = vunpack.c.h.b16 %v780
    %v3387 = vunpack.c.l.b16 %v781
    %v3388 = vunpack.c.h.b16 %v781
    %v3389 = vunpack.c.l.b16 %v782
    %v3390 = vunpack.c.h.b16 %v782
    %v3391 = vunpack.c.l.b16 %v783
    %v3392 = vunpack.c.h.b16 %v783
    %v3393 = vunpack.c.l.b16 %v784
    %v3394 = vunpack.c.h.b16 %v784
    %v3395 = vunpack.c.l.b16 %v785
    %v3396 = vunpack.c.h.b16 %v785
    %v3397 = vunpack.c.l.b16 %v786
    %v3398 = vunpack.c.h.b16 %v786
    %v3399 = vunpack.c.l.b16 %v787
    %v3400 = vunpack.c.h.b16 %v787
    %v3401 = vunpack.c.l.b16 %v788
    %v3402 = vunpack.c.h.b16 %v788
    %v3403 = vunpack.c.l.b16 %v789
    %v3404 = vunpack.c.h.b16 %v789
    %v3405 = vunpack.c.l.b16 %v790
    %v3406 = vunpack.c.h.b16 %v790
    %v3407 = vunpack.c.l.b16 %v791
    %v3408 = vunpack.c.h.b16 %v791
    %v3409 = vunpack.c.l.b16 %v792
    %v3410 = vunpack.c.h.b16 %v792
    %v3411 = vunpack.c.l.b16 %v793
    %v3412 = vunpack.c.h.b16 %v793
    %v3413 = vunpack.c.l.b16 %v794
    %v3414 = vunpack.c.h.b16 %v794
    %v3415 = vunpack.c.l.b16 %v795
    %v3416 = vunpack.c.h.b16 %v795
    %v3417 = vunpack.c.l.b16 %v796
    %v3418 = vunpack.c.h.b16 %v796
    %v3419 = vunpack.c.l.b16 %v797
    %v3420 = vunpack.c.h.b16 %v797
    %v3421 = vunpack.c.l.b16 %v798
    %v3422 = vunpack.c.h.b16 %v798
    %v3423 = vunpack.c.l.b16 %v799
    %v3424 = vunpack.c.h.b16 %v799
    %v3425 = vunpack.c.l.b16 %v800
    %v3426 = vunpack.c.h.b16 %v800
    %v3427 = vunpack.c.l.b16 %v801
    %v3428 = vunpack.c.h.b16 %v801
    %v3429 = vunpack.c.l.b16 %v802
    %v3430 = vunpack.c.h.b16 %v802
    %v3431 = vunpack.c.l.b16 %v803
    %v3432 = vunpack.c.h.b16 %v803
    %v3433 = vunpack.c.l.b16 %v804
    %v3434 = vunpack.c.h.b16 %v804
    %v3435 = vunpack.c.l.b16 %v805
    %v3436 = vunpack.c.h.b16 %v805
    %v3437 = vunpack.c.l.b16 %v806
    %v3438 = vunpack.c.h.b16 %v806
    %v3439 = vunpack.c.l.b16 %v807
    %v3440 = vunpack.c.h.b16 %v807
    %v3441 = vunpack.c.l.b16 %v808
    %v3442 = vunpack.c.h.b16 %v808
    %v3443 = vunpack.c.l.b16 %v809
    %v3444 = vunpack.c.h.b16 %v809
    %v3445 = vunpack.c.l.b16 %v810
    %v3446 = vunpack.c.h.b16 %v810
    %v3447 = vunpack.c.l.b16 %v811
    %v3448 = vunpack.c.h.b16 %v811
    %v3449 = vunpack.c.l.b16 %v812
    %v3450 = vunpack.c.h.b16 %v812
    %v3451 = vunpack.c.l.b16 %v813
    %v3452 = vunpack.c.h.b16 %v813
    %v3453 = vunpack.c.l.b16 %v814
    %v3454 = vunpack.c.h.b16 %v814
    %v3455 = vunpack.c.l.b16 %v815
    %v3456 = vunpack.c.h.b16 %v815
    %v3457 = vunpack.c.l.b16 %v816
    %v3458 = vunpack.c.h.b16 %v816
    %v3459 = vunpack.c.l.b16 %v817
    %v3460 = vunpack.c.h.b16 %v817
    %v3461 = vunpack.c.l.b16 %v818
    %v3462 = vunpack.c.h.b16 %v818
    %v3463 = vunpack.c.l.b16 %v819
    %v3464 = vunpack.c.h.b16 %v819
    %v3465 = vunpack.c.l.b16 %v820
    %v3466 = vunpack.c.h.b16 %v820
    %v3467 = vunpack.c.l.b16 %v821
    %v3468 = vunpack.c.h.b16 %v821
    %v3469 = vunpack.c.l.b16 %v822
    %v3470 = vunpack.c.h.b16 %v822
    %v3471 = vunpack.c.l.b16 %v823
    %v3472 = vunpack.c.h.b16 %v823
    %v3473 = vunpack.c.l.b16 %v824
    %v3474 = vunpack.c.h.b16 %v824
    %v3475 = vunpack.c.l.b16 %v825
    %v3476 = vunpack.c.h.b16 %v825
    %v3477 = vunpack.c.l.b16 %v826
    %v3478 = vunpack.c.h.b16 %v826
    %v3479 = vunpack.c.l.b16 %v827
    %v3480 = vunpack.c.h.b16 %v827
    %v3481 = vunpack.c.l.b16 %v828
    %v3482 = vunpack.c.h.b16 %v828
    %v3483 = vunpack.c.l.b16 %v829
    %v3484 = vunpack.c.h.b16 %v829
    %v3485 = vunpack.c.l.b16 %v830
    %v3486 = vunpack.c.h.b16 %v830
    %v3487 = vunpack.c.l.b16 %v831
    %v3488 = vunpack.c.h.b16 %v831
    %v3489 = vunpack.c.l.b16 %v832
    %v3490 = vunpack.c.h.b16 %v832
    %v3491 = vunpack.c.l.b16 %v833
    %v3492 = vunpack.c.h.b16 %v833
    %v3493 = vunpack.c.l.b16 %v834
    %v3494 = vunpack.c.h.b16 %v834
    %v3495 = vunpack.c.l.b16 %v835
    %v3496 = vunpack.c.h.b16 %v835
    %v3497 = vunpack.c.l.b16 %v836
    %v3498 = vunpack.c.h.b16 %v836
    %v3499 = vunpack.c.l.b16 %v837
    %v3500 = vunpack.c.h.b16 %v837
    %v3501 = vunpack.c.l.b16 %v838
    %v3502 = vunpack.c.h.b16 %v838
    %v3503 = vunpack.c.l.b16 %v839
    %v3504 = vunpack.c.h.b16 %v839
    %v3505 = vunpack.c.l.b16 %v840
    %v3506 = vunpack.c.h.b16 %v840
    %v3507 = vunpack.c.l.b16 %v841
    %v3508 = vunpack.c.h.b16 %v841
    %v3509 = vunpack.c.l.b16 %v842
    %v3510 = vunpack.c.h.b16 %v842
    %v3511 = vunpack.c.l.b16 %v843
    %v3512 = vunpack.c.h.b16 %v843
    %v3513 = vunpack.c.l.b16 %v844
    %v3514 = vunpack.c.h.b16 %v844
    %v3515 = vunpack.c.l.b16 %v845
    %v3516 = vunpack.c.h.b16 %v845
    %v3517 = vunpack.c.l.b16 %v846
    %v3518 = vunpack.c.h.b16 %v846
    %v3519 = vunpack.c.l.b16 %v847
    %v3520 = vunpack.c.h.b16 %v847
    %v3521 = vunpack.c.l.b16 %v848
    %v3522 = vunpack.c.h.b16 %v848
    %v3523 = vunpack.c.l.b16 %v849
    %v3524 = vunpack.c.h.b16 %v849
    %v3525 = vunpack.c.l.b16 %v850
    %v3526 = vunpack.c.h.b16 %v850
    %v3527 = vunpack.c.l.b16 %v851
    %v3528 = vunpack.c.h.b16 %v851
    %v3529 = vunpack.c.l.b16 %v852
    %v3530 = vunpack.c.h.b16 %v852
    %v3531 = vunpack.c.l.b16 %v853
    %v3532 = vunpack.c.h.b16 %v853
    %v3533 = vunpack.c.l.b16 %v854
    %v3534 = vunpack.c.h.b16 %v854
    %v3535 = vunpack.c.l.b16 %v855
    %v3536 = vunpack.c.h.b16 %v855
    %v3537 = vunpack.c.l.b16 %v856
    %v3538 = vunpack.c.h.b16 %v856
    %v3539 = vunpack.c.l.b16 %v857
    %v3540 = vunpack.c.h.b16 %v857
    %v3541 = vunpack.c.l.b16 %v858
    %v3542 = vunpack.c.h.b16 %v858
    %v3543 = vunpack.c.l.b16 %v859
    %v3544 = vunpack.c.h.b16 %v859
    %v3545 = vunpack.c.l.b16 %v860
    %v3546 = vunpack.c.h.b16 %v860
    %v3547 = vunpack.c.l.b16 %v861
    %v3548 = vunpack.c.h.b16 %v861
    %v3549 = vunpack.c.l.b16 %v862
    %v3550 = vunpack.c.h.b16 %v862
    %v3551 = vunpack.c.l.b16 %v863
    %v3552 = vunpack.c.h.b16 %v863
    %v3553 = vunpack.c.l.b16 %v864
    %v3554 = vunpack.c.h.b16 %v864
    %v3555 = vunpack.c.l.b16 %v865
    %v3556 = vunpack.c.h.b16 %v865
    %v3557 = vunpack.c.l.b16 %v866
    %v3558 = vunpack.c.h.b16 %v866
    %v3559 = vunpack.c.l.b16 %v867
    %v3560 = vunpack.c.h.b16 %v867
    %v3561 = vunpack.c.l.b16 %v868
    %v3562 = vunpack.c.h.b16 %v868
    %v3563 = vunpack.c.l.b16 %v869
    %v3564 = vunpack.c.h.b16 %v869
    %v3565 = vunpack.c.l.b16 %v870
    %v3566 = vunpack.c.h.b16 %v870
    %v3567 = vunpack.c.l.b16 %v871
    %v3568 = vunpack.c.h.b16 %v871
    %v3569 = vunpack.c.l.b16 %v872
    %v3570 = vunpack.c.h.b16 %v872
    %v3571 = vunpack.c.l.b16 %v873
    %v3572 = vunpack.c.h.b16 %v873
    %v3573 = vunpack.c.l.b16 %v874
    %v3574 = vunpack.c.h.b16 %v874
    %v3575 = vunpack.c.l.b16 %v875
    %v3576 = vunpack.c.h.b16 %v875
    %v3577 = vunpack.c.l.b16 %v876
    %v3578 = vunpack.c.h.b16 %v876
    %v3579 = vunpack.c.l.b16 %v877
    %v3580 = vunpack.c.h.b16 %v877
    %v3581 = vunpack.c.l.b16 %v878
    %v3582 = vunpack.c.h.b16 %v878
    %v3583 = vunpack.c.l.b16 %v879
    %v3584 = vunpack.c.h.b16 %v879
    %v3585 = vunpack.c.l.b16 %v880
    %v3586 = vunpack.c.h.b16 %v880
    %v3587 = vunpack.c.l.b16 %v881
    %v3588 = vunpack.c.h.b16 %v881
    %v3589 = vunpack.c.l.b16 %v882
    %v3590 = vunpack.c.h.b16 %v882
    %v3591 = vunpack.c.l.b16 %v883
    %v3592 = vunpack.c.h.b16 %v883
    %v3593 = vunpack.c.l.b16 %v884
    %v3594 = vunpack.c.h.b16 %v884
    %v3595 = vunpack.c.l.b16 %v885
    %v3596 = vunpack.c.h.b16 %v885
    %v3597 = vunpack.c.l.b16 %v886
    %v3598 = vunpack.c.h.b16 %v886
    %v3599 = vunpack.c.l.b16 %v887
    %v3600 = vunpack.c.h.b16 %v887
    %v3601 = vunpack.c.l.b16 %v888
    %v3602 = vunpack.c.h.b16 %v888
    %v3603 = vunpack.c.l.b16 %v889
    %v3604 = vunpack.c.h.b16 %v889
    %v3605 = vunpack.c.l.b16 %v890
    %v3606 = vunpack.c.h.b16 %v890
    %v3607 = vunpack.c.l.b16 %v891
    %v3608 = vunpack.c.h.b16 %v891
    %v3609 = vunpack.c.l.b16 %v892
    %v3610 = vunpack.c.h.b16 %v892
    %v3611 = vunpack.c.l.b16 %v893
    %v3612 = vunpack.c.h.b16 %v893
    %v3613 = vunpack.c.l.b16 %v894
    %v3614 = vunpack.c.h.b16 %v894
    %v3615 = vunpack.c.l.b16 %v895
    %v3616 = vunpack.c.h.b16 %v895
    %v3617 = vunpack.c.l.b16 %v896
    %v3618 = vunpack.c.h.b16 %v896
    %v3619 = vunpack.c.l.b16 %v897
    %v3620 = vunpack.c.h.b16 %v897
    %v3621 = vunpack.c.l.b16 %v898
    %v3622 = vunpack.c.h.b16 %v898
    %v3623 = vunpack.c.l.b16 %v899
    %v3624 = vunpack.c.h.b16 %v899
    %v3625 = vunpack.c.l.b16 %v900
    %v3626 = vunpack.c.h.b16 %v900
    %v3627 = vunpack.c.l.b16 %v901
    %v3628 = vunpack.c.h.b16 %v901
    %v3629 = vunpack.c.l.b16 %v902
    %v3630 = vunpack.c.h.b16 %v902
    %v3631 = vunpack.c.l.b16 %v903
    %v3632 = vunpack.c.h.b16 %v903
    %v3633 = vunpack.c.l.b16 %v904
    %v3634 = vunpack.c.h.b16 %v904
    %v3635 = vunpack.c.l.b16 %v905
    %v3636 = vunpack.c.h.b16 %v905
    %v3637 = vunpack.c.l.b16 %v906
    %v3638 = vunpack.c.h.b16 %v906
    %v3639 = vunpack.c.l.b16 %v907
    %v3640 = vunpack.c.h.b16 %v907
    %v3641 = vunpack.c.l.b16 %v908
    %v3642 = vunpack.c.h.b16 %v908
    %v3643 = vunpack.c.l.b16 %v909
    %v3644 = vunpack.c.h.b16 %v909
    %v3645 = vunpack.c.l.b16 %v910
    %v3646 = vunpack.c.h.b16 %v910
    %v3647 = vunpack.c.l.b16 %v911
    %v3648 = vunpack.c.h.b16 %v911
    %v3649 = vunpack.c.l.b16 %v912
    %v3650 = vunpack.c.h.b16 %v912
    %v3651 = vunpack.c.l.b16 %v913
    %v3652 = vunpack.c.h.b16 %v913
    %v3653 = vunpack.c.l.b16 %v914
    %v3654 = vunpack.c.h.b16 %v914
    %v3655 = vunpack.c.l.b16 %v915
    %v3656 = vunpack.c.h.b16 %v915
    %v3657 = vunpack.c.l.b16 %v916
    %v3658 = vunpack.c.h.b16 %v916
    %v3659 = vunpack.c.l.b16 %v917
    %v3660 = vunpack.c.h.b16 %v917
    %v3661 = vunpack.c.l.b16 %v918
    %v3662 = vunpack.c.h.b16 %v918
    %v3663 = vunpack.c.l.b16 %v919
    %v3664 = vunpack.c.h.b16 %v919
    %v3665 = vunpack.c.l.b16 %v920
    %v3666 = vunpack.c.h.b16 %v920
    %v3667 = vunpack.c.l.b16 %v921
    %v3668 = vunpack.c.h.b16 %v921
    %v3669 = vunpack.c.l.b16 %v922
    %v3670 = vunpack.c.h.b16 %v922
    %v3671 = vunpack.c.l.b16 %v923
    %v3672 = vunpack.c.h.b16 %v923
    %v3673 = vunpack.c.l.b16 %v924
    %v3674 = vunpack.c.h.b16 %v924
    %v3675 = vunpack.c.l.b16 %v925
    %v3676 = vunpack.c.h.b16 %v925
    %v3677 = vunpack.c.l.b16 %v926
    %v3678 = vunpack.c.h.b16 %v926
    %v3679 = vunpack.c.l.b16 %v927
    %v3680 = vunpack.c.h.b16 %v927
    %v3681 = vunpack.c.l.b16 %v928
    %v3682 = vunpack.c.h.b16 %v928
    %v3683 = vunpack.c.l.b16 %v929
    %v3684 = vunpack.c.h.b16 %v929
    %v3685 = vunpack.c.l.b16 %v930
    %v3686 = vunpack.c.h.b16 %v930
    %v3687 = vunpack.c.l.b16 %v931
    %v3688 = vunpack.c.h.b16 %v931
    %v3689 = vunpack.c.l.b16 %v932
    %v3690 = vunpack.c.h.b16 %v932
    %v3691 = vunpack.c.l.b16 %v933
    %v3692 = vunpack.c.h.b16 %v933
    %v3693 = vunpack.c.l.b16 %v934
    %v3694 = vunpack.c.h.b16 %v934
    %v3695 = vunpack.c.l.b16 %v935
    %v3696 = vunpack.c.h.b16 %v935
    %v3697 = vunpack.c.l.b16 %v936
    %v3698 = vunpack.c.h.b16 %v936
    %v3699 = vunpack.c.l.b16 %v937
    %v3700 = vunpack.c.h.b16 %v937
    %v3701 = vunpack.c.l.b16 %v938
    %v3702 = vunpack.c.h.b16 %v938
    %v3703 = vunpack.c.l.b16 %v939
    %v3704 = vunpack.c.h.b16 %v939
    %v3705 = vunpack.c.l.b16 %v940
    %v3706 = vunpack.c.h.b16 %v940
    %v3707 = vunpack.c.l.b16 %v941
    %v3708 = vunpack.c.h.b16 %v941
    %v3709 = vunpack.c.l.b16 %v942
    %v3710 = vunpack.c.h.b16 %v942
    %v3711 = vunpack.c.l.b16 %v943
    %v3712 = vunpack.c.h.b16 %v943
    %v3713 = vunpack.c.l.b16 %v944
    %v3714 = vunpack.c.h.b16 %v944
    %v3715 = vunpack.c.l.b16 %v945
    %v3716 = vunpack.c.h.b16 %v945
    %v3717 = vunpack.c.l.b16 %v946
    %v3718 = vunpack.c.h.b16 %v946
    %v3719 = vunpack.c.l.b16 %v947
    %v3720 = vunpack.c.h.b16 %v947
    %v3721 = vunpack.c.l.b16 %v948
    %v3722 = vunpack.c.h.b16 %v948
    %v3723 = vunpack.c.l.b16 %v949
    %v3724 = vunpack.c.h.b16 %v949
    %v3725 = vunpack.c.l.b16 %v950
    %v3726 = vunpack.c.h.b16 %v950
    %v3727 = vunpack.c.l.b16 %v951
    %v3728 = vunpack.c.h.b16 %v951
    %v3729 = vunpack.c.l.b16 %v952
    %v3730 = vunpack.c.h.b16 %v952
    %v3731 = vunpack.c.l.b16 %v953
    %v3732 = vunpack.c.h.b16 %v953
    %v3733 = vunpack.c.l.b16 %v954
    %v3734 = vunpack.c.h.b16 %v954
    %v3735 = vunpack.c.l.b16 %v955
    %v3736 = vunpack.c.h.b16 %v955
    %v3737 = vunpack.c.l.b16 %v956
    %v3738 = vunpack.c.h.b16 %v956
    %v3739 = vunpack.c.l.b16 %v957
    %v3740 = vunpack.c.h.b16 %v957
    %v3741 = vunpack.c.l.b16 %v958
    %v3742 = vunpack.c.h.b16 %v958
    %v3743 = vunpack.c.l.b16 %v959
    %v3744 = vunpack.c.h.b16 %v959
    %v3745 = vunpack.c.l.b16 %v960
    %v3746 = vunpack.c.h.b16 %v960
    %v3747 = vunpack.c.l.b16 %v961
    %v3748 = vunpack.c.h.b16 %v961
    %v3749 = vunpack.c.l.b16 %v962
    %v3750 = vunpack.c.h.b16 %v962
    %v3751 = vunpack.c.l.b16 %v963
    %v3752 = vunpack.c.h.b16 %v963
    %v3753 = vunpack.c.l.b16 %v964
    %v3754 = vunpack.c.h.b16 %v964
    %v3755 = vunpack.c.l.b16 %v965
    %v3756 = vunpack.c.h.b16 %v965
    %v3757 = vunpack.c.l.b16 %v966
    %v3758 = vunpack.c.h.b16 %v966
    %v3759 = vunpack.c.l.b16 %v967
    %v3760 = vunpack.c.h.b16 %v967
    %v3761 = vunpack.c.l.b16 %v968
    %v3762 = vunpack.c.h.b16 %v968
    %v3763 = vunpack.c.l.b16 %v969
    %v3764 = vunpack.c.h.b16 %v969
    %v3765 = vunpack.c.l.b16 %v970
    %v3766 = vunpack.c.h.b16 %v970
    %v3767 = vunpack.c.l.b16 %v971
    %v3768 = vunpack.c.h.b16 %v971
    %v3769 = vunpack.c.l.b16 %v972
    %v3770 = vunpack.c.h.b16 %v972
    %v3771 = vunpack.c.l.b16 %v973
    %v3772 = vunpack.c.h.b16 %v973
    %v3773 = vunpack.c.l.b16 %v974
    %v3774 = vunpack.c.h.b16 %v974
    %v3775 = vunpack.c.l.b16 %v975
    %v3776 = vunpack.c.h.b16 %v975
    %v3777 = vunpack.c.l.b16 %v976
    %v3778 = vunpack.c.h.b16 %v976
    %v3779 = vunpack.c.l.b16 %v977
    %v3780 = vunpack.c.h.b16 %v977
    %v3781 = vunpack.c.l.b16 %v978
    %v3782 = vunpack.c.h.b16 %v978
    %v3783 = vunpack.c.l.b16 %v979
    %v3784 = vunpack.c.h.b16 %v979
    %v3785 = vunpack.c.l.b16 %v980
    %v3786 = vunpack.c.h.b16 %v980
    %v3787 = vunpack.c.l.b16 %v981
    %v3788 = vunpack.c.h.b16 %v981
    %v3789 = vunpack.c.l.b16 %v982
    %v3790 = vunpack.c.h.b16 %v982
    %v3791 = vunpack.c.l.b16 %v983
    %v3792 = vunpack.c.h.b16 %v983
    %v3793 = vunpack.c.l.b16 %v984
    %v3794 = vunpack.c.h.b16 %v984
    %v3795 = vunpack.c.l.b16 %v985
    %v3796 = vunpack.c.h.b16 %v985
    %v3797 = vunpack.c.l.b16 %v986
    %v3798 = vunpack.c.h.b16 %v986
    %v3799 = vunpack.c.l.b16 %v987
    %v3800 = vunpack.c.h.b16 %v987
    %v3801 = vunpack.c.l.b16 %v988
    %v3802 = vunpack.c.h.b16 %v988
    %v3803 = vunpack.c.l.b16 %v989
    %v3804 = vunpack.c.h.b16 %v989
    %v3805 = vunpack.c.l.b16 %v990
    %v3806 = vunpack.c.h.b16 %v990
    %v3807 = vunpack.c.l.b16 %v991
    %v3808 = vunpack.c.h.b16 %v991
    %v3809 = vunpack.c.l.b16 %v992
    %v3810 = vunpack.c.h.b16 %v992
    %v3811 = vunpack.c.l.b16 %v993
    %v3812 = vunpack.c.h.b16 %v993
    %v3813 = vunpack.c.l.b16 %v994
    %v3814 = vunpack.c.h.b16 %v994
    %v3815 = vunpack.c.l.b16 %v995
    %v3816 = vunpack.c.h.b16 %v995
    %v3817 = vunpack.c.l.b16 %v996
    %v3818 = vunpack.c.h.b16 %v996
    %v3819 = vunpack.c.l.b16 %v997
    %v3820 = vunpack.c.h.b16 %v997
    %v3821 = vunpack.c.l.b16 %v998
    %v3822 = vunpack.c.h.b16 %v998
    %v3823 = vunpack.c.l.b16 %v999
    %v3824 = vunpack.c.h.b16 %v999
    %v3825 = vunpack.c.l.b16 %v1000
    %v3826 = vunpack.c.h.b16 %v1000
    %v3827 = vunpack.c.l.b16 %v1001
    %v3828 = vunpack.c.h.b16 %v1001
    %v3829 = vunpack.c.l.b16 %v1002
    %v3830 = vunpack.c.h.b16 %v1002
    %v3831 = vunpack.c.l.b16 %v1003
    %v3832 = vunpack.c.h.b16 %v1003
    %v3833 = vunpack.c.l.b16 %v1004
    %v3834 = vunpack.c.h.b16 %v1004
    %v3835 = vunpack.c.l.b16 %v1005
    %v3836 = vunpack.c.h.b16 %v1005
    %v3837 = vunpack.c.l.b16 %v1006
    %v3838 = vunpack.c.h.b16 %v1006
    %v3839 = vunpack.c.l.b16 %v1007
    %v3840 = vunpack.c.h.b16 %v1007
    %v3841 = vunpack.c.l.b16 %v1008
    %v3842 = vunpack.c.h.b16 %v1008
    %v3843 = vunpack.c.l.b16 %v1009
    %v3844 = vunpack.c.h.b16 %v1009
    %v3845 = vunpack.c.l.b16 %v1010
    %v3846 = vunpack.c.h.b16 %v1010
    %v3847 = vunpack.c.l.b16 %v1011
    %v3848 = vunpack.c.h.b16 %v1011
    %v3849 = vunpack.c.l.b16 %v1012
    %v3850 = vunpack.c.h.b16 %v1012
    %v3851 = vunpack.c.l.b16 %v1013
    %v3852 = vunpack.c.h.b16 %v1013
    %v3853 = vunpack.c.l.b16 %v1014
    %v3854 = vunpack.c.h.b16 %v1014
    %v3855 = vunpack.c.l.b16 %v1015
    %v3856 = vunpack.c.h.b16 %v1015
    %v3857 = vunpack.c.l.b16 %v1016
    %v3858 = vunpack.c.h.b16 %v1016
    %v3859 = vunpack.c.l.b16 %v1017
    %v3860 = vunpack.c.h.b16 %v1017
    %v3861 = vunpack.c.l.b16 %v1018
    %v3862 = vunpack.c.h.b16 %v1018
    %v3863 = vunpack.c.l.b16 %v1019
    %v3864 = vunpack.c.h.b16 %v1019
    %v3865 = vunpack.c.l.b16 %v1020
    %v3866 = vunpack.c.h.b16 %v1020
    %v3867 = vunpack.c.l.b16 %v1021
    %v3868 = vunpack.c.h.b16 %v1021
    %v3869 = vunpack.c.l.b16 %v1022
    %v3870 = vunpack.c.h.b16 %v1022
    %v3871 = vunpack.c.l.b16 %v1023
    %v3872 = vunpack.c.h.b16 %v1023
    %v3873 = vunpack.c.l.b16 %v1024
    %v3874 = vunpack.c.h.b16 %v1024
    %v3875 = vunpack.c.l.b16 %v1025
    %v3876 = vunpack.c.h.b16 %v1025
    %v3877 = vunpack.c.l.b16 %v1026
    %v3878 = vunpack.c.h.b16 %v1026
    %v3879 = vunpack.c.l.b16 %v1027
    %v3880 = vunpack.c.h.b16 %v1027
    %v3881 = vunpack.c.l.b16 %v1028
    %v3882 = vunpack.c.h.b16 %v1028
    %v3883 = vunpack.c.l.b16 %v1029
    %v3884 = vunpack.c.h.b16 %v1029
    %v3885 = vunpack.c.l.b16 %v1030
    %v3886 = vunpack.c.h.b16 %v1030
    %v3887 = vunpack.c.l.b16 %v1031
    %v3888 = vunpack.c.h.b16 %v1031
    %v3889 = vunpack.c.l.b16 %v1032
    %v3890 = vunpack.c.h.b16 %v1032
    %v3891 = vunpack.c.l.b16 %v1033
    %v3892 = vunpack.c.h.b16 %v1033
    %v3893 = vunpack.c.l.b16 %v1034
    %v3894 = vunpack.c.h.b16 %v1034
    %v3895 = vunpack.c.l.b16 %v1035
    %v3896 = vunpack.c.h.b16 %v1035
    %v3897 = vunpack.c.l.b16 %v1036
    %v3898 = vunpack.c.h.b16 %v1036
    %v3899 = vunpack.c.l.b16 %v1037
    %v3900 = vunpack.c.h.b16 %v1037
    %v3901 = vunpack.c.l.b16 %v1038
    %v3902 = vunpack.c.h.b16 %v1038
    %v3903 = vunpack.c.l.b16 %v1039
    %v3904 = vunpack.c.h.b16 %v1039
    %v3905 = vunpack.c.l.b16 %v1040
    %v3906 = vunpack.c.h.b16 %v1040
    %v3907 = vunpack.c.l.b16 %v1041
    %v3908 = vunpack.c.h.b16 %v1041
    %v3909 = vunpack.c.l.b16 %v1042
    %v3910 = vunpack.c.h.b16 %v1042
    %v3911 = vunpack.c.l.b16 %v1043
    %v3912 = vunpack.c.h.b16 %v1043
    %v3913 = vunpack.c.l.b16 %v1044
    %v3914 = vunpack.c.h.b16 %v1044
    %v3915 = vunpack.c.l.b16 %v1045
    %v3916 = vunpack.c.h.b16 %v1045
    %v3917 = vunpack.c.l.b16 %v1046
    %v3918 = vunpack.c.h.b16 %v1046
    %v3919 = vunpack.c.l.b16 %v1047
    %v3920 = vunpack.c.h.b16 %v1047
    %v3921 = vunpack.c.l.b16 %v1048
    %v3922 = vunpack.c.h.b16 %v1048
    %v3923 = vunpack.c.l.b16 %v1049
    %v3924 = vunpack.c.h.b16 %v1049
    %v3925 = vunpack.c.l.b16 %v1050
    %v3926 = vunpack.c.h.b16 %v1050
    %v3927 = vunpack.c.l.b16 %v1051
    %v3928 = vunpack.c.h.b16 %v1051
    %v3929 = vunpack.c.l.b16 %v1052
    %v3930 = vunpack.c.h.b16 %v1052
    %v3931 = vunpack.c.l.b16 %v1053
    %v3932 = vunpack.c.h.b16 %v1053
    %v3933 = vunpack.c.l.b16 %v1054
    %v3934 = vunpack.c.h.b16 %v1054
    %v3935 = vunpack.c.l.b16 %v1055
    %v3936 = vunpack.c.h.b16 %v1055
    %v3937 = vunpack.c.l.b16 %v1056
    %v3938 = vunpack.c.h.b16 %v1056
    %v3939 = vunpack.c.l.b16 %v1057
    %v3940 = vunpack.c.h.b16 %v1057
    %v3941 = vunpack.c.l.b16 %v1058
    %v3942 = vunpack.c.h.b16 %v1058
    %v3943 = vunpack.c.l.b16 %v1059
    %v3944 = vunpack.c.h.b16 %v1059
    %v3945 = vunpack.c.l.b16 %v1060
    %v3946 = vunpack.c.h.b16 %v1060
    %v3947 = vunpack.c.l.b16 %v1061
    %v3948 = vunpack.c.h.b16 %v1061
    %v3949 = vunpack.c.l.b16 %v1062
    %v3950 = vunpack.c.h.b16 %v1062
    %v3951 = vunpack.c.l.b16 %v1063
    %v3952 = vunpack.c.h.b16 %v1063
    %v3953 = vunpack.c.l.b16 %v1064
    %v3954 = vunpack.c.h.b16 %v1064
    %v3955 = vunpack.c.l.b16 %v1065
    %v3956 = vunpack.c.h.b16 %v1065
    %v3957 = vunpack.c.l.b16 %v1066
    %v3958 = vunpack.c.h.b16 %v1066
    %v3959 = vunpack.c.l.b16 %v1067
    %v3960 = vunpack.c.h.b16 %v1067
    %v3961 = vunpack.c.l.b16 %v1068
    %v3962 = vunpack.c.h.b16 %v1068
    %v3963 = vunpack.c.l.b16 %v1069
    %v3964 = vunpack.c.h.b16 %v1069
    %v3965 = vunpack.c.l.b16 %v1070
    %v3966 = vunpack.c.h.b16 %v1070
    %v3967 = vpack.c.b16 %v2115, %v2111
    %v3968 = vpack.c.b16 %v2116, %v2112
    %v3969 = vpack.c.b16 %v2117, %v2113
    %v3970 = vpack.c.b16 %v2118, %v2114
    %v3971 = vpack.c.b16 %v2123, %v2119
    %v3972 = vpack.c.b16 %v2124, %v2120
    %v3973 = vpack.c.b16 %v2125, %v2121
    %v3974 = vpack.c.b16 %v2126, %v2122
    %v3975 = vpack.c.b16 %v2131, %v2127
    %v3976 = vpack.c.b16 %v2132, %v2128
    %v3977 = vpack.c.b16 %v2133, %v2129
    %v3978 = vpack.c.b16 %v2134, %v2130
    %v3979 = vpack.c.b16 %v2139, %v2135
    %v3980 = vpack.c.b16 %v2140, %v2136
    %v3981 = vpack.c.b16 %v2141, %v2137
    %v3982 = vpack.c.b16 %v2142, %v2138
    %v3983 = vpack.c.b16 %v2147, %v2143
    %v3984 = vpack.c.b16 %v2148, %v2144
    %v3985 = vpack.c.b16 %v2149, %v2145
    %v3986 = vpack.c.b16 %v2150, %v2146
    %v3987 = vpack.c.b16 %v2155, %v2151
    %v3988 = vpack.c.b16 %v2156, %v2152
    %v3989 = vpack.c.b16 %v2157, %v2153
    %v3990 = vpack.c.b16 %v2158, %v2154
    %v3991 = vpack.c.b16 %v2163, %v2159
    %v3992 = vpack.c.b16 %v2164, %v2160
    %v3993 = vpack.c.b16 %v2165, %v2161
    %v3994 = vpack.c.b16 %v2166, %v2162
    %v3995 = vpack.c.b16 %v2171, %v2167
    %v3996 = vpack.c.b16 %v2172, %v2168
    %v3997 = vpack.c.b16 %v2173, %v2169
    %v3998 = vpack.c.b16 %v2174, %v2170
    %v3999 = vpack.c.b16 %v2179, %v2175
    %v4000 = vpack.c.b16 %v2180, %v2176
    %v4001 = vpack.c.b16 %v2181, %v2177
    %v4002 = vpack.c.b16 %v2182, %v2178
    %v4003 = vpack.c.b16 %v2187, %v2183
    %v4004 = vpack.c.b16 %v2188, %v2184
    %v4005 = vpack.c.b16 %v2189, %v2185
    %v4006 = vpack.c.b16 %v2190, %v2186
    %v4007 = vpack.c.b16 %v2195, %v2191
    %v4008 = vpack.c.b16 %v2196, %v2192
    %v4009 = vpack.c.b16 %v2197, %v2193
    %v4010 = vpack.c.b16 %v2198, %v2194
    %v4011 = vpack.c.b16 %v2203, %v2199
    %v4012 = vpack.c.b16 %v2204, %v2200
    %v4013 = vpack.c.b16 %v2205, %v2201
    %v4014 = vpack.c.b16 %v2206, %v2202
    %v4015 = vpack.c.b16 %v2211, %v2207
    %v4016 = vpack.c.b16 %v2212, %v2208
    %v4017 = vpack.c.b16 %v2213, %v2209
    %v4018 = vpack.c.b16 %v2214, %v2210
    %v4019 = vpack.c.b16 %v2219, %v2215
    %v4020 = vpack.c.b16 %v2220, %v2216
    %v4021 = vpack.c.b16 %v2221, %v2217
    %v4022 = vpack.c.b16 %v2222, %v2218
    %v4023 = vpack.c.b16 %v2227, %v2223
    %v4024 = vpack.c.b16 %v2228, %v2224
    %v4025 = vpack.c.b16 %v2229, %v2225
    %v4026 = vpack.c.b16 %v2230, %v2226
    %v4027 = vpack.c.b16 %v2235, %v2231
    %v4028 = vpack.c.b16 %v2236, %v2232
    %v4029 = vpack.c.b16 %v2237, %v2233
    %v4030 = vpack.c.b16 %v2238, %v2234
    %v4031 = vpack.c.b16 %v2243, %v2239
    %v4032 = vpack.c.b16 %v2244, %v2240
    %v4033 = vpack.c.b16 %v2245, %v2241
    %v4034 = vpack.c.b16 %v2246, %v2242
    %v4035 = vpack.c.b16 %v2251, %v2247
    %v4036 = vpack.c.b16 %v2252, %v2248
    %v4037 = vpack.c.b16 %v2253, %v2249
    %v4038 = vpack.c.b16 %v2254, %v2250
    %v4039 = vpack.c.b16 %v2259, %v2255
    %v4040 = vpack.c.b16 %v2260, %v2256
    %v4041 = vpack.c.b16 %v2261, %v2257
    %v4042 = vpack.c.b16 %v2262, %v2258
    %v4043 = vpack.c.b16 %v2267, %v2263
    %v4044 = vpack.c.b16 %v2268, %v2264
    %v4045 = vpack.c.b16 %v2269, %v2265
    %v4046 = vpack.c.b16 %v2270, %v2266
    %v4047 = vpack.c.b16 %v2275, %v2271
    %v4048 = vpack.c.b16 %v2276, %v2272
    %v4049 = vpack.c.b16 %v2277, %v2273
    %v4050 = vpack.c.b16 %v2278, %v2274
    %v4051 = vpack.c.b16 %v2283, %v2279
    %v4052 = vpack.c.b16 %v2284, %v2280
    %v4053 = vpack.c.b16 %v2285, %v2281
    %v4054 = vpack.c.b16 %v2286, %v2282
    %v4055 = vpack.c.b16 %v2291, %v2287
    %v4056 = vpack.c.b16 %v2292, %v2288
    %v4057 = vpack.c.b16 %v2293, %v2289
    %v4058 = vpack.c.b16 %v2294, %v2290
    %v4059 = vpack.c.b16 %v2299, %v2295
    %v4060 = vpack.c.b16 %v2300, %v2296
    %v4061 = vpack.c.b16 %v2301, %v2297
    %v4062 = vpack.c.b16 %v2302, %v2298
    %v4063 = vpack.c.b16 %v2307, %v2303
    %v4064 = vpack.c.b16 %v2308, %v2304
    %v4065 = vpack.c.b16 %v2309, %v2305
    %v4066 = vpack.c.b16 %v2310, %v2306
    %v4067 = vpack.c.b16 %v2315, %v2311
    %v4068 = vpack.c.b16 %v2316, %v2312
    %v4069 = vpack.c.b16 %v2317, %v2313
    %v4070 = vpack.c.b16 %v2318, %v2314
    %v4071 = vpack.c.b16 %v2323, %v2319
    %v4072 = vpack.c.b16 %v2324, %v2320
    %v4073 = vpack.c.b16 %v2325, %v2321
    %v4074 = vpack.c.b16 %v2326, %v2322
    %v4075 = vpack.c.b16 %v2331, %v2327
    %v4076 = vpack.c.b16 %v2332, %v2328
    %v4077 = vpack.c.b16 %v2333, %v2329
    %v4078 = vpack.c.b16 %v2334, %v2330
    %v4079 = vpack.c.b16 %v2339, %v2335
    %v4080 = vpack.c.b16 %v2340, %v2336
    %v4081 = vpack.c.b16 %v2341, %v2337
    %v4082 = vpack.c.b16 %v2342, %v2338
    %v4083 = vpack.c.b16 %v2347, %v2343
    %v4084 = vpack.c.b16 %v2348, %v2344
    %v4085 = vpack.c.b16 %v2349, %v2345
    %v4086 = vpack.c.b16 %v2350, %v2346
    %v4087 = vpack.c.b16 %v2355, %v2351
    %v4088 = vpack.c.b16 %v2356, %v2352
    %v4089 = vpack.c.b16 %v2357, %v2353
    %v4090 = vpack.c.b16 %v2358, %v2354
    %v4091 = vpack.c.b16 %v2363, %v2359
    %v4092 = vpack.c.b16 %v2364, %v2360
    %v4093 = vpack.c.b16 %v2365, %v2361
    %v4094 = vpack.c.b16 %v2366, %v2362
    %v4095 = vpack.c.b16 %v2371, %v2367
    %v4096 = vpack.c.b16 %v2372, %v2368
    %v4097 = vpack.c.b16 %v2373, %v2369
    %v4098 = vpack.c.b16 %v2374, %v2370
    %v4099 = vpack.c.b16 %v2379, %v2375
    %v4100 = vpack.c.b16 %v2380, %v2376
    %v4101 = vpack.c.b16 %v2381, %v2377
    %v4102 = vpack.c.b16 %v2382, %v2378
    %v4103 = vpack.c.b16 %v2387, %v2383
    %v4104 = vpack.c.b16 %v2388, %v2384
    %v4105 = vpack.c.b16 %v2389, %v2385
    %v4106 = vpack.c.b16 %v2390, %v2386
    %v4107 = vpack.c.b16 %v2395, %v2391
    %v4108 = vpack.c.b16 %v2396, %v2392
    %v4109 = vpack.c.b16 %v2397, %v2393
    %v4110 = vpack.c.b16 %v2398, %v2394
    %v4111 = vpack.c.b16 %v2403, %v2399
    %v4112 = vpack.c.b16 %v2404, %v2400
    %v4113 = vpack.c.b16 %v2405, %v2401
    %v4114 = vpack.c.b16 %v2406, %v2402
    %v4115 = vpack.c.b16 %v2411, %v2407
    %v4116 = vpack.c.b16 %v2412, %v2408
    %v4117 = vpack.c.b16 %v2413, %v2409
    %v4118 = vpack.c.b16 %v2414, %v2410
    %v4119 = vpack.c.b16 %v2419, %v2415
    %v4120 = vpack.c.b16 %v2420, %v2416
    %v4121 = vpack.c.b16 %v2421, %v2417
    %v4122 = vpack.c.b16 %v2422, %v2418
    %v4123 = vpack.c.b16 %v2427, %v2423
    %v4124 = vpack.c.b16 %v2428, %v2424
    %v4125 = vpack.c.b16 %v2429, %v2425
    %v4126 = vpack.c.b16 %v2430, %v2426
    %v4127 = vpack.c.b16 %v2435, %v2431
    %v4128 = vpack.c.b16 %v2436, %v2432
    %v4129 = vpack.c.b16 %v2437, %v2433
    %v4130 = vpack.c.b16 %v2438, %v2434
    %v4131 = vpack.c.b16 %v2443, %v2439
    %v4132 = vpack.c.b16 %v2444, %v2440
    %v4133 = vpack.c.b16 %v2445, %v2441
    %v4134 = vpack.c.b16 %v2446, %v2442
    %v4135 = vpack.c.b16 %v2451, %v2447
    %v4136 = vpack.c.b16 %v2452, %v2448
    %v4137 = vpack.c.b16 %v2453, %v2449
    %v4138 = vpack.c.b16 %v2454, %v2450
    %v4139 = vpack.c.b16 %v2459, %v2455
    %v4140 = vpack.c.b16 %v2460, %v2456
    %v4141 = vpack.c.b16 %v2461, %v2457
    %v4142 = vpack.c.b16 %v2462, %v2458
    %v4143 = vpack.c.b16 %v2467, %v2463
    %v4144 = vpack.c.b16 %v2468, %v2464
    %v4145 = vpack.c.b16 %v2469, %v2465
    %v4146 = vpack.c.b16 %v2470, %v2466
    %v4147 = vpack.c.b16 %v2475, %v2471
    %v4148 = vpack.c.b16 %v2476, %v2472
    %v4149 = vpack.c.b16 %v2477, %v2473
    %v4150 = vpack.c.b16 %v2478, %v2474
    %v4151 = vpack.c.b16 %v2483, %v2479
    %v4152 = vpack.c.b16 %v2484, %v2480
    %v4153 = vpack.c.b16 %v2485, %v2481
    %v4154 = vpack.c.b16 %v2486, %v2482
    %v4155 = vpack.c.b16 %v2491, %v2487
    %v4156 = vpack.c.b16 %v2492, %v2488
    %v4157 = vpack.c.b16 %v2493, %v2489
    %v4158 = vpack.c.b16 %v2494, %v2490
    %v4159 = vpack.c.b16 %v2499, %v2495
    %v4160 = vpack.c.b16 %v2500, %v2496
    %v4161 = vpack.c.b16 %v2501, %v2497
    %v4162 = vpack.c.b16 %v2502, %v2498
    %v4163 = vpack.c.b16 %v2507, %v2503
    %v4164 = vpack.c.b16 %v2508, %v2504
    %v4165 = vpack.c.b16 %v2509, %v2505
    %v4166 = vpack.c.b16 %v2510, %v2506
    %v4167 = vpack.c.b16 %v2515, %v2511
    %v4168 = vpack.c.b16 %v2516, %v2512
    %v4169 = vpack.c.b16 %v2517, %v2513
    %v4170 = vpack.c.b16 %v2518, %v2514
    %v4171 = vpack.c.b16 %v2523, %v2519
    %v4172 = vpack.c.b16 %v2524, %v2520
    %v4173 = vpack.c.b16 %v2525, %v2521
    %v4174 = vpack.c.b16 %v2526, %v2522
    %v4175 = vpack.c.b16 %v2531, %v2527
    %v4176 = vpack.c.b16 %v2532, %v2528
    %v4177 = vpack.c.b16 %v2533, %v2529
    %v4178 = vpack.c.b16 %v2534, %v2530
    %v4179 = vpack.c.b16 %v2539, %v2535
    %v4180 = vpack.c.b16 %v2540, %v2536
    %v4181 = vpack.c.b16 %v2541, %v2537
    %v4182 = vpack.c.b16 %v2542, %v2538
    %v4183 = vpack.c.b16 %v2547, %v2543
    %v4184 = vpack.c.b16 %v2548, %v2544
    %v4185 = vpack.c.b16 %v2549, %v2545
    %v4186 = vpack.c.b16 %v2550, %v2546
    %v4187 = vpack.c.b16 %v2555, %v2551
    %v4188 = vpack.c.b16 %v2556, %v2552
    %v4189 = vpack.c.b16 %v2557, %v2553
    %v4190 = vpack.c.b16 %v2558, %v2554
    %v4191 = vpack.c.b16 %v2563, %v2559
    %v4192 = vpack.c.b16 %v2564, %v2560
    %v4193 = vpack.c.b16 %v2565, %v2561
    %v4194 = vpack.c.b16 %v2566, %v2562
    %v4195 = vpack.c.b16 %v2571, %v2567
    %v4196 = vpack.c.b16 %v2572, %v2568
    %v4197 = vpack.c.b16 %v2573, %v2569
    %v4198 = vpack.c.b16 %v2574, %v2570
    %v4199 = vpack.c.b16 %v2579, %v2575
    %v4200 = vpack.c.b16 %v2580, %v2576
    %v4201 = vpack.c.b16 %v2581, %v2577
    %v4202 = vpack.c.b16 %v2582, %v2578
    %v4203 = vpack.c.b16 %v2587, %v2583
    %v4204 = vpack.c.b16 %v2588, %v2584
    %v4205 = vpack.c.b16 %v2589, %v2585
    %v4206 = vpack.c.b16 %v2590, %v2586
    %v4207 = vpack.c.b16 %v2595, %v2591
    %v4208 = vpack.c.b16 %v2596, %v2592
    %v4209 = vpack.c.b16 %v2597, %v2593
    %v4210 = vpack.c.b16 %v2598, %v2594
    %v4211 = vpack.c.b16 %v2603, %v2599
    %v4212 = vpack.c.b16 %v2604, %v2600
    %v4213 = vpack.c.b16 %v2605, %v2601
    %v4214 = vpack.c.b16 %v2606, %v2602
    %v4215 = vpack.c.b16 %v2611, %v2607
    %v4216 = vpack.c.b16 %v2612, %v2608
    %v4217 = vpack.c.b16 %v2613, %v2609
    %v4218 = vpack.c.b16 %v2614, %v2610
    %v4219 = vpack.c.b16 %v2619, %v2615
    %v4220 = vpack.c.b16 %v2620, %v2616
    %v4221 = vpack.c.b16 %v2621, %v2617
    %v4222 = vpack.c.b16 %v2622, %v2618
    %v4223 = vpack.c.b16 %v2627, %v2623
    %v4224 = vpack.c.b16 %v2628, %v2624
    %v4225 = vpack.c.b16 %v2629, %v2625
    %v4226 = vpack.c.b16 %v2630, %v2626
    %v4227 = vpack.c.b16 %v2635, %v2631
    %v4228 = vpack.c.b16 %v2636, %v2632
    %v4229 = vpack.c.b16 %v2637, %v2633
    %v4230 = vpack.c.b16 %v2638, %v2634
    %v4231 = vpack.c.b16 %v2643, %v2639
    %v4232 = vpack.c.b16 %v2644, %v2640
    %v4233 = vpack.c.b16 %v2645, %v2641
    %v4234 = vpack.c.b16 %v2646, %v2642
    %v4235 = vpack.c.b16 %v2651, %v2647
    %v4236 = vpack.c.b16 %v2652, %v2648
    %v4237 = vpack.c.b16 %v2653, %v2649
    %v4238 = vpack.c.b16 %v2654, %v2650
    %v4239 = vpack.c.b16 %v2659, %v2655
    %v4240 = vpack.c.b16 %v2660, %v2656
    %v4241 = vpack.c.b16 %v2661, %v2657
    %v4242 = vpack.c.b16 %v2662, %v2658
    %v4243 = vpack.c.b16 %v2667, %v2663
    %v4244 = vpack.c.b16 %v2668, %v2664
    %v4245 = vpack.c.b16 %v2669, %v2665
    %v4246 = vpack.c.b16 %v2670, %v2666
    %v4247 = vpack.c.b16 %v2675, %v2671
    %v4248 = vpack.c.b16 %v2676, %v2672
    %v4249 = vpack.c.b16 %v2677, %v2673
    %v4250 = vpack.c.b16 %v2678, %v2674
    %v4251 = vpack.c.b16 %v2683, %v2679
    %v4252 = vpack.c.b16 %v2684, %v2680
    %v4253 = vpack.c.b16 %v2685, %v2681
    %v4254 = vpack.c.b16 %v2686, %v2682
    %v4255 = vpack.c.b16 %v2691, %v2687
    %v4256 = vpack.c.b16 %v2692, %v2688
    %v4257 = vpack.c.b16 %v2693, %v2689
    %v4258 = vpack.c.b16 %v2694, %v2690
    %v4259 = vpack.c.b16 %v2699, %v2695
    %v4260 = vpack.c.b16 %v2700, %v2696
    %v4261 = vpack.c.b16 %v2701, %v2697
    %v4262 = vpack.c.b16 %v2702, %v2698
    %v4263 = vpack.c.b16 %v2707, %v2703
    %v4264 = vpack.c.b16 %v2708, %v2704
    %v4265 = vpack.c.b16 %v2709, %v2705
    %v4266 = vpack.c.b16 %v2710, %v2706
    %v4267 = vpack.c.b16 %v2715, %v2711
    %v4268 = vpack.c.b16 %v2716, %v2712
    %v4269 = vpack.c.b16 %v2717, %v2713
    %v4270 = vpack.c.b16 %v2718, %v2714
    %v4271 = vpack.c.b16 %v2723, %v2719
    %v4272 = vpack.c.b16 %v2724, %v2720
    %v4273 = vpack.c.b16 %v2725, %v2721
    %v4274 = vpack.c.b16 %v2726, %v2722
    %v4275 = vpack.c.b16 %v2731, %v2727
    %v4276 = vpack.c.b16 %v2732, %v2728
    %v4277 = vpack.c.b16 %v2733, %v2729
    %v4278 = vpack.c.b16 %v2734, %v2730
    %v4279 = vpack.c.b16 %v2739, %v2735
    %v4280 = vpack.c.b16 %v2740, %v2736
    %v4281 = vpack.c.b16 %v2741, %v2737
    %v4282 = vpack.c.b16 %v2742, %v2738
    %v4283 = vpack.c.b16 %v2747, %v2743
    %v4284 = vpack.c.b16 %v2748, %v2744
    %v4285 = vpack.c.b16 %v2749, %v2745
    %v4286 = vpack.c.b16 %v2750, %v2746
    %v4287 = vpack.c.b16 %v2755, %v2751
    %v4288 = vpack.c.b16 %v2756, %v2752
    %v4289 = vpack.c.b16 %v2757, %v2753
    %v4290 = vpack.c.b16 %v2758, %v2754
    %v4291 = vpack.c.b16 %v2763, %v2759
    %v4292 = vpack.c.b16 %v2764, %v2760
    %v4293 = vpack.c.b16 %v2765, %v2761
    %v4294 = vpack.c.b16 %v2766, %v2762
    %v4295 = vpack.c.b16 %v2771, %v2767
    %v4296 = vpack.c.b16 %v2772, %v2768
    %v4297 = vpack.c.b16 %v2773, %v2769
    %v4298 = vpack.c.b16 %v2774, %v2770
    %v4299 = vpack.c.b16 %v2779, %v2775
    %v4300 = vpack.c.b16 %v2780, %v2776
    %v4301 = vpack.c.b16 %v2781, %v2777
    %v4302 = vpack.c.b16 %v2782, %v2778
    %v4303 = vpack.c.b16 %v2787, %v2783
    %v4304 = vpack.c.b16 %v2788, %v2784
    %v4305 = vpack.c.b16 %v2789, %v2785
    %v4306 = vpack.c.b16 %v2790, %v2786
    %v4307 = vpack.c.b16 %v2795, %v2791
    %v4308 = vpack.c.b16 %v2796, %v2792
    %v4309 = vpack.c.b16 %v2797, %v2793
    %v4310 = vpack.c.b16 %v2798, %v2794
    %v4311 = vpack.c.b16 %v2803, %v2799
    %v4312 = vpack.c.b16 %v2804, %v2800
    %v4313 = vpack.c.b16 %v2805, %v2801
    %v4314 = vpack.c.b16 %v2806, %v2802
    %v4315 = vpack.c.b16 %v2811, %v2807
    %v4316 = vpack.c.b16 %v2812, %v2808
    %v4317 = vpack.c.b16 %v2813, %v2809
    %v4318 = vpack.c.b16 %v2814, %v2810
    %v4319 = vpack.c.b16 %v2819, %v2815
    %v4320 = vpack.c.b16 %v2820, %v2816
    %v4321 = vpack.c.b16 %v2821, %v2817
    %v4322 = vpack.c.b16 %v2822, %v2818
    %v4323 = vpack.c.b16 %v2827, %v2823
    %v4324 = vpack.c.b16 %v2828, %v2824
    %v4325 = vpack.c.b16 %v2829, %v2825
    %v4326 = vpack.c.b16 %v2830, %v2826
    %v4327 = vpack.c.b16 %v2835, %v2831
    %v4328 = vpack.c.b16 %v2836, %v2832
    %v4329 = vpack.c.b16 %v2837, %v2833
    %v4330 = vpack.c.b16 %v2838, %v2834
    %v4331 = vpack.c.b16 %v2843, %v2839
    %v4332 = vpack.c.b16 %v2844, %v2840
    %v4333 = vpack.c.b16 %v2845, %v2841
    %v4334 = vpack.c.b16 %v2846, %v2842
    %v4335 = vpack.c.b16 %v2851, %v2847
    %v4336 = vpack.c.b16 %v2852, %v2848
    %v4337 = vpack.c.b16 %v2853, %v2849
    %v4338 = vpack.c.b16 %v2854, %v2850
    %v4339 = vpack.c.b16 %v2859, %v2855
    %v4340 = vpack.c.b16 %v2860, %v2856
    %v4341 = vpack.c.b16 %v2861, %v2857
    %v4342 = vpack.c.b16 %v2862, %v2858
    %v4343 = vpack.c.b16 %v2867, %v2863
    %v4344 = vpack.c.b16 %v2868, %v2864
    %v4345 = vpack.c.b16 %v2869, %v2865
    %v4346 = vpack.c.b16 %v2870, %v2866
    %v4347 = vpack.c.b16 %v2875, %v2871
    %v4348 = vpack.c.b16 %v2876, %v2872
    %v4349 = vpack.c.b16 %v2877, %v2873
    %v4350 = vpack.c.b16 %v2878, %v2874
    %v4351 = vpack.c.b16 %v2883, %v2879
    %v4352 = vpack.c.b16 %v2884, %v2880
    %v4353 = vpack.c.b16 %v2885, %v2881
    %v4354 = vpack.c.b16 %v2886, %v2882
    %v4355 = vpack.c.b16 %v2891, %v2887
    %v4356 = vpack.c.b16 %v2892, %v2888
    %v4357 = vpack.c.b16 %v2893, %v2889
    %v4358 = vpack.c.b16 %v2894, %v2890
    %v4359 = vpack.c.b16 %v2899, %v2895
    %v4360 = vpack.c.b16 %v2900, %v2896
    %v4361 = vpack.c.b16 %v2901, %v2897
    %v4362 = vpack.c.b16 %v2902, %v2898
    %v4363 = vpack.c.b16 %v2907, %v2903
    %v4364 = vpack.c.b16 %v2908, %v2904
    %v4365 = vpack.c.b16 %v2909, %v2905
    %v4366 = vpack.c.b16 %v2910, %v2906
    %v4367 = vpack.c.b16 %v2915, %v2911
    %v4368 = vpack.c.b16 %v2916, %v2912
    %v4369 = vpack.c.b16 %v2917, %v2913
    %v4370 = vpack.c.b16 %v2918, %v2914
    %v4371 = vpack.c.b16 %v2923, %v2919
    %v4372 = vpack.c.b16 %v2924, %v2920
    %v4373 = vpack.c.b16 %v2925, %v2921
    %v4374 = vpack.c.b16 %v2926, %v2922
    %v4375 = vpack.c.b16 %v2931, %v2927
    %v4376 = vpack.c.b16 %v2932, %v2928
    %v4377 = vpack.c.b16 %v2933, %v2929
    %v4378 = vpack.c.b16 %v2934, %v2930
    %v4379 = vpack.c.b16 %v2939, %v2935
    %v4380 = vpack.c.b16 %v2940, %v2936
    %v4381 = vpack.c.b16 %v2941, %v2937
    %v4382 = vpack.c.b16 %v2942, %v2938
    %v4383 = vpack.c.b16 %v2947, %v2943
    %v4384 = vpack.c.b16 %v2948, %v2944
    %v4385 = vpack.c.b16 %v2949, %v2945
    %v4386 = vpack.c.b16 %v2950, %v2946
    %v4387 = vpack.c.b16 %v2955, %v2951
    %v4388 = vpack.c.b16 %v2956, %v2952
    %v4389 = vpack.c.b16 %v2957, %v2953
    %v4390 = vpack.c.b16 %v2958, %v2954
    %v4391 = vpack.c.b16 %v2963, %v2959
    %v4392 = vpack.c.b16 %v2964, %v2960
    %v4393 = vpack.c.b16 %v2965, %v2961
    %v4394 = vpack.c.b16 %v2966, %v2962
    %v4395 = vpack.c.b16 %v2971, %v2967
    %v4396 = vpack.c.b16 %v2972, %v2968
    %v4397 = vpack.c.b16 %v2973, %v2969
    %v4398 = vpack.c.b16 %v2974, %v2970
    %v4399 = vpack.c.b16 %v2979, %v2975
    %v4400 = vpack.c.b16 %v2980, %v2976
    %v4401 = vpack.c.b16 %v2981, %v2977
    %v4402 = vpack.c.b16 %v2982, %v2978
    %v4403 = vpack.c.b16 %v2987, %v2983
    %v4404 = vpack.c.b16 %v2988, %v2984
    %v4405 = vpack.c.b16 %v2989, %v2985
    %v4406 = vpack.c.b16 %v2990, %v2986
    %v4407 = vpack.c.b16 %v2995, %v2991
    %v4408 = vpack.c.b16 %v2996, %v2992
    %v4409 = vpack.c.b16 %v2997, %v2993
    %v4410 = vpack.c.b16 %v2998, %v2994
    %v4411 = vpack.c.b16 %v3003, %v2999
    %v4412 = vpack.c.b16 %v3004, %v3000
    %v4413 = vpack.c.b16 %v3005, %v3001
    %v4414 = vpack.c.b16 %v3006, %v3002
    %v4415 = vpack.c.b16 %v3011, %v3007
    %v4416 = vpack.c.b16 %v3012, %v3008
    %v4417 = vpack.c.b16 %v3013, %v3009
    %v4418 = vpack.c.b16 %v3014, %v3010
    %v4419 = vpack.c.b16 %v3019, %v3015
    %v4420 = vpack.c.b16 %v3020, %v3016
    %v4421 = vpack.c.b16 %v3021, %v3017
    %v4422 = vpack.c.b16 %v3022, %v3018
    %v4423 = vpack.c.b16 %v3027, %v3023
    %v4424 = vpack.c.b16 %v3028, %v3024
    %v4425 = vpack.c.b16 %v3029, %v3025
    %v4426 = vpack.c.b16 %v3030, %v3026
    %v4427 = vpack.c.b16 %v3035, %v3031
    %v4428 = vpack.c.b16 %v3036, %v3032
    %v4429 = vpack.c.b16 %v3037, %v3033
    %v4430 = vpack.c.b16 %v3038, %v3034
    %v4431 = vpack.c.b16 %v3043, %v3039
    %v4432 = vpack.c.b16 %v3044, %v3040
    %v4433 = vpack.c.b16 %v3045, %v3041
    %v4434 = vpack.c.b16 %v3046, %v3042
    %v4435 = vpack.c.b16 %v3051, %v3047
    %v4436 = vpack.c.b16 %v3052, %v3048
    %v4437 = vpack.c.b16 %v3053, %v3049
    %v4438 = vpack.c.b16 %v3054, %v3050
    %v4439 = vpack.c.b16 %v3059, %v3055
    %v4440 = vpack.c.b16 %v3060, %v3056
    %v4441 = vpack.c.b16 %v3061, %v3057
    %v4442 = vpack.c.b16 %v3062, %v3058
    %v4443 = vpack.c.b16 %v3067, %v3063
    %v4444 = vpack.c.b16 %v3068, %v3064
    %v4445 = vpack.c.b16 %v3069, %v3065
    %v4446 = vpack.c.b16 %v3070, %v3066
    %v4447 = vpack.c.b16 %v3075, %v3071
    %v4448 = vpack.c.b16 %v3076, %v3072
    %v4449 = vpack.c.b16 %v3077, %v3073
    %v4450 = vpack.c.b16 %v3078, %v3074
    %v4451 = vpack.c.b16 %v3083, %v3079
    %v4452 = vpack.c.b16 %v3084, %v3080
    %v4453 = vpack.c.b16 %v3085, %v3081
    %v4454 = vpack.c.b16 %v3086, %v3082
    %v4455 = vpack.c.b16 %v3091, %v3087
    %v4456 = vpack.c.b16 %v3092, %v3088
    %v4457 = vpack.c.b16 %v3093, %v3089
    %v4458 = vpack.c.b16 %v3094, %v3090
    %v4459 = vpack.c.b16 %v3099, %v3095
    %v4460 = vpack.c.b16 %v3100, %v3096
    %v4461 = vpack.c.b16 %v3101, %v3097
    %v4462 = vpack.c.b16 %v3102, %v3098
    %v4463 = vpack.c.b16 %v3107, %v3103
    %v4464 = vpack.c.b16 %v3108, %v3104
    %v4465 = vpack.c.b16 %v3109, %v3105
    %v4466 = vpack.c.b16 %v3110, %v3106
    %v4467 = vpack.c.b16 %v3115, %v3111
    %v4468 = vpack.c.b16 %v3116, %v3112
    %v4469 = vpack.c.b16 %v3117, %v3113
    %v4470 = vpack.c.b16 %v3118, %v3114
    %v4471 = vpack.c.b16 %v3123, %v3119
    %v4472 = vpack.c.b16 %v3124, %v3120
    %v4473 = vpack.c.b16 %v3125, %v3121
    %v4474 = vpack.c.b16 %v3126, %v3122
    %v4475 = vpack.c.b16 %v3131, %v3127
    %v4476 = vpack.c.b16 %v3132, %v3128
    %v4477 = vpack.c.b16 %v3133, %v3129
    %v4478 = vpack.c.b16 %v3134, %v3130
    %v4479 = vpack.c.b16 %v3139, %v3135
    %v4480 = vpack.c.b16 %v3140, %v3136
    %v4481 = vpack.c.b16 %v3141, %v3137
    %v4482 = vpack.c.b16 %v3142, %v3138
    %v4483 = vpack.c.b16 %v3147, %v3143
    %v4484 = vpack.c.b16 %v3148, %v3144
    %v4485 = vpack.c.b16 %v3149, %v3145
    %v4486 = vpack.c.b16 %v3150, %v3146
    %v4487 = vpack.c.b16 %v3155, %v3151
    %v4488 = vpack.c.b16 %v3156, %v3152
    %v4489 = vpack.c.b16 %v3157, %v3153
    %v4490 = vpack.c.b16 %v3158, %v3154
    %v4491 = vpack.c.b16 %v3163, %v3159
    %v4492 = vpack.c.b16 %v3164, %v3160
    %v4493 = vpack.c.b16 %v3165, %v3161
    %v4494 = vpack.c.b16 %v3166, %v3162
    %v4495 = vpack.c.b16 %v3171, %v3167
    %v4496 = vpack.c.b16 %v3172, %v3168
    %v4497 = vpack.c.b16 %v3173, %v3169
    %v4498 = vpack.c.b16 %v3174, %v3170
    %v4499 = vpack.c.b16 %v3179, %v3175
    %v4500 = vpack.c.b16 %v3180, %v3176
    %v4501 = vpack.c.b16 %v3181, %v3177
    %v4502 = vpack.c.b16 %v3182, %v3178
    %v4503 = vpack.c.b16 %v3187, %v3183
    %v4504 = vpack.c.b16 %v3188, %v3184
    %v4505 = vpack.c.b16 %v3189, %v3185
    %v4506 = vpack.c.b16 %v3190, %v3186
    %v4507 = vpack.c.b16 %v3195, %v3191
    %v4508 = vpack.c.b16 %v3196, %v3192
    %v4509 = vpack.c.b16 %v3197, %v3193
    %v4510 = vpack.c.b16 %v3198, %v3194
    %v4511 = vpack.c.b16 %v3203, %v3199
    %v4512 = vpack.c.b16 %v3204, %v3200
    %v4513 = vpack.c.b16 %v3205, %v3201
    %v4514 = vpack.c.b16 %v3206, %v3202
    %v4515 = vpack.c.b16 %v3211, %v3207
    %v4516 = vpack.c.b16 %v3212, %v3208
    %v4517 = vpack.c.b16 %v3213, %v3209
    %v4518 = vpack.c.b16 %v3214, %v3210
    %v4519 = vpack.c.b16 %v3219, %v3215
    %v4520 = vpack.c.b16 %v3220, %v3216
    %v4521 = vpack.c.b16 %v3221, %v3217
    %v4522 = vpack.c.b16 %v3222, %v3218
    %v4523 = vpack.c.b16 %v3227, %v3223
    %v4524 = vpack.c.b16 %v3228, %v3224
    %v4525 = vpack.c.b16 %v3229, %v3225
    %v4526 = vpack.c.b16 %v3230, %v3226
    %v4527 = vpack.c.b16 %v3235, %v3231
    %v4528 = vpack.c.b16 %v3236, %v3232
    %v4529 = vpack.c.b16 %v3237, %v3233
    %v4530 = vpack.c.b16 %v3238, %v3234
    %v4531 = vpack.c.b16 %v3243, %v3239
    %v4532 = vpack.c.b16 %v3244, %v3240
    %v4533 = vpack.c.b16 %v3245, %v3241
    %v4534 = vpack.c.b16 %v3246, %v3242
    %v4535 = vpack.c.b16 %v3251, %v3247
    %v4536 = vpack.c.b16 %v3252, %v3248
    %v4537 = vpack.c.b16 %v3253, %v3249
    %v4538 = vpack.c.b16 %v3254, %v3250
    %v4539 = vpack.c.b16 %v3259, %v3255
    %v4540 = vpack.c.b16 %v3260, %v3256
    %v4541 = vpack.c.b16 %v3261, %v3257
    %v4542 = vpack.c.b16 %v3262, %v3258
    %v4543 = vpack.c.b16 %v3267, %v3263
    %v4544 = vpack.c.b16 %v3268, %v3264
    %v4545 = vpack.c.b16 %v3269, %v3265
    %v4546 = vpack.c.b16 %v3270, %v3266
    %v4547 = vpack.c.b16 %v3275, %v3271
    %v4548 = vpack.c.b16 %v3276, %v3272
    %v4549 = vpack.c.b16 %v3277, %v3273
    %v4550 = vpack.c.b16 %v3278, %v3274
    %v4551 = vpack.c.b16 %v3283, %v3279
    %v4552 = vpack.c.b16 %v3284, %v3280
    %v4553 = vpack.c.b16 %v3285, %v3281
    %v4554 = vpack.c.b16 %v3286, %v3282
    %v4555 = vpack.c.b16 %v3291, %v3287
    %v4556 = vpack.c.b16 %v3292, %v3288
    %v4557 = vpack.c.b16 %v3293, %v3289
    %v4558 = vpack.c.b16 %v3294, %v3290
    %v4559 = vpack.c.b16 %v3299, %v3295
    %v4560 = vpack.c.b16 %v3300, %v3296
    %v4561 = vpack.c.b16 %v3301, %v3297
    %v4562 = vpack.c.b16 %v3302, %v3298
    %v4563 = vpack.c.b16 %v3307, %v3303
    %v4564 = vpack.c.b16 %v3308, %v3304
    %v4565 = vpack.c.b16 %v3309, %v3305
    %v4566 = vpack.c.b16 %v3310, %v3306
    %v4567 = vpack.c.b16 %v3315, %v3311
    %v4568 = vpack.c.b16 %v3316, %v3312
    %v4569 = vpack.c.b16 %v3317, %v3313
    %v4570 = vpack.c.b16 %v3318, %v3314
    %v4571 = vpack.c.b16 %v3323, %v3319
    %v4572 = vpack.c.b16 %v3324, %v3320
    %v4573 = vpack.c.b16 %v3325, %v3321
    %v4574 = vpack.c.b16 %v3326, %v3322
    %v4575 = vpack.c.b16 %v3331, %v3327
    %v4576 = vpack.c.b16 %v3332, %v3328
    %v4577 = vpack.c.b16 %v3333, %v3329
    %v4578 = vpack.c.b16 %v3334, %v3330
    %v4579 = vpack.c.b16 %v3339, %v3335
    %v4580 = vpack.c.b16 %v3340, %v3336
    %v4581 = vpack.c.b16 %v3341, %v3337
    %v4582 = vpack.c.b16 %v3342, %v3338
    %v4583 = vpack.c.b16 %v3347, %v3343
    %v4584 = vpack.c.b16 %v3348, %v3344
    %v4585 = vpack.c.b16 %v3349, %v3345
    %v4586 = vpack.c.b16 %v3350, %v3346
    %v4587 = vpack.c.b16 %v3355, %v3351
    %v4588 = vpack.c.b16 %v3356, %v3352
    %v4589 = vpack.c.b16 %v3357, %v3353
    %v4590 = vpack.c.b16 %v3358, %v3354
    %v4591 = vpack.c.b16 %v3363, %v3359
    %v4592 = vpack.c.b16 %v3364, %v3360
    %v4593 = vpack.c.b16 %v3365, %v3361
    %v4594 = vpack.c.b16 %v3366, %v3362
    %v4595 = vpack.c.b16 %v3371, %v3367
    %v4596 = vpack.c.b16 %v3372, %v3368
    %v4597 = vpack.c.b16 %v3373, %v3369
    %v4598 = vpack.c.b16 %v3374, %v3370
    %v4599 = vpack.c.b16 %v3379, %v3375
    %v4600 = vpack.c.b16 %v3380, %v3376
    %v4601 = vpack.c.b16 %v3381, %v3377
    %v4602 = vpack.c.b16 %v3382, %v3378
    %v4603 = vpack.c.b16 %v3387, %v3383
    %v4604 = vpack.c.b16 %v3388, %v3384
    %v4605 = vpack.c.b16 %v3389, %v3385
    %v4606 = vpack.c.b16 %v3390, %v3386
    %v4607 = vpack.c.b16 %v3395, %v3391
    %v4608 = vpack.c.b16 %v3396, %v3392
    %v4609 = vpack.c.b16 %v3397, %v3393
    %v4610 = vpack.c.b16 %v3398, %v3394
    %v4611 = vpack.c.b16 %v3403, %v3399
    %v4612 = vpack.c.b16 %v3404, %v3400
    %v4613 = vpack.c.b16 %v3405, %v3401
    %v4614 = vpack.c.b16 %v3406, %v3402
    %v4615 = vpack.c.b16 %v3411, %v3407
    %v4616 = vpack.c.b16 %v3412, %v3408
    %v4617 = vpack.c.b16 %v3413, %v3409
    %v4618 = vpack.c.b16 %v3414, %v3410
    %v4619 = vpack.c.b16 %v3419, %v3415
    %v4620 = vpack.c.b16 %v3420, %v3416
    %v4621 = vpack.c.b16 %v3421, %v3417
    %v4622 = vpack.c.b16 %v3422, %v3418
    %v4623 = vpack.c.b16 %v3427, %v3423
    %v4624 = vpack.c.b16 %v3428, %v3424
    %v4625 = vpack.c.b16 %v3429, %v3425
    %v4626 = vpack.c.b16 %v3430, %v3426
    %v4627 = vpack.c.b16 %v3435, %v3431
    %v4628 = vpack.c.b16 %v3436, %v3432
    %v4629 = vpack.c.b16 %v3437, %v3433
    %v4630 = vpack.c.b16 %v3438, %v3434
    %v4631 = vpack.c.b16 %v3443, %v3439
    %v4632 = vpack.c.b16 %v3444, %v3440
    %v4633 = vpack.c.b16 %v3445, %v3441
    %v4634 = vpack.c.b16 %v3446, %v3442
    %v4635 = vpack.c.b16 %v3451, %v3447
    %v4636 = vpack.c.b16 %v3452, %v3448
    %v4637 = vpack.c.b16 %v3453, %v3449
    %v4638 = vpack.c.b16 %v3454, %v3450
    %v4639 = vpack.c.b16 %v3459, %v3455
    %v4640 = vpack.c.b16 %v3460, %v3456
    %v4641 = vpack.c.b16 %v3461, %v3457
    %v4642 = vpack.c.b16 %v3462, %v3458
    %v4643 = vpack.c.b16 %v3467, %v3463
    %v4644 = vpack.c.b16 %v3468, %v3464
    %v4645 = vpack.c.b16 %v3469, %v3465
    %v4646 = vpack.c.b16 %v3470, %v3466
    %v4647 = vpack.c.b16 %v3475, %v3471
    %v4648 = vpack.c.b16 %v3476, %v3472
    %v4649 = vpack.c.b16 %v3477, %v3473
    %v4650 = vpack.c.b16 %v3478, %v3474
    %v4651 = vpack.c.b16 %v3483, %v3479
    %v4652 = vpack.c.b16 %v3484, %v3480
    %v4653 = vpack.c.b16 %v3485, %v3481
    %v4654 = vpack.c.b16 %v3486, %v3482
    %v4655 = vpack.c.b16 %v3491, %v3487
    %v4656 = vpack.c.b16 %v3492, %v3488
    %v4657 = vpack.c.b16 %v3493, %v3489
    %v4658 = vpack.c.b16 %v3494, %v3490
    %v4659 = vpack.c.b16 %v3499, %v3495
    %v4660 = vpack.c.b16 %v3500, %v3496
    %v4661 = vpack.c.b16 %v3501, %v3497
    %v4662 = vpack.c.b16 %v3502, %v3498
    %v4663 = vpack.c.b16 %v3507, %v3503
    %v4664 = vpack.c.b16 %v3508, %v3504
    %v4665 = vpack.c.b16 %v3509, %v3505
    %v4666 = vpack.c.b16 %v3510, %v3506
    %v4667 = vpack.c.b16 %v3515, %v3511
    %v4668 = vpack.c.b16 %v3516, %v3512
    %v4669 = vpack.c.b16 %v3517, %v3513
    %v4670 = vpack.c.b16 %v3518, %v3514
    %v4671 = vpack.c.b16 %v3523, %v3519
    %v4672 = vpack.c.b16 %v3524, %v3520
    %v4673 = vpack.c.b16 %v3525, %v3521
    %v4674 = vpack.c.b16 %v3526, %v3522
    %v4675 = vpack.c.b16 %v3531, %v3527
    %v4676 = vpack.c.b16 %v3532, %v3528
    %v4677 = vpack.c.b16 %v3533, %v3529
    %v4678 = vpack.c.b16 %v3534, %v3530
    %v4679 = vpack.c.b16 %v3539, %v3535
    %v4680 = vpack.c.b16 %v3540, %v3536
    %v4681 = vpack.c.b16 %v3541, %v3537
    %v4682 = vpack.c.b16 %v3542, %v3538
    %v4683 = vpack.c.b16 %v3547, %v3543
    %v4684 = vpack.c.b16 %v3548, %v3544
    %v4685 = vpack.c.b16 %v3549, %v3545
    %v4686 = vpack.c.b16 %v3550, %v3546
    %v4687 = vpack.c.b16 %v3555, %v3551
    %v4688 = vpack.c.b16 %v3556, %v3552
    %v4689 = vpack.c.b16 %v3557, %v3553
    %v4690 = vpack.c.b16 %v3558, %v3554
    %v4691 = vpack.c.b16 %v3563, %v3559
    %v4692 = vpack.c.b16 %v3564, %v3560
    %v4693 = vpack.c.b16 %v3565, %v3561
    %v4694 = vpack.c.b16 %v3566, %v3562
    %v4695 = vpack.c.b16 %v3571, %v3567
    %v4696 = vpack.c.b16 %v3572, %v3568
    %v4697 = vpack.c.b16 %v3573, %v3569
    %v4698 = vpack.c.b16 %v3574, %v3570
    %v4699 = vpack.c.b16 %v3579, %v3575
    %v4700 = vpack.c.b16 %v3580, %v3576
    %v4701 = vpack.c.b16 %v3581, %v3577
    %v4702 = vpack.c.b16 %v3582, %v3578
    %v4703 = vpack.c.b16 %v3587, %v3583
    %v4704 = vpack.c.b16 %v3588, %v3584
    %v4705 = vpack.c.b16 %v3589, %v3585
    %v4706 = vpack.c.b16 %v3590, %v3586
    %v4707 = vpack.c.b16 %v3595, %v3591
    %v4708 = vpack.c.b16 %v3596, %v3592
    %v4709 = vpack.c.b16 %v3597, %v3593
    %v4710 = vpack.c.b16 %v3598, %v3594
    %v4711 = vpack.c.b16 %v3603, %v3599
    %v4712 = vpack.c.b16 %v3604, %v3600
    %v4713 = vpack.c.b16 %v3605, %v3601
    %v4714 = vpack.c.b16 %v3606, %v3602
    %v4715 = vpack.c.b16 %v3611, %v3607
    %v4716 = vpack.c.b16 %v3612, %v3608
    %v4717 = vpack.c.b16 %v3613, %v3609
    %v4718 = vpack.c.b16 %v3614, %v3610
    %v4719 = vpack.c.b16 %v3619, %v3615
    %v4720 = vpack.c.b16 %v3620, %v3616
    %v4721 = vpack.c.b16 %v3621, %v3617
    %v4722 = vpack.c.b16 %v3622, %v3618
    %v4723 = vpack.c.b16 %v3627, %v3623
    %v4724 = vpack.c.b16 %v3628, %v3624
    %v4725 = vpack.c.b16 %v3629, %v3625
    %v4726 = vpack.c.b16 %v3630, %v3626
    %v4727 = vpack.c.b16 %v3635, %v3631
    %v4728 = vpack.c.b16 %v3636, %v3632
    %v4729 = vpack.c.b16 %v3637, %v3633
    %v4730 = vpack.c.b16 %v3638, %v3634
    %v4731 = vpack.c.b16 %v3643, %v3639
    %v4732 = vpack.c.b16 %v3644, %v3640
    %v4733 = vpack.c.b16 %v3645, %v3641
    %v4734 = vpack.c.b16 %v3646, %v3642
    %v4735 = vpack.c.b16 %v3651, %v3647
    %v4736 = vpack.c.b16 %v3652, %v3648
    %v4737 = vpack.c.b16 %v3653, %v3649
    %v4738 = vpack.c.b16 %v3654, %v3650
    %v4739 = vpack.c.b16 %v3659, %v3655
    %v4740 = vpack.c.b16 %v3660, %v3656
    %v4741 = vpack.c.b16 %v3661, %v3657
    %v4742 = vpack.c.b16 %v3662, %v3658
    %v4743 = vpack.c.b16 %v3667, %v3663
    %v4744 = vpack.c.b16 %v3668, %v3664
    %v4745 = vpack.c.b16 %v3669, %v3665
    %v4746 = vpack.c.b16 %v3670, %v3666
    %v4747 = vpack.c.b16 %v3675, %v3671
    %v4748 = vpack.c.b16 %v3676, %v3672
    %v4749 = vpack.c.b16 %v3677, %v3673
    %v4750 = vpack.c.b16 %v3678, %v3674
    %v4751 = vpack.c.b16 %v3683, %v3679
    %v4752 = vpack.c.b16 %v3684, %v3680
    %v4753 = vpack.c.b16 %v3685, %v3681
    %v4754 = vpack.c.b16 %v3686, %v3682
    %v4755 = vpack.c.b16 %v3691, %v3687
    %v4756 = vpack.c.b16 %v3692, %v3688
    %v4757 = vpack.c.b16 %v3693, %v3689
    %v4758 = vpack.c.b16 %v3694, %v3690
    %v4759 = vpack.c.b16 %v3699, %v3695
    %v4760 = vpack.c.b16 %v3700, %v3696
    %v4761 = vpack.c.b16 %v3701, %v3697
    %v4762 = vpack.c.b16 %v3702, %v3698
    %v4763 = vpack.c.b16 %v3707, %v3703
    %v4764 = vpack.c.b16 %v3708, %v3704
    %v4765 = vpack.c.b16 %v3709, %v3705
    %v4766 = vpack.c.b16 %v3710, %v3706
    %v4767 = vpack.c.b16 %v3715, %v3711
    %v4768 = vpack.c.b16 %v3716, %v3712
    %v4769 = vpack.c.b16 %v3717, %v3713
    %v4770 = vpack.c.b16 %v3718, %v3714
    %v4771 = vpack.c.b16 %v3723, %v3719
    %v4772 = vpack.c.b16 %v3724, %v3720
    %v4773 = vpack.c.b16 %v3725, %v3721
    %v4774 = vpack.c.b16 %v3726, %v3722
    %v4775 = vpack.c.b16 %v3731, %v3727
    %v4776 = vpack.c.b16 %v3732, %v3728
    %v4777 = vpack.c.b16 %v3733, %v3729
    %v4778 = vpack.c.b16 %v3734, %v3730
    %v4779 = vpack.c.b16 %v3739, %v3735
    %v4780 = vpack.c.b16 %v3740, %v3736
    %v4781 = vpack.c.b16 %v3741, %v3737
    %v4782 = vpack.c.b16 %v3742, %v3738
    %v4783 = vpack.c.b16 %v3747, %v3743
    %v4784 = vpack.c.b16 %v3748, %v3744
    %v4785 = vpack.c.b16 %v3749, %v3745
    %v4786 = vpack.c.b16 %v3750, %v3746
    %v4787 = vpack.c.b16 %v3755, %v3751
    %v4788 = vpack.c.b16 %v3756, %v3752
    %v4789 = vpack.c.b16 %v3757, %v3753
    %v4790 = vpack.c.b16 %v3758, %v3754
    %v4791 = vpack.c.b16 %v3763, %v3759
    %v4792 = vpack.c.b16 %v3764, %v3760
    %v4793 = vpack.c.b16 %v3765, %v3761
    %v4794 = vpack.c.b16 %v3766, %v3762
    %v4795 = vpack.c.b16 %v3771, %v3767
    %v4796 = vpack.c.b16 %v3772, %v3768
    %v4797 = vpack.c.b16 %v3773, %v3769
    %v4798 = vpack.c.b16 %v3774, %v3770
    %v4799 = vpack.c.b16 %v3779, %v3775
    %v4800 = vpack.c.b16 %v3780, %v3776
    %v4801 = vpack.c.b16 %v3781, %v3777
    %v4802 = vpack.c.b16 %v3782, %v3778
    %v4803 = vpack.c.b16 %v3787, %v3783
    %v4804 = vpack.c.b16 %v3788, %v3784
    %v4805 = vpack.c.b16 %v3789, %v3785
    %v4806 = vpack.c.b16 %v3790, %v3786
    %v4807 = vpack.c.b16 %v3795, %v3791
    %v4808 = vpack.c.b16 %v3796, %v3792
    %v4809 = vpack.c.b16 %v3797, %v3793
    %v4810 = vpack.c.b16 %v3798, %v3794
    %v4811 = vpack.c.b16 %v3803, %v3799
    %v4812 = vpack.c.b16 %v3804, %v3800
    %v4813 = vpack.c.b16 %v3805, %v3801
    %v4814 = vpack.c.b16 %v3806, %v3802
    %v4815 = vpack.c.b16 %v3811, %v3807
    %v4816 = vpack.c.b16 %v3812, %v3808
    %v4817 = vpack.c.b16 %v3813, %v3809
    %v4818 = vpack.c.b16 %v3814, %v3810
    %v4819 = vpack.c.b16 %v3819, %v3815
    %v4820 = vpack.c.b16 %v3820, %v3816
    %v4821 = vpack.c.b16 %v3821, %v3817
    %v4822 = vpack.c.b16 %v3822, %v3818
    %v4823 = vpack.c.b16 %v3827, %v3823
    %v4824 = vpack.c.b16 %v3828, %v3824
    %v4825 = vpack.c.b16 %v3829, %v3825
    %v4826 = vpack.c.b16 %v3830, %v3826
    %v4827 = vpack.c.b16 %v3835, %v3831
    %v4828 = vpack.c.b16 %v3836, %v3832
    %v4829 = vpack.c.b16 %v3837, %v3833
    %v4830 = vpack.c.b16 %v3838, %v3834
    %v4831 = vpack.c.b16 %v3843, %v3839
    %v4832 = vpack.c.b16 %v3844, %v3840
    %v4833 = vpack.c.b16 %v3845, %v3841
    %v4834 = vpack.c.b16 %v3846, %v3842
    %v4835 = vpack.c.b16 %v3851, %v3847
    %v4836 = vpack.c.b16 %v3852, %v3848
    %v4837 = vpack.c.b16 %v3853, %v3849
    %v4838 = vpack.c.b16 %v3854, %v3850
    %v4839 = vpack.c.b16 %v3859, %v3855
    %v4840 = vpack.c.b16 %v3860, %v3856
    %v4841 = vpack.c.b16 %v3861, %v3857
    %v4842 = vpack.c.b16 %v3862, %v3858
    %v4843 = vpack.c.b16 %v3867, %v3863
    %v4844 = vpack.c.b16 %v3868, %v3864
    %v4845 = vpack.c.b16 %v3869, %v3865
    %v4846 = vpack.c.b16 %v3870, %v3866
    %v4847 = vpack.c.b16 %v3875, %v3871
    %v4848 = vpack.c.b16 %v3876, %v3872
    %v4849 = vpack.c.b16 %v3877, %v3873
    %v4850 = vpack.c.b16 %v3878, %v3874
    %v4851 = vpack.c.b16 %v3883, %v3879
    %v4852 = vpack.c.b16 %v3884, %v3880
    %v4853 = vpack.c.b16 %v3885, %v3881
    %v4854 = vpack.c.b16 %v3886, %v3882
    %v4855 = vpack.c.b16 %v3891, %v3887
    %v4856 = vpack.c.b16 %v3892, %v3888
    %v4857 = vpack.c.b16 %v3893, %v3889
    %v4858 = vpack.c.b16 %v3894, %v3890
    %v4859 = vpack.c.b16 %v3899, %v3895
    %v4860 = vpack.c.b16 %v3900, %v3896
    %v4861 = vpack.c.b16 %v3901, %v3897
    %v4862 = vpack.c.b16 %v3902, %v3898
    %v4863 = vpack.c.b16 %v3907, %v3903
    %v4864 = vpack.c.b16 %v3908, %v3904
    %v4865 = vpack.c.b16 %v3909, %v3905
    %v4866 = vpack.c.b16 %v3910, %v3906
    %v4867 = vpack.c.b16 %v3915, %v3911
    %v4868 = vpack.c.b16 %v3916, %v3912
    %v4869 = vpack.c.b16 %v3917, %v3913
    %v4870 = vpack.c.b16 %v3918, %v3914
    %v4871 = vpack.c.b16 %v3923, %v3919
    %v4872 = vpack.c.b16 %v3924, %v3920
    %v4873 = vpack.c.b16 %v3925, %v3921
    %v4874 = vpack.c.b16 %v3926, %v3922
    %v4875 = vpack.c.b16 %v3931, %v3927
    %v4876 = vpack.c.b16 %v3932, %v3928
    %v4877 = vpack.c.b16 %v3933, %v3929
    %v4878 = vpack.c.b16 %v3934, %v3930
    %v4879 = vpack.c.b16 %v3939, %v3935
    %v4880 = vpack.c.b16 %v3940, %v3936
    %v4881 = vpack.c.b16 %v3941, %v3937
    %v4882 = vpack.c.b16 %v3942, %v3938
    %v4883 = vpack.c.b16 %v3947, %v3943
    %v4884 = vpack.c.b16 %v3948, %v3944
    %v4885 = vpack.c.b16 %v3949, %v3945
    %v4886 = vpack.c.b16 %v3950, %v3946
    %v4887 = vpack.c.b16 %v3955, %v3951
    %v4888 = vpack.c.b16 %v3956, %v3952
    %v4889 = vpack.c.b16 %v3957, %v3953
    %v4890 = vpack.c.b16 %v3958, %v3954
    %v4891 = vpack.c.b16 %v3963, %v3959
    %v4892 = vpack.c.b16 %v3964, %v3960
    %v4893 = vpack.c.b16 %v3965, %v3961
    %v4894 = vpack.c.b16 %v3966, %v3962
    %5823 = vmatpush.bf16.msra.mxu0 %v3995
    %5824 = vmatpush.bf16.msra.mxu0 %v3991
    %5825 = vmatpush.bf16.msra.mxu0 %v3987
    %5826 = vmatpush.bf16.msra.mxu0 %v3983
    %5827 = vmatpush.bf16.msra.mxu0 %v3979
    %5828 = vmatpush.bf16.msra.mxu0 %v3975
    %5829 = vmatpush.bf16.msra.mxu0 %v3971
    %5830 = vmatpush.bf16.msra.mxu0 %v3967
    %5831 = vmatmul.bf16.gmra.mxu0 %v1125
    %v5832 = vpop.f32.mrf.mxu0
    %v5833 = vadd.f32 %v1073, %v5832
    %v5834 = vpop.f32.mrf.mxu0
    %5835 = vdwg.mxu0
    %5836 = vmatpush.bf16.msra.mxu0 %v4027
    %5837 = vmatpush.bf16.msra.mxu0 %v4023
    %5838 = vmatpush.bf16.msra.mxu0 %v4019
    %5839 = vmatpush.bf16.msra.mxu0 %v4015
    %5840 = vmatpush.bf16.msra.mxu0 %v4011
    %5841 = vmatpush.bf16.msra.mxu0 %v4007
    %5842 = vmatpush.bf16.msra.mxu0 %v4003
    %5843 = vmatpush.bf16.msra.mxu0 %v3999
    %5844 = vmatmul.bf16.gmra.mxu0 %v1126
    %v5845 = vpop.f32.mrf.mxu0
    %v5846 = vadd.f32 %v5833, %v5845
    %v5847 = vpop.f32.mrf.mxu0
    %5848 = vdwg.mxu0
    %5849 = vmatpush.bf16.msra.mxu0 %v4059
    %5850 = vmatpush.bf16.msra.mxu0 %v4055
    %5851 = vmatpush.bf16.msra.mxu0 %v4051
    %5852 = vmatpush.bf16.msra.mxu0 %v4047
    %5853 = vmatpush.bf16.msra.mxu0 %v4043
    %5854 = vmatpush.bf16.msra.mxu0 %v4039
    %5855 = vmatpush.bf16.msra.mxu0 %v4035
    %5856 = vmatpush.bf16.msra.mxu0 %v4031
    %5857 = vmatmul.bf16.gmra.mxu0 %v1127
    %v5858 = vpop.f32.mrf.mxu0
    %v5859 = vadd.f32 %v5846, %v5858
    %v5860 = vpop.f32.mrf.mxu0
    %5861 = vdwg.mxu0
    %5862 = vmatpush.bf16.msra.mxu0 %v4091
    %5863 = vmatpush.bf16.msra.mxu0 %v4087
    %5864 = vmatpush.bf16.msra.mxu0 %v4083
    %5865 = vmatpush.bf16.msra.mxu0 %v4079
    %5866 = vmatpush.bf16.msra.mxu0 %v4075
    %5867 = vmatpush.bf16.msra.mxu0 %v4071
    %5868 = vmatpush.bf16.msra.mxu0 %v4067
    %5869 = vmatpush.bf16.msra.mxu0 %v4063
    %5870 = vmatmul.bf16.gmra.mxu0 %v1128
    %v5871 = vpop.f32.mrf.mxu0
    %v5872 = vadd.f32 %v5859, %v5871
    %v5873 = vpop.f32.mrf.mxu0
    %5874 = vdwg.mxu0
    %5875 = vmatpush.bf16.msra.mxu0 %v4123
    %5876 = vmatpush.bf16.msra.mxu0 %v4119
    %5877 = vmatpush.bf16.msra.mxu0 %v4115
    %5878 = vmatpush.bf16.msra.mxu0 %v4111
    %5879 = vmatpush.bf16.msra.mxu0 %v4107
    %5880 = vmatpush.bf16.msra.mxu0 %v4103
    %5881 = vmatpush.bf16.msra.mxu0 %v4099
    %5882 = vmatpush.bf16.msra.mxu0 %v4095
    %5883 = vmatmul.bf16.gmra.mxu0 %v1129
    %v5884 = vpop.f32.mrf.mxu0
    %v5885 = vadd.f32 %v5872, %v5884
    %v5886 = vpop.f32.mrf.mxu0
    %5887 = vdwg.mxu0
    %5888 = vmatpush.bf16.msra.mxu0 %v4155
    %5889 = vmatpush.bf16.msra.mxu0 %v4151
    %5890 = vmatpush.bf16.msra.mxu0 %v4147
    %5891 = vmatpush.bf16.msra.mxu0 %v4143
    %5892 = vmatpush.bf16.msra.mxu0 %v4139
    %5893 = vmatpush.bf16.msra.mxu0 %v4135
    %5894 = vmatpush.bf16.msra.mxu0 %v4131
    %5895 = vmatpush.bf16.msra.mxu0 %v4127
    %5896 = vmatmul.bf16.gmra.mxu0 %v1130
    %v5897 = vpop.f32.mrf.mxu0
    %v5898 = vadd.f32 %v5885, %v5897
    %v5899 = vpop.f32.mrf.mxu0
    %5900 = vdwg.mxu0
    %5901 = vmatpush.bf16.msra.mxu0 %v4187
    %5902 = vmatpush.bf16.msra.mxu0 %v4183
    %5903 = vmatpush.bf16.msra.mxu0 %v4179
    %5904 = vmatpush.bf16.msra.mxu0 %v4175
    %5905 = vmatpush.bf16.msra.mxu0 %v4171
    %5906 = vmatpush.bf16.msra.mxu0 %v4167
    %5907 = vmatpush.bf16.msra.mxu0 %v4163
    %5908 = vmatpush.bf16.msra.mxu0 %v4159
    %5909 = vmatmul.bf16.gmra.mxu0 %v1131
    %v5910 = vpop.f32.mrf.mxu0
    %v5911 = vadd.f32 %v5898, %v5910
    %v5912 = vpop.f32.mrf.mxu0
    %5913 = vdwg.mxu0
    %5914 = vmatpush.bf16.msra.mxu0 %v4219
    %5915 = vmatpush.bf16.msra.mxu0 %v4215
    %5916 = vmatpush.bf16.msra.mxu0 %v4211
    %5917 = vmatpush.bf16.msra.mxu0 %v4207
    %5918 = vmatpush.bf16.msra.mxu0 %v4203
    %5919 = vmatpush.bf16.msra.mxu0 %v4199
    %5920 = vmatpush.bf16.msra.mxu0 %v4195
    %5921 = vmatpush.bf16.msra.mxu0 %v4191
    %5922 = vmatmul.bf16.gmra.mxu0 %v1132
    %v5923 = vpop.f32.mrf.mxu0
    %v5924 = vadd.f32 %v5911, %v5923
    %v5925 = vpop.f32.mrf.mxu0
    %5926 = vdwg.mxu0
    %5927 = vmatpush.bf16.msra.mxu0 %v4251
    %5928 = vmatpush.bf16.msra.mxu0 %v4247
    %5929 = vmatpush.bf16.msra.mxu0 %v4243
    %5930 = vmatpush.bf16.msra.mxu0 %v4239
    %5931 = vmatpush.bf16.msra.mxu0 %v4235
    %5932 = vmatpush.bf16.msra.mxu0 %v4231
    %5933 = vmatpush.bf16.msra.mxu0 %v4227
    %5934 = vmatpush.bf16.msra.mxu0 %v4223
    %5935 = vmatmul.bf16.gmra.mxu0 %v1133
    %v5936 = vpop.f32.mrf.mxu0
    %v5937 = vadd.f32 %v5924, %v5936
    %v5938 = vpop.f32.mrf.mxu0
    %5939 = vdwg.mxu0
    %5940 = vmatpush.bf16.msra.mxu0 %v4283
    %5941 = vmatpush.bf16.msra.mxu0 %v4279
    %5942 = vmatpush.bf16.msra.mxu0 %v4275
    %5943 = vmatpush.bf16.msra.mxu0 %v4271
    %5944 = vmatpush.bf16.msra.mxu0 %v4267
    %5945 = vmatpush.bf16.msra.mxu0 %v4263
    %5946 = vmatpush.bf16.msra.mxu0 %v4259
    %5947 = vmatpush.bf16.msra.mxu0 %v4255
    %5948 = vmatmul.bf16.gmra.mxu0 %v1134
    %v5949 = vpop.f32.mrf.mxu0
    %v5950 = vadd.f32 %v5937, %v5949
    %v5951 = vpop.f32.mrf.mxu0
    %5952 = vdwg.mxu0
    %5953 = vmatpush.bf16.msra.mxu0 %v4315
    %5954 = vmatpush.bf16.msra.mxu0 %v4311
    %5955 = vmatpush.bf16.msra.mxu0 %v4307
    %5956 = vmatpush.bf16.msra.mxu0 %v4303
    %5957 = vmatpush.bf16.msra.mxu0 %v4299
    %5958 = vmatpush.bf16.msra.mxu0 %v4295
    %5959 = vmatpush.bf16.msra.mxu0 %v4291
    %5960 = vmatpush.bf16.msra.mxu0 %v4287
    %5961 = vmatmul.bf16.gmra.mxu0 %v1135
    %v5962 = vpop.f32.mrf.mxu0
    %v5963 = vadd.f32 %v5950, %v5962
    %v5964 = vpop.f32.mrf.mxu0
    %5965 = vdwg.mxu0
    %5966 = vmatpush.bf16.msra.mxu0 %v4347
    %5967 = vmatpush.bf16.msra.mxu0 %v4343
    %5968 = vmatpush.bf16.msra.mxu0 %v4339
    %5969 = vmatpush.bf16.msra.mxu0 %v4335
    %5970 = vmatpush.bf16.msra.mxu0 %v4331
    %5971 = vmatpush.bf16.msra.mxu0 %v4327
    %5972 = vmatpush.bf16.msra.mxu0 %v4323
    %5973 = vmatpush.bf16.msra.mxu0 %v4319
    %5974 = vmatmul.bf16.gmra.mxu0 %v1136
    %v5975 = vpop.f32.mrf.mxu0
    %v5976 = vadd.f32 %v5963, %v5975
    %v5977 = vpop.f32.mrf.mxu0
    %5978 = vdwg.mxu0
    %5979 = vmatpush.bf16.msra.mxu0 %v4379
    %5980 = vmatpush.bf16.msra.mxu0 %v4375
    %5981 = vmatpush.bf16.msra.mxu0 %v4371
    %5982 = vmatpush.bf16.msra.mxu0 %v4367
    %5983 = vmatpush.bf16.msra.mxu0 %v4363
    %5984 = vmatpush.bf16.msra.mxu0 %v4359
    %5985 = vmatpush.bf16.msra.mxu0 %v4355
    %5986 = vmatpush.bf16.msra.mxu0 %v4351
    %5987 = vmatmul.bf16.gmra.mxu0 %v1137
    %v5988 = vpop.f32.mrf.mxu0
    %v5989 = vadd.f32 %v5976, %v5988
    %v5990 = vpop.f32.mrf.mxu0
    %5991 = vdwg.mxu0
    %5992 = vmatpush.bf16.msra.mxu0 %v4411
    %5993 = vmatpush.bf16.msra.mxu0 %v4407
    %5994 = vmatpush.bf16.msra.mxu0 %v4403
    %5995 = vmatpush.bf16.msra.mxu0 %v4399
    %5996 = vmatpush.bf16.msra.mxu0 %v4395
    %5997 = vmatpush.bf16.msra.mxu0 %v4391
    %5998 = vmatpush.bf16.msra.mxu0 %v4387
    %5999 = vmatpush.bf16.msra.mxu0 %v4383
    %6000 = vmatmul.bf16.gmra.mxu0 %v1138
    %v6001 = vpop.f32.mrf.mxu0
    %v6002 = vadd.f32 %v5989, %v6001
    %v6003 = vpop.f32.mrf.mxu0
    %6004 = vdwg.mxu0
    %6005 = vmatpush.bf16.msra.mxu0 %v4443
    %6006 = vmatpush.bf16.msra.mxu0 %v4439
    %6007 = vmatpush.bf16.msra.mxu0 %v4435
    %6008 = vmatpush.bf16.msra.mxu0 %v4431
    %6009 = vmatpush.bf16.msra.mxu0 %v4427
    %6010 = vmatpush.bf16.msra.mxu0 %v4423
    %6011 = vmatpush.bf16.msra.mxu0 %v4419
    %6012 = vmatpush.bf16.msra.mxu0 %v4415
    %6013 = vmatmul.bf16.gmra.mxu0 %v1139
    %v6014 = vpop.f32.mrf.mxu0
    %v6015 = vadd.f32 %v6002, %v6014
    %v6016 = vpop.f32.mrf.mxu0
    %6017 = vdwg.mxu0
    %6018 = vmatpush.bf16.msra.mxu0 %v4475
    %6019 = vmatpush.bf16.msra.mxu0 %v4471
    %6020 = vmatpush.bf16.msra.mxu0 %v4467
    %6021 = vmatpush.bf16.msra.mxu0 %v4463
    %6022 = vmatpush.bf16.msra.mxu0 %v4459
    %6023 = vmatpush.bf16.msra.mxu0 %v4455
    %6024 = vmatpush.bf16.msra.mxu0 %v4451
    %6025 = vmatpush.bf16.msra.mxu0 %v4447
    %6026 = vmatmul.bf16.gmra.mxu0 %v1140
    %v6027 = vpop.f32.mrf.mxu0
    %v6028 = vadd.f32 %v6015, %v6027
    %v6029 = vpop.f32.mrf.mxu0
    %6030 = vdwg.mxu0
    %6031 = vmatpush.bf16.msra.mxu0 %v4507
    %6032 = vmatpush.bf16.msra.mxu0 %v4503
    %6033 = vmatpush.bf16.msra.mxu0 %v4499
    %6034 = vmatpush.bf16.msra.mxu0 %v4495
    %6035 = vmatpush.bf16.msra.mxu0 %v4491
    %6036 = vmatpush.bf16.msra.mxu0 %v4487
    %6037 = vmatpush.bf16.msra.mxu0 %v4483
    %6038 = vmatpush.bf16.msra.mxu0 %v4479
    %6039 = vmatmul.bf16.gmra.mxu0 %v1141
    %v6040 = vpop.f32.mrf.mxu0
    %v6041 = vadd.f32 %v6028, %v6040
    %v6042 = vpop.f32.mrf.mxu0
    %6043 = vdwg.mxu0
    %6044 = vmatpush.bf16.msra.mxu0 %v4539
    %6045 = vmatpush.bf16.msra.mxu0 %v4535
    %6046 = vmatpush.bf16.msra.mxu0 %v4531
    %6047 = vmatpush.bf16.msra.mxu0 %v4527
    %6048 = vmatpush.bf16.msra.mxu0 %v4523
    %6049 = vmatpush.bf16.msra.mxu0 %v4519
    %6050 = vmatpush.bf16.msra.mxu0 %v4515
    %6051 = vmatpush.bf16.msra.mxu0 %v4511
    %6052 = vmatmul.bf16.gmra.mxu0 %v1142
    %v6053 = vpop.f32.mrf.mxu0
    %v6054 = vadd.f32 %v6041, %v6053
    %v6055 = vpop.f32.mrf.mxu0
    %6056 = vdwg.mxu0
    %6057 = vmatpush.bf16.msra.mxu0 %v4571
    %6058 = vmatpush.bf16.msra.mxu0 %v4567
    %6059 = vmatpush.bf16.msra.mxu0 %v4563
    %6060 = vmatpush.bf16.msra.mxu0 %v4559
    %6061 = vmatpush.bf16.msra.mxu0 %v4555
    %6062 = vmatpush.bf16.msra.mxu0 %v4551
    %6063 = vmatpush.bf16.msra.mxu0 %v4547
    %6064 = vmatpush.bf16.msra.mxu0 %v4543
    %6065 = vmatmul.bf16.gmra.mxu0 %v1143
    %v6066 = vpop.f32.mrf.mxu0
    %v6067 = vadd.f32 %v6054, %v6066
    %v6068 = vpop.f32.mrf.mxu0
    %6069 = vdwg.mxu0
    %6070 = vmatpush.bf16.msra.mxu0 %v4603
    %6071 = vmatpush.bf16.msra.mxu0 %v4599
    %6072 = vmatpush.bf16.msra.mxu0 %v4595
    %6073 = vmatpush.bf16.msra.mxu0 %v4591
    %6074 = vmatpush.bf16.msra.mxu0 %v4587
    %6075 = vmatpush.bf16.msra.mxu0 %v4583
    %6076 = vmatpush.bf16.msra.mxu0 %v4579
    %6077 = vmatpush.bf16.msra.mxu0 %v4575
    %6078 = vmatmul.bf16.gmra.mxu0 %v1144
    %v6079 = vpop.f32.mrf.mxu0
    %v6080 = vadd.f32 %v6067, %v6079
    %v6081 = vpop.f32.mrf.mxu0
    %6082 = vdwg.mxu0
    %6083 = vmatpush.bf16.msra.mxu0 %v4635
    %6084 = vmatpush.bf16.msra.mxu0 %v4631
    %6085 = vmatpush.bf16.msra.mxu0 %v4627
    %6086 = vmatpush.bf16.msra.mxu0 %v4623
    %6087 = vmatpush.bf16.msra.mxu0 %v4619
    %6088 = vmatpush.bf16.msra.mxu0 %v4615
    %6089 = vmatpush.bf16.msra.mxu0 %v4611
    %6090 = vmatpush.bf16.msra.mxu0 %v4607
    %6091 = vmatmul.bf16.gmra.mxu0 %v1145
    %v6092 = vpop.f32.mrf.mxu0
    %v6093 = vadd.f32 %v6080, %v6092
    %v6094 = vpop.f32.mrf.mxu0
    %6095 = vdwg.mxu0
    %6096 = vmatpush.bf16.msra.mxu0 %v4667
    %6097 = vmatpush.bf16.msra.mxu0 %v4663
    %6098 = vmatpush.bf16.msra.mxu0 %v4659
    %6099 = vmatpush.bf16.msra.mxu0 %v4655
    %6100 = vmatpush.bf16.msra.mxu0 %v4651
    %6101 = vmatpush.bf16.msra.mxu0 %v4647
    %6102 = vmatpush.bf16.msra.mxu0 %v4643
    %6103 = vmatpush.bf16.msra.mxu0 %v4639
    %6104 = vmatmul.bf16.gmra.mxu0 %v1146
    %v6105 = vpop.f32.mrf.mxu0
    %v6106 = vadd.f32 %v6093, %v6105
    %v6107 = vpop.f32.mrf.mxu0
    %6108 = vdwg.mxu0
    %6109 = vmatpush.bf16.msra.mxu0 %v4699
    %6110 = vmatpush.bf16.msra.mxu0 %v4695
    %6111 = vmatpush.bf16.msra.mxu0 %v4691
    %6112 = vmatpush.bf16.msra.mxu0 %v4687
    %6113 = vmatpush.bf16.msra.mxu0 %v4683
    %6114 = vmatpush.bf16.msra.mxu0 %v4679
    %6115 = vmatpush.bf16.msra.mxu0 %v4675
    %6116 = vmatpush.bf16.msra.mxu0 %v4671
    %6117 = vmatmul.bf16.gmra.mxu0 %v1147
    %v6118 = vpop.f32.mrf.mxu0
    %v6119 = vadd.f32 %v6106, %v6118
    %v6120 = vpop.f32.mrf.mxu0
    %6121 = vdwg.mxu0
    %6122 = vmatpush.bf16.msra.mxu0 %v4731
    %6123 = vmatpush.bf16.msra.mxu0 %v4727
    %6124 = vmatpush.bf16.msra.mxu0 %v4723
    %6125 = vmatpush.bf16.msra.mxu0 %v4719
    %6126 = vmatpush.bf16.msra.mxu0 %v4715
    %6127 = vmatpush.bf16.msra.mxu0 %v4711
    %6128 = vmatpush.bf16.msra.mxu0 %v4707
    %6129 = vmatpush.bf16.msra.mxu0 %v4703
    %6130 = vmatmul.bf16.gmra.mxu0 %v1148
    %v6131 = vpop.f32.mrf.mxu0
    %v6132 = vadd.f32 %v6119, %v6131
    %v6133 = vpop.f32.mrf.mxu0
    %6134 = vdwg.mxu0
    %6135 = vmatpush.bf16.msra.mxu0 %v4763
    %6136 = vmatpush.bf16.msra.mxu0 %v4759
    %6137 = vmatpush.bf16.msra.mxu0 %v4755
    %6138 = vmatpush.bf16.msra.mxu0 %v4751
    %6139 = vmatpush.bf16.msra.mxu0 %v4747
    %6140 = vmatpush.bf16.msra.mxu0 %v4743
    %6141 = vmatpush.bf16.msra.mxu0 %v4739
    %6142 = vmatpush.bf16.msra.mxu0 %v4735
    %6143 = vmatmul.bf16.gmra.mxu0 %v1149
    %v6144 = vpop.f32.mrf.mxu0
    %v6145 = vadd.f32 %v6132, %v6144
    %v6146 = vpop.f32.mrf.mxu0
    %6147 = vdwg.mxu0
    %6148 = vmatpush.bf16.msra.mxu0 %v4795
    %6149 = vmatpush.bf16.msra.mxu0 %v4791
    %6150 = vmatpush.bf16.msra.mxu0 %v4787
    %6151 = vmatpush.bf16.msra.mxu0 %v4783
    %6152 = vmatpush.bf16.msra.mxu0 %v4779
    %6153 = vmatpush.bf16.msra.mxu0 %v4775
    %6154 = vmatpush.bf16.msra.mxu0 %v4771
    %6155 = vmatpush.bf16.msra.mxu0 %v4767
    %6156 = vmatmul.bf16.gmra.mxu0 %v1150
    %v6157 = vpop.f32.mrf.mxu0
    %v6158 = vadd.f32 %v6145, %v6157
    %v6159 = vpop.f32.mrf.mxu0
    %6160 = vdwg.mxu0
    %6161 = vmatpush.bf16.msra.mxu0 %v4827
    %6162 = vmatpush.bf16.msra.mxu0 %v4823
    %6163 = vmatpush.bf16.msra.mxu0 %v4819
    %6164 = vmatpush.bf16.msra.mxu0 %v4815
    %6165 = vmatpush.bf16.msra.mxu0 %v4811
    %6166 = vmatpush.bf16.msra.mxu0 %v4807
    %6167 = vmatpush.bf16.msra.mxu0 %v4803
    %6168 = vmatpush.bf16.msra.mxu0 %v4799
    %6169 = vmatmul.bf16.gmra.mxu0 %v1151
    %v6170 = vpop.f32.mrf.mxu0
    %v6171 = vadd.f32 %v6158, %v6170
    %v6172 = vpop.f32.mrf.mxu0
    %6173 = vdwg.mxu0
    %6174 = vmatpush.bf16.msra.mxu0 %v4859
    %6175 = vmatpush.bf16.msra.mxu0 %v4855
    %6176 = vmatpush.bf16.msra.mxu0 %v4851
    %6177 = vmatpush.bf16.msra.mxu0 %v4847
    %6178 = vmatpush.bf16.msra.mxu0 %v4843
    %6179 = vmatpush.bf16.msra.mxu0 %v4839
    %6180 = vmatpush.bf16.msra.mxu0 %v4835
    %6181 = vmatpush.bf16.msra.mxu0 %v4831
    %6182 = vmatmul.bf16.gmra.mxu0 %v1152
    %v6183 = vpop.f32.mrf.mxu0
    %v6184 = vadd.f32 %v6171, %v6183
    %v6185 = vpop.f32.mrf.mxu0
    %6186 = vdwg.mxu0
    %6187 = vmatpush.bf16.msra.mxu0 %v4891
    %6188 = vmatpush.bf16.msra.mxu0 %v4887
    %6189 = vmatpush.bf16.msra.mxu0 %v4883
    %6190 = vmatpush.bf16.msra.mxu0 %v4879
    %6191 = vmatpush.bf16.msra.mxu0 %v4875
    %6192 = vmatpush.bf16.msra.mxu0 %v4871
    %6193 = vmatpush.bf16.msra.mxu0 %v4867
    %6194 = vmatpush.bf16.msra.mxu0 %v4863
    %6195 = vmatmul.bf16.gmra.mxu0 %v1153
    %v6196 = vpop.f32.mrf.mxu0
    %v6197 = vadd.f32 %v6184, %v6196
    %v6198 = vpop.f32.mrf.mxu0
    %6199 = vdwg.mxu0
    %6200 = vmatpush.bf16.msra.mxu0 %v3996
    %6201 = vmatpush.bf16.msra.mxu0 %v3992
    %6202 = vmatpush.bf16.msra.mxu0 %v3988
    %6203 = vmatpush.bf16.msra.mxu0 %v3984
    %6204 = vmatpush.bf16.msra.mxu0 %v3980
    %6205 = vmatpush.bf16.msra.mxu0 %v3976
    %6206 = vmatpush.bf16.msra.mxu0 %v3972
    %6207 = vmatpush.bf16.msra.mxu0 %v3968
    %6208 = vmatmul.bf16.gmra.mxu0 %v1125
    %v6209 = vpop.f32.mrf.mxu0
    %v6210 = vadd.f32 %v1074, %v6209
    %v6211 = vpop.f32.mrf.mxu0
    %6212 = vdwg.mxu0
    %6213 = vmatpush.bf16.msra.mxu0 %v4028
    %6214 = vmatpush.bf16.msra.mxu0 %v4024
    %6215 = vmatpush.bf16.msra.mxu0 %v4020
    %6216 = vmatpush.bf16.msra.mxu0 %v4016
    %6217 = vmatpush.bf16.msra.mxu0 %v4012
    %6218 = vmatpush.bf16.msra.mxu0 %v4008
    %6219 = vmatpush.bf16.msra.mxu0 %v4004
    %6220 = vmatpush.bf16.msra.mxu0 %v4000
    %6221 = vmatmul.bf16.gmra.mxu0 %v1126
    %v6222 = vpop.f32.mrf.mxu0
    %v6223 = vadd.f32 %v6210, %v6222
    %v6224 = vpop.f32.mrf.mxu0
    %6225 = vdwg.mxu0
    %6226 = vmatpush.bf16.msra.mxu0 %v4060
    %6227 = vmatpush.bf16.msra.mxu0 %v4056
    %6228 = vmatpush.bf16.msra.mxu0 %v4052
    %6229 = vmatpush.bf16.msra.mxu0 %v4048
    %6230 = vmatpush.bf16.msra.mxu0 %v4044
    %6231 = vmatpush.bf16.msra.mxu0 %v4040
    %6232 = vmatpush.bf16.msra.mxu0 %v4036
    %6233 = vmatpush.bf16.msra.mxu0 %v4032
    %6234 = vmatmul.bf16.gmra.mxu0 %v1127
    %v6235 = vpop.f32.mrf.mxu0
    %v6236 = vadd.f32 %v6223, %v6235
    %v6237 = vpop.f32.mrf.mxu0
    %6238 = vdwg.mxu0
    %6239 = vmatpush.bf16.msra.mxu0 %v4092
    %6240 = vmatpush.bf16.msra.mxu0 %v4088
    %6241 = vmatpush.bf16.msra.mxu0 %v4084
    %6242 = vmatpush.bf16.msra.mxu0 %v4080
    %6243 = vmatpush.bf16.msra.mxu0 %v4076
    %6244 = vmatpush.bf16.msra.mxu0 %v4072
    %6245 = vmatpush.bf16.msra.mxu0 %v4068
    %6246 = vmatpush.bf16.msra.mxu0 %v4064
    %6247 = vmatmul.bf16.gmra.mxu0 %v1128
    %v6248 = vpop.f32.mrf.mxu0
    %v6249 = vadd.f32 %v6236, %v6248
    %v6250 = vpop.f32.mrf.mxu0
    %6251 = vdwg.mxu0
    %6252 = vmatpush.bf16.msra.mxu0 %v4124
    %6253 = vmatpush.bf16.msra.mxu0 %v4120
    %6254 = vmatpush.bf16.msra.mxu0 %v4116
    %6255 = vmatpush.bf16.msra.mxu0 %v4112
    %6256 = vmatpush.bf16.msra.mxu0 %v4108
    %6257 = vmatpush.bf16.msra.mxu0 %v4104
    %6258 = vmatpush.bf16.msra.mxu0 %v4100
    %6259 = vmatpush.bf16.msra.mxu0 %v4096
    %6260 = vmatmul.bf16.gmra.mxu0 %v1129
    %v6261 = vpop.f32.mrf.mxu0
    %v6262 = vadd.f32 %v6249, %v6261
    %v6263 = vpop.f32.mrf.mxu0
    %6264 = vdwg.mxu0
    %6265 = vmatpush.bf16.msra.mxu0 %v4156
    %6266 = vmatpush.bf16.msra.mxu0 %v4152
    %6267 = vmatpush.bf16.msra.mxu0 %v4148
    %6268 = vmatpush.bf16.msra.mxu0 %v4144
    %6269 = vmatpush.bf16.msra.mxu0 %v4140
    %6270 = vmatpush.bf16.msra.mxu0 %v4136
    %6271 = vmatpush.bf16.msra.mxu0 %v4132
    %6272 = vmatpush.bf16.msra.mxu0 %v4128
    %6273 = vmatmul.bf16.gmra.mxu0 %v1130
    %v6274 = vpop.f32.mrf.mxu0
    %v6275 = vadd.f32 %v6262, %v6274
    %v6276 = vpop.f32.mrf.mxu0
    %6277 = vdwg.mxu0
    %6278 = vmatpush.bf16.msra.mxu0 %v4188
    %6279 = vmatpush.bf16.msra.mxu0 %v4184
    %6280 = vmatpush.bf16.msra.mxu0 %v4180
    %6281 = vmatpush.bf16.msra.mxu0 %v4176
    %6282 = vmatpush.bf16.msra.mxu0 %v4172
    %6283 = vmatpush.bf16.msra.mxu0 %v4168
    %6284 = vmatpush.bf16.msra.mxu0 %v4164
    %6285 = vmatpush.bf16.msra.mxu0 %v4160
    %6286 = vmatmul.bf16.gmra.mxu0 %v1131
    %v6287 = vpop.f32.mrf.mxu0
    %v6288 = vadd.f32 %v6275, %v6287
    %v6289 = vpop.f32.mrf.mxu0
    %6290 = vdwg.mxu0
    %6291 = vmatpush.bf16.msra.mxu0 %v4220
    %6292 = vmatpush.bf16.msra.mxu0 %v4216
    %6293 = vmatpush.bf16.msra.mxu0 %v4212
    %6294 = vmatpush.bf16.msra.mxu0 %v4208
    %6295 = vmatpush.bf16.msra.mxu0 %v4204
    %6296 = vmatpush.bf16.msra.mxu0 %v4200
    %6297 = vmatpush.bf16.msra.mxu0 %v4196
    %6298 = vmatpush.bf16.msra.mxu0 %v4192
    %6299 = vmatmul.bf16.gmra.mxu0 %v1132
    %v6300 = vpop.f32.mrf.mxu0
    %v6301 = vadd.f32 %v6288, %v6300
    %v6302 = vpop.f32.mrf.mxu0
    %6303 = vdwg.mxu0
    %6304 = vmatpush.bf16.msra.mxu0 %v4252
    %6305 = vmatpush.bf16.msra.mxu0 %v4248
    %6306 = vmatpush.bf16.msra.mxu0 %v4244
    %6307 = vmatpush.bf16.msra.mxu0 %v4240
    %6308 = vmatpush.bf16.msra.mxu0 %v4236
    %6309 = vmatpush.bf16.msra.mxu0 %v4232
    %6310 = vmatpush.bf16.msra.mxu0 %v4228
    %6311 = vmatpush.bf16.msra.mxu0 %v4224
    %6312 = vmatmul.bf16.gmra.mxu0 %v1133
    %v6313 = vpop.f32.mrf.mxu0
    %v6314 = vadd.f32 %v6301, %v6313
    %v6315 = vpop.f32.mrf.mxu0
    %6316 = vdwg.mxu0
    %6317 = vmatpush.bf16.msra.mxu0 %v4284
    %6318 = vmatpush.bf16.msra.mxu0 %v4280
    %6319 = vmatpush.bf16.msra.mxu0 %v4276
    %6320 = vmatpush.bf16.msra.mxu0 %v4272
    %6321 = vmatpush.bf16.msra.mxu0 %v4268
    %6322 = vmatpush.bf16.msra.mxu0 %v4264
    %6323 = vmatpush.bf16.msra.mxu0 %v4260
    %6324 = vmatpush.bf16.msra.mxu0 %v4256
    %6325 = vmatmul.bf16.gmra.mxu0 %v1134
    %v6326 = vpop.f32.mrf.mxu0
    %v6327 = vadd.f32 %v6314, %v6326
    %v6328 = vpop.f32.mrf.mxu0
    %6329 = vdwg.mxu0
    %6330 = vmatpush.bf16.msra.mxu0 %v4316
    %6331 = vmatpush.bf16.msra.mxu0 %v4312
    %6332 = vmatpush.bf16.msra.mxu0 %v4308
    %6333 = vmatpush.bf16.msra.mxu0 %v4304
    %6334 = vmatpush.bf16.msra.mxu0 %v4300
    %6335 = vmatpush.bf16.msra.mxu0 %v4296
    %6336 = vmatpush.bf16.msra.mxu0 %v4292
    %6337 = vmatpush.bf16.msra.mxu0 %v4288
    %6338 = vmatmul.bf16.gmra.mxu0 %v1135
    %v6339 = vpop.f32.mrf.mxu0
    %v6340 = vadd.f32 %v6327, %v6339
    %v6341 = vpop.f32.mrf.mxu0
    %6342 = vdwg.mxu0
    %6343 = vmatpush.bf16.msra.mxu0 %v4348
    %6344 = vmatpush.bf16.msra.mxu0 %v4344
    %6345 = vmatpush.bf16.msra.mxu0 %v4340
    %6346 = vmatpush.bf16.msra.mxu0 %v4336
    %6347 = vmatpush.bf16.msra.mxu0 %v4332
    %6348 = vmatpush.bf16.msra.mxu0 %v4328
    %6349 = vmatpush.bf16.msra.mxu0 %v4324
    %6350 = vmatpush.bf16.msra.mxu0 %v4320
    %6351 = vmatmul.bf16.gmra.mxu0 %v1136
    %v6352 = vpop.f32.mrf.mxu0
    %v6353 = vadd.f32 %v6340, %v6352
    %v6354 = vpop.f32.mrf.mxu0
    %6355 = vdwg.mxu0
    %6356 = vmatpush.bf16.msra.mxu0 %v4380
    %6357 = vmatpush.bf16.msra.mxu0 %v4376
    %6358 = vmatpush.bf16.msra.mxu0 %v4372
    %6359 = vmatpush.bf16.msra.mxu0 %v4368
    %6360 = vmatpush.bf16.msra.mxu0 %v4364
    %6361 = vmatpush.bf16.msra.mxu0 %v4360
    %6362 = vmatpush.bf16.msra.mxu0 %v4356
    %6363 = vmatpush.bf16.msra.mxu0 %v4352
    %6364 = vmatmul.bf16.gmra.mxu0 %v1137
    %v6365 = vpop.f32.mrf.mxu0
    %v6366 = vadd.f32 %v6353, %v6365
    %v6367 = vpop.f32.mrf.mxu0
    %6368 = vdwg.mxu0
    %6369 = vmatpush.bf16.msra.mxu0 %v4412
    %6370 = vmatpush.bf16.msra.mxu0 %v4408
    %6371 = vmatpush.bf16.msra.mxu0 %v4404
    %6372 = vmatpush.bf16.msra.mxu0 %v4400
    %6373 = vmatpush.bf16.msra.mxu0 %v4396
    %6374 = vmatpush.bf16.msra.mxu0 %v4392
    %6375 = vmatpush.bf16.msra.mxu0 %v4388
    %6376 = vmatpush.bf16.msra.mxu0 %v4384
    %6377 = vmatmul.bf16.gmra.mxu0 %v1138
    %v6378 = vpop.f32.mrf.mxu0
    %v6379 = vadd.f32 %v6366, %v6378
    %v6380 = vpop.f32.mrf.mxu0
    %6381 = vdwg.mxu0
    %6382 = vmatpush.bf16.msra.mxu0 %v4444
    %6383 = vmatpush.bf16.msra.mxu0 %v4440
    %6384 = vmatpush.bf16.msra.mxu0 %v4436
    %6385 = vmatpush.bf16.msra.mxu0 %v4432
    %6386 = vmatpush.bf16.msra.mxu0 %v4428
    %6387 = vmatpush.bf16.msra.mxu0 %v4424
    %6388 = vmatpush.bf16.msra.mxu0 %v4420
    %6389 = vmatpush.bf16.msra.mxu0 %v4416
    %6390 = vmatmul.bf16.gmra.mxu0 %v1139
    %v6391 = vpop.f32.mrf.mxu0
    %v6392 = vadd.f32 %v6379, %v6391
    %v6393 = vpop.f32.mrf.mxu0
    %6394 = vdwg.mxu0
    %6395 = vmatpush.bf16.msra.mxu0 %v4476
    %6396 = vmatpush.bf16.msra.mxu0 %v4472
    %6397 = vmatpush.bf16.msra.mxu0 %v4468
    %6398 = vmatpush.bf16.msra.mxu0 %v4464
    %6399 = vmatpush.bf16.msra.mxu0 %v4460
    %6400 = vmatpush.bf16.msra.mxu0 %v4456
    %6401 = vmatpush.bf16.msra.mxu0 %v4452
    %6402 = vmatpush.bf16.msra.mxu0 %v4448
    %6403 = vmatmul.bf16.gmra.mxu0 %v1140
    %v6404 = vpop.f32.mrf.mxu0
    %v6405 = vadd.f32 %v6392, %v6404
    %v6406 = vpop.f32.mrf.mxu0
    %6407 = vdwg.mxu0
    %6408 = vmatpush.bf16.msra.mxu0 %v4508
    %6409 = vmatpush.bf16.msra.mxu0 %v4504
    %6410 = vmatpush.bf16.msra.mxu0 %v4500
    %6411 = vmatpush.bf16.msra.mxu0 %v4496
    %6412 = vmatpush.bf16.msra.mxu0 %v4492
    %6413 = vmatpush.bf16.msra.mxu0 %v4488
    %6414 = vmatpush.bf16.msra.mxu0 %v4484
    %6415 = vmatpush.bf16.msra.mxu0 %v4480
    %6416 = vmatmul.bf16.gmra.mxu0 %v1141
    %v6417 = vpop.f32.mrf.mxu0
    %v6418 = vadd.f32 %v6405, %v6417
    %v6419 = vpop.f32.mrf.mxu0
    %6420 = vdwg.mxu0
    %6421 = vmatpush.bf16.msra.mxu0 %v4540
    %6422 = vmatpush.bf16.msra.mxu0 %v4536
    %6423 = vmatpush.bf16.msra.mxu0 %v4532
    %6424 = vmatpush.bf16.msra.mxu0 %v4528
    %6425 = vmatpush.bf16.msra.mxu0 %v4524
    %6426 = vmatpush.bf16.msra.mxu0 %v4520
    %6427 = vmatpush.bf16.msra.mxu0 %v4516
    %6428 = vmatpush.bf16.msra.mxu0 %v4512
    %6429 = vmatmul.bf16.gmra.mxu0 %v1142
    %v6430 = vpop.f32.mrf.mxu0
    %v6431 = vadd.f32 %v6418, %v6430
    %v6432 = vpop.f32.mrf.mxu0
    %6433 = vdwg.mxu0
    %6434 = vmatpush.bf16.msra.mxu0 %v4572
    %6435 = vmatpush.bf16.msra.mxu0 %v4568
    %6436 = vmatpush.bf16.msra.mxu0 %v4564
    %6437 = vmatpush.bf16.msra.mxu0 %v4560
    %6438 = vmatpush.bf16.msra.mxu0 %v4556
    %6439 = vmatpush.bf16.msra.mxu0 %v4552
    %6440 = vmatpush.bf16.msra.mxu0 %v4548
    %6441 = vmatpush.bf16.msra.mxu0 %v4544
    %6442 = vmatmul.bf16.gmra.mxu0 %v1143
    %v6443 = vpop.f32.mrf.mxu0
    %v6444 = vadd.f32 %v6431, %v6443
    %v6445 = vpop.f32.mrf.mxu0
    %6446 = vdwg.mxu0
    %6447 = vmatpush.bf16.msra.mxu0 %v4604
    %6448 = vmatpush.bf16.msra.mxu0 %v4600
    %6449 = vmatpush.bf16.msra.mxu0 %v4596
    %6450 = vmatpush.bf16.msra.mxu0 %v4592
    %6451 = vmatpush.bf16.msra.mxu0 %v4588
    %6452 = vmatpush.bf16.msra.mxu0 %v4584
    %6453 = vmatpush.bf16.msra.mxu0 %v4580
    %6454 = vmatpush.bf16.msra.mxu0 %v4576
    %6455 = vmatmul.bf16.gmra.mxu0 %v1144
    %v6456 = vpop.f32.mrf.mxu0
    %v6457 = vadd.f32 %v6444, %v6456
    %v6458 = vpop.f32.mrf.mxu0
    %6459 = vdwg.mxu0
    %6460 = vmatpush.bf16.msra.mxu0 %v4636
    %6461 = vmatpush.bf16.msra.mxu0 %v4632
    %6462 = vmatpush.bf16.msra.mxu0 %v4628
    %6463 = vmatpush.bf16.msra.mxu0 %v4624
    %6464 = vmatpush.bf16.msra.mxu0 %v4620
    %6465 = vmatpush.bf16.msra.mxu0 %v4616
    %6466 = vmatpush.bf16.msra.mxu0 %v4612
    %6467 = vmatpush.bf16.msra.mxu0 %v4608
    %6468 = vmatmul.bf16.gmra.mxu0 %v1145
    %v6469 = vpop.f32.mrf.mxu0
    %v6470 = vadd.f32 %v6457, %v6469
    %v6471 = vpop.f32.mrf.mxu0
    %6472 = vdwg.mxu0
    %6473 = vmatpush.bf16.msra.mxu0 %v4668
    %6474 = vmatpush.bf16.msra.mxu0 %v4664
    %6475 = vmatpush.bf16.msra.mxu0 %v4660
    %6476 = vmatpush.bf16.msra.mxu0 %v4656
    %6477 = vmatpush.bf16.msra.mxu0 %v4652
    %6478 = vmatpush.bf16.msra.mxu0 %v4648
    %6479 = vmatpush.bf16.msra.mxu0 %v4644
    %6480 = vmatpush.bf16.msra.mxu0 %v4640
    %6481 = vmatmul.bf16.gmra.mxu0 %v1146
    %v6482 = vpop.f32.mrf.mxu0
    %v6483 = vadd.f32 %v6470, %v6482
    %v6484 = vpop.f32.mrf.mxu0
    %6485 = vdwg.mxu0
    %6486 = vmatpush.bf16.msra.mxu0 %v4700
    %6487 = vmatpush.bf16.msra.mxu0 %v4696
    %6488 = vmatpush.bf16.msra.mxu0 %v4692
    %6489 = vmatpush.bf16.msra.mxu0 %v4688
    %6490 = vmatpush.bf16.msra.mxu0 %v4684
    %6491 = vmatpush.bf16.msra.mxu0 %v4680
    %6492 = vmatpush.bf16.msra.mxu0 %v4676
    %6493 = vmatpush.bf16.msra.mxu0 %v4672
    %6494 = vmatmul.bf16.gmra.mxu0 %v1147
    %v6495 = vpop.f32.mrf.mxu0
    %v6496 = vadd.f32 %v6483, %v6495
    %v6497 = vpop.f32.mrf.mxu0
    %6498 = vdwg.mxu0
    %6499 = vmatpush.bf16.msra.mxu0 %v4732
    %6500 = vmatpush.bf16.msra.mxu0 %v4728
    %6501 = vmatpush.bf16.msra.mxu0 %v4724
    %6502 = vmatpush.bf16.msra.mxu0 %v4720
    %6503 = vmatpush.bf16.msra.mxu0 %v4716
    %6504 = vmatpush.bf16.msra.mxu0 %v4712
    %6505 = vmatpush.bf16.msra.mxu0 %v4708
    %6506 = vmatpush.bf16.msra.mxu0 %v4704
    %6507 = vmatmul.bf16.gmra.mxu0 %v1148
    %v6508 = vpop.f32.mrf.mxu0
    %v6509 = vadd.f32 %v6496, %v6508
    %v6510 = vpop.f32.mrf.mxu0
    %6511 = vdwg.mxu0
    %6512 = vmatpush.bf16.msra.mxu0 %v4764
    %6513 = vmatpush.bf16.msra.mxu0 %v4760
    %6514 = vmatpush.bf16.msra.mxu0 %v4756
    %6515 = vmatpush.bf16.msra.mxu0 %v4752
    %6516 = vmatpush.bf16.msra.mxu0 %v4748
    %6517 = vmatpush.bf16.msra.mxu0 %v4744
    %6518 = vmatpush.bf16.msra.mxu0 %v4740
    %6519 = vmatpush.bf16.msra.mxu0 %v4736
    %6520 = vmatmul.bf16.gmra.mxu0 %v1149
    %v6521 = vpop.f32.mrf.mxu0
    %v6522 = vadd.f32 %v6509, %v6521
    %v6523 = vpop.f32.mrf.mxu0
    %6524 = vdwg.mxu0
    %6525 = vmatpush.bf16.msra.mxu0 %v4796
    %6526 = vmatpush.bf16.msra.mxu0 %v4792
    %6527 = vmatpush.bf16.msra.mxu0 %v4788
    %6528 = vmatpush.bf16.msra.mxu0 %v4784
    %6529 = vmatpush.bf16.msra.mxu0 %v4780
    %6530 = vmatpush.bf16.msra.mxu0 %v4776
    %6531 = vmatpush.bf16.msra.mxu0 %v4772
    %6532 = vmatpush.bf16.msra.mxu0 %v4768
    %6533 = vmatmul.bf16.gmra.mxu0 %v1150
    %v6534 = vpop.f32.mrf.mxu0
    %v6535 = vadd.f32 %v6522, %v6534
    %v6536 = vpop.f32.mrf.mxu0
    %6537 = vdwg.mxu0
    %6538 = vmatpush.bf16.msra.mxu0 %v4828
    %6539 = vmatpush.bf16.msra.mxu0 %v4824
    %6540 = vmatpush.bf16.msra.mxu0 %v4820
    %6541 = vmatpush.bf16.msra.mxu0 %v4816
    %6542 = vmatpush.bf16.msra.mxu0 %v4812
    %6543 = vmatpush.bf16.msra.mxu0 %v4808
    %6544 = vmatpush.bf16.msra.mxu0 %v4804
    %6545 = vmatpush.bf16.msra.mxu0 %v4800
    %6546 = vmatmul.bf16.gmra.mxu0 %v1151
    %v6547 = vpop.f32.mrf.mxu0
    %v6548 = vadd.f32 %v6535, %v6547
    %v6549 = vpop.f32.mrf.mxu0
    %6550 = vdwg.mxu0
    %6551 = vmatpush.bf16.msra.mxu0 %v4860
    %6552 = vmatpush.bf16.msra.mxu0 %v4856
    %6553 = vmatpush.bf16.msra.mxu0 %v4852
    %6554 = vmatpush.bf16.msra.mxu0 %v4848
    %6555 = vmatpush.bf16.msra.mxu0 %v4844
    %6556 = vmatpush.bf16.msra.mxu0 %v4840
    %6557 = vmatpush.bf16.msra.mxu0 %v4836
    %6558 = vmatpush.bf16.msra.mxu0 %v4832
    %6559 = vmatmul.bf16.gmra.mxu0 %v1152
    %v6560 = vpop.f32.mrf.mxu0
    %v6561 = vadd.f32 %v6548, %v6560
    %v6562 = vpop.f32.mrf.mxu0
    %6563 = vdwg.mxu0
    %6564 = vmatpush.bf16.msra.mxu0 %v4892
    %6565 = vmatpush.bf16.msra.mxu0 %v4888
    %6566 = vmatpush.bf16.msra.mxu0 %v4884
    %6567 = vmatpush.bf16.msra.mxu0 %v4880
    %6568 = vmatpush.bf16.msra.mxu0 %v4876
    %6569 = vmatpush.bf16.msra.mxu0 %v4872
    %6570 = vmatpush.bf16.msra.mxu0 %v4868
    %6571 = vmatpush.bf16.msra.mxu0 %v4864
    %6572 = vmatmul.bf16.gmra.mxu0 %v1153
    %v6573 = vpop.f32.mrf.mxu0
    %v6574 = vadd.f32 %v6561, %v6573
    %v6575 = vpop.f32.mrf.mxu0
    %6576 = vdwg.mxu0
    %6577 = vmatpush.bf16.msra.mxu0 %v3997
    %6578 = vmatpush.bf16.msra.mxu0 %v3993
    %6579 = vmatpush.bf16.msra.mxu0 %v3989
    %6580 = vmatpush.bf16.msra.mxu0 %v3985
    %6581 = vmatpush.bf16.msra.mxu0 %v3981
    %6582 = vmatpush.bf16.msra.mxu0 %v3977
    %6583 = vmatpush.bf16.msra.mxu0 %v3973
    %6584 = vmatpush.bf16.msra.mxu0 %v3969
    %6585 = vmatmul.bf16.gmra.mxu0 %v1125
    %v6586 = vpop.f32.mrf.mxu0
    %v6587 = vadd.f32 %v1075, %v6586
    %v6588 = vpop.f32.mrf.mxu0
    %6589 = vdwg.mxu0
    %6590 = vmatpush.bf16.msra.mxu0 %v4029
    %6591 = vmatpush.bf16.msra.mxu0 %v4025
    %6592 = vmatpush.bf16.msra.mxu0 %v4021
    %6593 = vmatpush.bf16.msra.mxu0 %v4017
    %6594 = vmatpush.bf16.msra.mxu0 %v4013
    %6595 = vmatpush.bf16.msra.mxu0 %v4009
    %6596 = vmatpush.bf16.msra.mxu0 %v4005
    %6597 = vmatpush.bf16.msra.mxu0 %v4001
    %6598 = vmatmul.bf16.gmra.mxu0 %v1126
    %v6599 = vpop.f32.mrf.mxu0
    %v6600 = vadd.f32 %v6587, %v6599
    %v6601 = vpop.f32.mrf.mxu0
    %6602 = vdwg.mxu0
    %6603 = vmatpush.bf16.msra.mxu0 %v4061
    %6604 = vmatpush.bf16.msra.mxu0 %v4057
    %6605 = vmatpush.bf16.msra.mxu0 %v4053
    %6606 = vmatpush.bf16.msra.mxu0 %v4049
    %6607 = vmatpush.bf16.msra.mxu0 %v4045
    %6608 = vmatpush.bf16.msra.mxu0 %v4041
    %6609 = vmatpush.bf16.msra.mxu0 %v4037
    %6610 = vmatpush.bf16.msra.mxu0 %v4033
    %6611 = vmatmul.bf16.gmra.mxu0 %v1127
    %v6612 = vpop.f32.mrf.mxu0
    %v6613 = vadd.f32 %v6600, %v6612
    %v6614 = vpop.f32.mrf.mxu0
    %6615 = vdwg.mxu0
    %6616 = vmatpush.bf16.msra.mxu0 %v4093
    %6617 = vmatpush.bf16.msra.mxu0 %v4089
    %6618 = vmatpush.bf16.msra.mxu0 %v4085
    %6619 = vmatpush.bf16.msra.mxu0 %v4081
    %6620 = vmatpush.bf16.msra.mxu0 %v4077
    %6621 = vmatpush.bf16.msra.mxu0 %v4073
    %6622 = vmatpush.bf16.msra.mxu0 %v4069
    %6623 = vmatpush.bf16.msra.mxu0 %v4065
    %6624 = vmatmul.bf16.gmra.mxu0 %v1128
    %v6625 = vpop.f32.mrf.mxu0
    %v6626 = vadd.f32 %v6613, %v6625
    %v6627 = vpop.f32.mrf.mxu0
    %6628 = vdwg.mxu0
    %6629 = vmatpush.bf16.msra.mxu0 %v4125
    %6630 = vmatpush.bf16.msra.mxu0 %v4121
    %6631 = vmatpush.bf16.msra.mxu0 %v4117
    %6632 = vmatpush.bf16.msra.mxu0 %v4113
    %6633 = vmatpush.bf16.msra.mxu0 %v4109
    %6634 = vmatpush.bf16.msra.mxu0 %v4105
    %6635 = vmatpush.bf16.msra.mxu0 %v4101
    %6636 = vmatpush.bf16.msra.mxu0 %v4097
    %6637 = vmatmul.bf16.gmra.mxu0 %v1129
    %v6638 = vpop.f32.mrf.mxu0
    %v6639 = vadd.f32 %v6626, %v6638
    %v6640 = vpop.f32.mrf.mxu0
    %6641 = vdwg.mxu0
    %6642 = vmatpush.bf16.msra.mxu0 %v4157
    %6643 = vmatpush.bf16.msra.mxu0 %v4153
    %6644 = vmatpush.bf16.msra.mxu0 %v4149
    %6645 = vmatpush.bf16.msra.mxu0 %v4145
    %6646 = vmatpush.bf16.msra.mxu0 %v4141
    %6647 = vmatpush.bf16.msra.mxu0 %v4137
    %6648 = vmatpush.bf16.msra.mxu0 %v4133
    %6649 = vmatpush.bf16.msra.mxu0 %v4129
    %6650 = vmatmul.bf16.gmra.mxu0 %v1130
    %v6651 = vpop.f32.mrf.mxu0
    %v6652 = vadd.f32 %v6639, %v6651
    %v6653 = vpop.f32.mrf.mxu0
    %6654 = vdwg.mxu0
    %6655 = vmatpush.bf16.msra.mxu0 %v4189
    %6656 = vmatpush.bf16.msra.mxu0 %v4185
    %6657 = vmatpush.bf16.msra.mxu0 %v4181
    %6658 = vmatpush.bf16.msra.mxu0 %v4177
    %6659 = vmatpush.bf16.msra.mxu0 %v4173
    %6660 = vmatpush.bf16.msra.mxu0 %v4169
    %6661 = vmatpush.bf16.msra.mxu0 %v4165
    %6662 = vmatpush.bf16.msra.mxu0 %v4161
    %6663 = vmatmul.bf16.gmra.mxu0 %v1131
    %v6664 = vpop.f32.mrf.mxu0
    %v6665 = vadd.f32 %v6652, %v6664
    %v6666 = vpop.f32.mrf.mxu0
    %6667 = vdwg.mxu0
    %6668 = vmatpush.bf16.msra.mxu0 %v4221
    %6669 = vmatpush.bf16.msra.mxu0 %v4217
    %6670 = vmatpush.bf16.msra.mxu0 %v4213
    %6671 = vmatpush.bf16.msra.mxu0 %v4209
    %6672 = vmatpush.bf16.msra.mxu0 %v4205
    %6673 = vmatpush.bf16.msra.mxu0 %v4201
    %6674 = vmatpush.bf16.msra.mxu0 %v4197
    %6675 = vmatpush.bf16.msra.mxu0 %v4193
    %6676 = vmatmul.bf16.gmra.mxu0 %v1132
    %v6677 = vpop.f32.mrf.mxu0
    %v6678 = vadd.f32 %v6665, %v6677
    %v6679 = vpop.f32.mrf.mxu0
    %6680 = vdwg.mxu0
    %6681 = vmatpush.bf16.msra.mxu0 %v4253
    %6682 = vmatpush.bf16.msra.mxu0 %v4249
    %6683 = vmatpush.bf16.msra.mxu0 %v4245
    %6684 = vmatpush.bf16.msra.mxu0 %v4241
    %6685 = vmatpush.bf16.msra.mxu0 %v4237
    %6686 = vmatpush.bf16.msra.mxu0 %v4233
    %6687 = vmatpush.bf16.msra.mxu0 %v4229
    %6688 = vmatpush.bf16.msra.mxu0 %v4225
    %6689 = vmatmul.bf16.gmra.mxu0 %v1133
    %v6690 = vpop.f32.mrf.mxu0
    %v6691 = vadd.f32 %v6678, %v6690
    %v6692 = vpop.f32.mrf.mxu0
    %6693 = vdwg.mxu0
    %6694 = vmatpush.bf16.msra.mxu0 %v4285
    %6695 = vmatpush.bf16.msra.mxu0 %v4281
    %6696 = vmatpush.bf16.msra.mxu0 %v4277
    %6697 = vmatpush.bf16.msra.mxu0 %v4273
    %6698 = vmatpush.bf16.msra.mxu0 %v4269
    %6699 = vmatpush.bf16.msra.mxu0 %v4265
    %6700 = vmatpush.bf16.msra.mxu0 %v4261
    %6701 = vmatpush.bf16.msra.mxu0 %v4257
    %6702 = vmatmul.bf16.gmra.mxu0 %v1134
    %v6703 = vpop.f32.mrf.mxu0
    %v6704 = vadd.f32 %v6691, %v6703
    %v6705 = vpop.f32.mrf.mxu0
    %6706 = vdwg.mxu0
    %6707 = vmatpush.bf16.msra.mxu0 %v4317
    %6708 = vmatpush.bf16.msra.mxu0 %v4313
    %6709 = vmatpush.bf16.msra.mxu0 %v4309
    %6710 = vmatpush.bf16.msra.mxu0 %v4305
    %6711 = vmatpush.bf16.msra.mxu0 %v4301
    %6712 = vmatpush.bf16.msra.mxu0 %v4297
    %6713 = vmatpush.bf16.msra.mxu0 %v4293
    %6714 = vmatpush.bf16.msra.mxu0 %v4289
    %6715 = vmatmul.bf16.gmra.mxu0 %v1135
    %v6716 = vpop.f32.mrf.mxu0
    %v6717 = vadd.f32 %v6704, %v6716
    %v6718 = vpop.f32.mrf.mxu0
    %6719 = vdwg.mxu0
    %6720 = vmatpush.bf16.msra.mxu0 %v4349
    %6721 = vmatpush.bf16.msra.mxu0 %v4345
    %6722 = vmatpush.bf16.msra.mxu0 %v4341
    %6723 = vmatpush.bf16.msra.mxu0 %v4337
    %6724 = vmatpush.bf16.msra.mxu0 %v4333
    %6725 = vmatpush.bf16.msra.mxu0 %v4329
    %6726 = vmatpush.bf16.msra.mxu0 %v4325
    %6727 = vmatpush.bf16.msra.mxu0 %v4321
    %6728 = vmatmul.bf16.gmra.mxu0 %v1136
    %v6729 = vpop.f32.mrf.mxu0
    %v6730 = vadd.f32 %v6717, %v6729
    %v6731 = vpop.f32.mrf.mxu0
    %6732 = vdwg.mxu0
    %6733 = vmatpush.bf16.msra.mxu0 %v4381
    %6734 = vmatpush.bf16.msra.mxu0 %v4377
    %6735 = vmatpush.bf16.msra.mxu0 %v4373
    %6736 = vmatpush.bf16.msra.mxu0 %v4369
    %6737 = vmatpush.bf16.msra.mxu0 %v4365
    %6738 = vmatpush.bf16.msra.mxu0 %v4361
    %6739 = vmatpush.bf16.msra.mxu0 %v4357
    %6740 = vmatpush.bf16.msra.mxu0 %v4353
    %6741 = vmatmul.bf16.gmra.mxu0 %v1137
    %v6742 = vpop.f32.mrf.mxu0
    %v6743 = vadd.f32 %v6730, %v6742
    %v6744 = vpop.f32.mrf.mxu0
    %6745 = vdwg.mxu0
    %6746 = vmatpush.bf16.msra.mxu0 %v4413
    %6747 = vmatpush.bf16.msra.mxu0 %v4409
    %6748 = vmatpush.bf16.msra.mxu0 %v4405
    %6749 = vmatpush.bf16.msra.mxu0 %v4401
    %6750 = vmatpush.bf16.msra.mxu0 %v4397
    %6751 = vmatpush.bf16.msra.mxu0 %v4393
    %6752 = vmatpush.bf16.msra.mxu0 %v4389
    %6753 = vmatpush.bf16.msra.mxu0 %v4385
    %6754 = vmatmul.bf16.gmra.mxu0 %v1138
    %v6755 = vpop.f32.mrf.mxu0
    %v6756 = vadd.f32 %v6743, %v6755
    %v6757 = vpop.f32.mrf.mxu0
    %6758 = vdwg.mxu0
    %6759 = vmatpush.bf16.msra.mxu0 %v4445
    %6760 = vmatpush.bf16.msra.mxu0 %v4441
    %6761 = vmatpush.bf16.msra.mxu0 %v4437
    %6762 = vmatpush.bf16.msra.mxu0 %v4433
    %6763 = vmatpush.bf16.msra.mxu0 %v4429
    %6764 = vmatpush.bf16.msra.mxu0 %v4425
    %6765 = vmatpush.bf16.msra.mxu0 %v4421
    %6766 = vmatpush.bf16.msra.mxu0 %v4417
    %6767 = vmatmul.bf16.gmra.mxu0 %v1139
    %v6768 = vpop.f32.mrf.mxu0
    %v6769 = vadd.f32 %v6756, %v6768
    %v6770 = vpop.f32.mrf.mxu0
    %6771 = vdwg.mxu0
    %6772 = vmatpush.bf16.msra.mxu0 %v4477
    %6773 = vmatpush.bf16.msra.mxu0 %v4473
    %6774 = vmatpush.bf16.msra.mxu0 %v4469
    %6775 = vmatpush.bf16.msra.mxu0 %v4465
    %6776 = vmatpush.bf16.msra.mxu0 %v4461
    %6777 = vmatpush.bf16.msra.mxu0 %v4457
    %6778 = vmatpush.bf16.msra.mxu0 %v4453
    %6779 = vmatpush.bf16.msra.mxu0 %v4449
    %6780 = vmatmul.bf16.gmra.mxu0 %v1140
    %v6781 = vpop.f32.mrf.mxu0
    %v6782 = vadd.f32 %v6769, %v6781
    %v6783 = vpop.f32.mrf.mxu0
    %6784 = vdwg.mxu0
    %6785 = vmatpush.bf16.msra.mxu0 %v4509
    %6786 = vmatpush.bf16.msra.mxu0 %v4505
    %6787 = vmatpush.bf16.msra.mxu0 %v4501
    %6788 = vmatpush.bf16.msra.mxu0 %v4497
    %6789 = vmatpush.bf16.msra.mxu0 %v4493
    %6790 = vmatpush.bf16.msra.mxu0 %v4489
    %6791 = vmatpush.bf16.msra.mxu0 %v4485
    %6792 = vmatpush.bf16.msra.mxu0 %v4481
    %6793 = vmatmul.bf16.gmra.mxu0 %v1141
    %v6794 = vpop.f32.mrf.mxu0
    %v6795 = vadd.f32 %v6782, %v6794
    %v6796 = vpop.f32.mrf.mxu0
    %6797 = vdwg.mxu0
    %6798 = vmatpush.bf16.msra.mxu0 %v4541
    %6799 = vmatpush.bf16.msra.mxu0 %v4537
    %6800 = vmatpush.bf16.msra.mxu0 %v4533
    %6801 = vmatpush.bf16.msra.mxu0 %v4529
    %6802 = vmatpush.bf16.msra.mxu0 %v4525
    %6803 = vmatpush.bf16.msra.mxu0 %v4521
    %6804 = vmatpush.bf16.msra.mxu0 %v4517
    %6805 = vmatpush.bf16.msra.mxu0 %v4513
    %6806 = vmatmul.bf16.gmra.mxu0 %v1142
    %v6807 = vpop.f32.mrf.mxu0
    %v6808 = vadd.f32 %v6795, %v6807
    %v6809 = vpop.f32.mrf.mxu0
    %6810 = vdwg.mxu0
    %6811 = vmatpush.bf16.msra.mxu0 %v4573
    %6812 = vmatpush.bf16.msra.mxu0 %v4569
    %6813 = vmatpush.bf16.msra.mxu0 %v4565
    %6814 = vmatpush.bf16.msra.mxu0 %v4561
    %6815 = vmatpush.bf16.msra.mxu0 %v4557
    %6816 = vmatpush.bf16.msra.mxu0 %v4553
    %6817 = vmatpush.bf16.msra.mxu0 %v4549
    %6818 = vmatpush.bf16.msra.mxu0 %v4545
    %6819 = vmatmul.bf16.gmra.mxu0 %v1143
    %v6820 = vpop.f32.mrf.mxu0
    %v6821 = vadd.f32 %v6808, %v6820
    %v6822 = vpop.f32.mrf.mxu0
    %6823 = vdwg.mxu0
    %6824 = vmatpush.bf16.msra.mxu0 %v4605
    %6825 = vmatpush.bf16.msra.mxu0 %v4601
    %6826 = vmatpush.bf16.msra.mxu0 %v4597
    %6827 = vmatpush.bf16.msra.mxu0 %v4593
    %6828 = vmatpush.bf16.msra.mxu0 %v4589
    %6829 = vmatpush.bf16.msra.mxu0 %v4585
    %6830 = vmatpush.bf16.msra.mxu0 %v4581
    %6831 = vmatpush.bf16.msra.mxu0 %v4577
    %6832 = vmatmul.bf16.gmra.mxu0 %v1144
    %v6833 = vpop.f32.mrf.mxu0
    %v6834 = vadd.f32 %v6821, %v6833
    %v6835 = vpop.f32.mrf.mxu0
    %6836 = vdwg.mxu0
    %6837 = vmatpush.bf16.msra.mxu0 %v4637
    %6838 = vmatpush.bf16.msra.mxu0 %v4633
    %6839 = vmatpush.bf16.msra.mxu0 %v4629
    %6840 = vmatpush.bf16.msra.mxu0 %v4625
    %6841 = vmatpush.bf16.msra.mxu0 %v4621
    %6842 = vmatpush.bf16.msra.mxu0 %v4617
    %6843 = vmatpush.bf16.msra.mxu0 %v4613
    %6844 = vmatpush.bf16.msra.mxu0 %v4609
    %6845 = vmatmul.bf16.gmra.mxu0 %v1145
    %v6846 = vpop.f32.mrf.mxu0
    %v6847 = vadd.f32 %v6834, %v6846
    %v6848 = vpop.f32.mrf.mxu0
    %6849 = vdwg.mxu0
    %6850 = vmatpush.bf16.msra.mxu0 %v4669
    %6851 = vmatpush.bf16.msra.mxu0 %v4665
    %6852 = vmatpush.bf16.msra.mxu0 %v4661
    %6853 = vmatpush.bf16.msra.mxu0 %v4657
    %6854 = vmatpush.bf16.msra.mxu0 %v4653
    %6855 = vmatpush.bf16.msra.mxu0 %v4649
    %6856 = vmatpush.bf16.msra.mxu0 %v4645
    %6857 = vmatpush.bf16.msra.mxu0 %v4641
    %6858 = vmatmul.bf16.gmra.mxu0 %v1146
    %v6859 = vpop.f32.mrf.mxu0
    %v6860 = vadd.f32 %v6847, %v6859
    %v6861 = vpop.f32.mrf.mxu0
    %6862 = vdwg.mxu0
    %6863 = vmatpush.bf16.msra.mxu0 %v4701
    %6864 = vmatpush.bf16.msra.mxu0 %v4697
    %6865 = vmatpush.bf16.msra.mxu0 %v4693
    %6866 = vmatpush.bf16.msra.mxu0 %v4689
    %6867 = vmatpush.bf16.msra.mxu0 %v4685
    %6868 = vmatpush.bf16.msra.mxu0 %v4681
    %6869 = vmatpush.bf16.msra.mxu0 %v4677
    %6870 = vmatpush.bf16.msra.mxu0 %v4673
    %6871 = vmatmul.bf16.gmra.mxu0 %v1147
    %v6872 = vpop.f32.mrf.mxu0
    %v6873 = vadd.f32 %v6860, %v6872
    %v6874 = vpop.f32.mrf.mxu0
    %6875 = vdwg.mxu0
    %6876 = vmatpush.bf16.msra.mxu0 %v4733
    %6877 = vmatpush.bf16.msra.mxu0 %v4729
    %6878 = vmatpush.bf16.msra.mxu0 %v4725
    %6879 = vmatpush.bf16.msra.mxu0 %v4721
    %6880 = vmatpush.bf16.msra.mxu0 %v4717
    %6881 = vmatpush.bf16.msra.mxu0 %v4713
    %6882 = vmatpush.bf16.msra.mxu0 %v4709
    %6883 = vmatpush.bf16.msra.mxu0 %v4705
    %6884 = vmatmul.bf16.gmra.mxu0 %v1148
    %v6885 = vpop.f32.mrf.mxu0
    %v6886 = vadd.f32 %v6873, %v6885
    %v6887 = vpop.f32.mrf.mxu0
    %6888 = vdwg.mxu0
    %6889 = vmatpush.bf16.msra.mxu0 %v4765
    %6890 = vmatpush.bf16.msra.mxu0 %v4761
    %6891 = vmatpush.bf16.msra.mxu0 %v4757
    %6892 = vmatpush.bf16.msra.mxu0 %v4753
    %6893 = vmatpush.bf16.msra.mxu0 %v4749
    %6894 = vmatpush.bf16.msra.mxu0 %v4745
    %6895 = vmatpush.bf16.msra.mxu0 %v4741
    %6896 = vmatpush.bf16.msra.mxu0 %v4737
    %6897 = vmatmul.bf16.gmra.mxu0 %v1149
    %v6898 = vpop.f32.mrf.mxu0
    %v6899 = vadd.f32 %v6886, %v6898
    %v6900 = vpop.f32.mrf.mxu0
    %6901 = vdwg.mxu0
    %6902 = vmatpush.bf16.msra.mxu0 %v4797
    %6903 = vmatpush.bf16.msra.mxu0 %v4793
    %6904 = vmatpush.bf16.msra.mxu0 %v4789
    %6905 = vmatpush.bf16.msra.mxu0 %v4785
    %6906 = vmatpush.bf16.msra.mxu0 %v4781
    %6907 = vmatpush.bf16.msra.mxu0 %v4777
    %6908 = vmatpush.bf16.msra.mxu0 %v4773
    %6909 = vmatpush.bf16.msra.mxu0 %v4769
    %6910 = vmatmul.bf16.gmra.mxu0 %v1150
    %v6911 = vpop.f32.mrf.mxu0
    %v6912 = vadd.f32 %v6899, %v6911
    %v6913 = vpop.f32.mrf.mxu0
    %6914 = vdwg.mxu0
    %6915 = vmatpush.bf16.msra.mxu0 %v4829
    %6916 = vmatpush.bf16.msra.mxu0 %v4825
    %6917 = vmatpush.bf16.msra.mxu0 %v4821
    %6918 = vmatpush.bf16.msra.mxu0 %v4817
    %6919 = vmatpush.bf16.msra.mxu0 %v4813
    %6920 = vmatpush.bf16.msra.mxu0 %v4809
    %6921 = vmatpush.bf16.msra.mxu0 %v4805
    %6922 = vmatpush.bf16.msra.mxu0 %v4801
    %6923 = vmatmul.bf16.gmra.mxu0 %v1151
    %v6924 = vpop.f32.mrf.mxu0
    %v6925 = vadd.f32 %v6912, %v6924
    %v6926 = vpop.f32.mrf.mxu0
    %6927 = vdwg.mxu0
    %6928 = vmatpush.bf16.msra.mxu0 %v4861
    %6929 = vmatpush.bf16.msra.mxu0 %v4857
    %6930 = vmatpush.bf16.msra.mxu0 %v4853
    %6931 = vmatpush.bf16.msra.mxu0 %v4849
    %6932 = vmatpush.bf16.msra.mxu0 %v4845
    %6933 = vmatpush.bf16.msra.mxu0 %v4841
    %6934 = vmatpush.bf16.msra.mxu0 %v4837
    %6935 = vmatpush.bf16.msra.mxu0 %v4833
    %6936 = vmatmul.bf16.gmra.mxu0 %v1152
    %v6937 = vpop.f32.mrf.mxu0
    %v6938 = vadd.f32 %v6925, %v6937
    %v6939 = vpop.f32.mrf.mxu0
    %6940 = vdwg.mxu0
    %6941 = vmatpush.bf16.msra.mxu0 %v4893
    %6942 = vmatpush.bf16.msra.mxu0 %v4889
    %6943 = vmatpush.bf16.msra.mxu0 %v4885
    %6944 = vmatpush.bf16.msra.mxu0 %v4881
    %6945 = vmatpush.bf16.msra.mxu0 %v4877
    %6946 = vmatpush.bf16.msra.mxu0 %v4873
    %6947 = vmatpush.bf16.msra.mxu0 %v4869
    %6948 = vmatpush.bf16.msra.mxu0 %v4865
    %6949 = vmatmul.bf16.gmra.mxu0 %v1153
    %v6950 = vpop.f32.mrf.mxu0
    %v6951 = vadd.f32 %v6938, %v6950
    %v6952 = vpop.f32.mrf.mxu0
    %6953 = vdwg.mxu0
    %6954 = vmatpush.bf16.msra.mxu0 %v3998
    %6955 = vmatpush.bf16.msra.mxu0 %v3994
    %6956 = vmatpush.bf16.msra.mxu0 %v3990
    %6957 = vmatpush.bf16.msra.mxu0 %v3986
    %6958 = vmatpush.bf16.msra.mxu0 %v3982
    %6959 = vmatpush.bf16.msra.mxu0 %v3978
    %6960 = vmatpush.bf16.msra.mxu0 %v3974
    %6961 = vmatpush.bf16.msra.mxu0 %v3970
    %6962 = vmatmul.bf16.gmra.mxu0 %v1125
    %v6963 = vpop.f32.mrf.mxu0
    %v6964 = vadd.f32 %v1076, %v6963
    %v6965 = vpop.f32.mrf.mxu0
    %6966 = vdwg.mxu0
    %6967 = vmatpush.bf16.msra.mxu0 %v4030
    %6968 = vmatpush.bf16.msra.mxu0 %v4026
    %6969 = vmatpush.bf16.msra.mxu0 %v4022
    %6970 = vmatpush.bf16.msra.mxu0 %v4018
    %6971 = vmatpush.bf16.msra.mxu0 %v4014
    %6972 = vmatpush.bf16.msra.mxu0 %v4010
    %6973 = vmatpush.bf16.msra.mxu0 %v4006
    %6974 = vmatpush.bf16.msra.mxu0 %v4002
    %6975 = vmatmul.bf16.gmra.mxu0 %v1126
    %v6976 = vpop.f32.mrf.mxu0
    %v6977 = vadd.f32 %v6964, %v6976
    %v6978 = vpop.f32.mrf.mxu0
    %6979 = vdwg.mxu0
    %6980 = vmatpush.bf16.msra.mxu0 %v4062
    %6981 = vmatpush.bf16.msra.mxu0 %v4058
    %6982 = vmatpush.bf16.msra.mxu0 %v4054
    %6983 = vmatpush.bf16.msra.mxu0 %v4050
    %6984 = vmatpush.bf16.msra.mxu0 %v4046
    %6985 = vmatpush.bf16.msra.mxu0 %v4042
    %6986 = vmatpush.bf16.msra.mxu0 %v4038
    %6987 = vmatpush.bf16.msra.mxu0 %v4034
    %6988 = vmatmul.bf16.gmra.mxu0 %v1127
    %v6989 = vpop.f32.mrf.mxu0
    %v6990 = vadd.f32 %v6977, %v6989
    %v6991 = vpop.f32.mrf.mxu0
    %6992 = vdwg.mxu0
    %6993 = vmatpush.bf16.msra.mxu0 %v4094
    %6994 = vmatpush.bf16.msra.mxu0 %v4090
    %6995 = vmatpush.bf16.msra.mxu0 %v4086
    %6996 = vmatpush.bf16.msra.mxu0 %v4082
    %6997 = vmatpush.bf16.msra.mxu0 %v4078
    %6998 = vmatpush.bf16.msra.mxu0 %v4074
    %6999 = vmatpush.bf16.msra.mxu0 %v4070
    %7000 = vmatpush.bf16.msra.mxu0 %v4066
    %7001 = vmatmul.bf16.gmra.mxu0 %v1128
    %v7002 = vpop.f32.mrf.mxu0
    %v7003 = vadd.f32 %v6990, %v7002
    %v7004 = vpop.f32.mrf.mxu0
    %7005 = vdwg.mxu0
    %7006 = vmatpush.bf16.msra.mxu0 %v4126
    %7007 = vmatpush.bf16.msra.mxu0 %v4122
    %7008 = vmatpush.bf16.msra.mxu0 %v4118
    %7009 = vmatpush.bf16.msra.mxu0 %v4114
    %7010 = vmatpush.bf16.msra.mxu0 %v4110
    %7011 = vmatpush.bf16.msra.mxu0 %v4106
    %7012 = vmatpush.bf16.msra.mxu0 %v4102
    %7013 = vmatpush.bf16.msra.mxu0 %v4098
    %7014 = vmatmul.bf16.gmra.mxu0 %v1129
    %v7015 = vpop.f32.mrf.mxu0
    %v7016 = vadd.f32 %v7003, %v7015
    %v7017 = vpop.f32.mrf.mxu0
    %7018 = vdwg.mxu0
    %7019 = vmatpush.bf16.msra.mxu0 %v4158
    %7020 = vmatpush.bf16.msra.mxu0 %v4154
    %7021 = vmatpush.bf16.msra.mxu0 %v4150
    %7022 = vmatpush.bf16.msra.mxu0 %v4146
    %7023 = vmatpush.bf16.msra.mxu0 %v4142
    %7024 = vmatpush.bf16.msra.mxu0 %v4138
    %7025 = vmatpush.bf16.msra.mxu0 %v4134
    %7026 = vmatpush.bf16.msra.mxu0 %v4130
    %7027 = vmatmul.bf16.gmra.mxu0 %v1130
    %v7028 = vpop.f32.mrf.mxu0
    %v7029 = vadd.f32 %v7016, %v7028
    %v7030 = vpop.f32.mrf.mxu0
    %7031 = vdwg.mxu0
    %7032 = vmatpush.bf16.msra.mxu0 %v4190
    %7033 = vmatpush.bf16.msra.mxu0 %v4186
    %7034 = vmatpush.bf16.msra.mxu0 %v4182
    %7035 = vmatpush.bf16.msra.mxu0 %v4178
    %7036 = vmatpush.bf16.msra.mxu0 %v4174
    %7037 = vmatpush.bf16.msra.mxu0 %v4170
    %7038 = vmatpush.bf16.msra.mxu0 %v4166
    %7039 = vmatpush.bf16.msra.mxu0 %v4162
    %7040 = vmatmul.bf16.gmra.mxu0 %v1131
    %v7041 = vpop.f32.mrf.mxu0
    %v7042 = vadd.f32 %v7029, %v7041
    %v7043 = vpop.f32.mrf.mxu0
    %7044 = vdwg.mxu0
    %7045 = vmatpush.bf16.msra.mxu0 %v4222
    %7046 = vmatpush.bf16.msra.mxu0 %v4218
    %7047 = vmatpush.bf16.msra.mxu0 %v4214
    %7048 = vmatpush.bf16.msra.mxu0 %v4210
    %7049 = vmatpush.bf16.msra.mxu0 %v4206
    %7050 = vmatpush.bf16.msra.mxu0 %v4202
    %7051 = vmatpush.bf16.msra.mxu0 %v4198
    %7052 = vmatpush.bf16.msra.mxu0 %v4194
    %7053 = vmatmul.bf16.gmra.mxu0 %v1132
    %v7054 = vpop.f32.mrf.mxu0
    %v7055 = vadd.f32 %v7042, %v7054
    %v7056 = vpop.f32.mrf.mxu0
    %7057 = vdwg.mxu0
    %7058 = vmatpush.bf16.msra.mxu0 %v4254
    %7059 = vmatpush.bf16.msra.mxu0 %v4250
    %7060 = vmatpush.bf16.msra.mxu0 %v4246
    %7061 = vmatpush.bf16.msra.mxu0 %v4242
    %7062 = vmatpush.bf16.msra.mxu0 %v4238
    %7063 = vmatpush.bf16.msra.mxu0 %v4234
    %7064 = vmatpush.bf16.msra.mxu0 %v4230
    %7065 = vmatpush.bf16.msra.mxu0 %v4226
    %7066 = vmatmul.bf16.gmra.mxu0 %v1133
    %v7067 = vpop.f32.mrf.mxu0
    %v7068 = vadd.f32 %v7055, %v7067
    %v7069 = vpop.f32.mrf.mxu0
    %7070 = vdwg.mxu0
    %7071 = vmatpush.bf16.msra.mxu0 %v4286
    %7072 = vmatpush.bf16.msra.mxu0 %v4282
    %7073 = vmatpush.bf16.msra.mxu0 %v4278
    %7074 = vmatpush.bf16.msra.mxu0 %v4274
    %7075 = vmatpush.bf16.msra.mxu0 %v4270
    %7076 = vmatpush.bf16.msra.mxu0 %v4266
    %7077 = vmatpush.bf16.msra.mxu0 %v4262
    %7078 = vmatpush.bf16.msra.mxu0 %v4258
    %7079 = vmatmul.bf16.gmra.mxu0 %v1134
    %v7080 = vpop.f32.mrf.mxu0
    %v7081 = vadd.f32 %v7068, %v7080
    %v7082 = vpop.f32.mrf.mxu0
    %7083 = vdwg.mxu0
    %7084 = vmatpush.bf16.msra.mxu0 %v4318
    %7085 = vmatpush.bf16.msra.mxu0 %v4314
    %7086 = vmatpush.bf16.msra.mxu0 %v4310
    %7087 = vmatpush.bf16.msra.mxu0 %v4306
    %7088 = vmatpush.bf16.msra.mxu0 %v4302
    %7089 = vmatpush.bf16.msra.mxu0 %v4298
    %7090 = vmatpush.bf16.msra.mxu0 %v4294
    %7091 = vmatpush.bf16.msra.mxu0 %v4290
    %7092 = vmatmul.bf16.gmra.mxu0 %v1135
    %v7093 = vpop.f32.mrf.mxu0
    %v7094 = vadd.f32 %v7081, %v7093
    %v7095 = vpop.f32.mrf.mxu0
    %7096 = vdwg.mxu0
    %7097 = vmatpush.bf16.msra.mxu0 %v4350
    %7098 = vmatpush.bf16.msra.mxu0 %v4346
    %7099 = vmatpush.bf16.msra.mxu0 %v4342
    %7100 = vmatpush.bf16.msra.mxu0 %v4338
    %7101 = vmatpush.bf16.msra.mxu0 %v4334
    %7102 = vmatpush.bf16.msra.mxu0 %v4330
    %7103 = vmatpush.bf16.msra.mxu0 %v4326
    %7104 = vmatpush.bf16.msra.mxu0 %v4322
    %7105 = vmatmul.bf16.gmra.mxu0 %v1136
    %v7106 = vpop.f32.mrf.mxu0
    %v7107 = vadd.f32 %v7094, %v7106
    %v7108 = vpop.f32.mrf.mxu0
    %7109 = vdwg.mxu0
    %7110 = vmatpush.bf16.msra.mxu0 %v4382
    %7111 = vmatpush.bf16.msra.mxu0 %v4378
    %7112 = vmatpush.bf16.msra.mxu0 %v4374
    %7113 = vmatpush.bf16.msra.mxu0 %v4370
    %7114 = vmatpush.bf16.msra.mxu0 %v4366
    %7115 = vmatpush.bf16.msra.mxu0 %v4362
    %7116 = vmatpush.bf16.msra.mxu0 %v4358
    %7117 = vmatpush.bf16.msra.mxu0 %v4354
    %7118 = vmatmul.bf16.gmra.mxu0 %v1137
    %v7119 = vpop.f32.mrf.mxu0
    %v7120 = vadd.f32 %v7107, %v7119
    %v7121 = vpop.f32.mrf.mxu0
    %7122 = vdwg.mxu0
    %7123 = vmatpush.bf16.msra.mxu0 %v4414
    %7124 = vmatpush.bf16.msra.mxu0 %v4410
    %7125 = vmatpush.bf16.msra.mxu0 %v4406
    %7126 = vmatpush.bf16.msra.mxu0 %v4402
    %7127 = vmatpush.bf16.msra.mxu0 %v4398
    %7128 = vmatpush.bf16.msra.mxu0 %v4394
    %7129 = vmatpush.bf16.msra.mxu0 %v4390
    %7130 = vmatpush.bf16.msra.mxu0 %v4386
    %7131 = vmatmul.bf16.gmra.mxu0 %v1138
    %v7132 = vpop.f32.mrf.mxu0
    %v7133 = vadd.f32 %v7120, %v7132
    %v7134 = vpop.f32.mrf.mxu0
    %7135 = vdwg.mxu0
    %7136 = vmatpush.bf16.msra.mxu0 %v4446
    %7137 = vmatpush.bf16.msra.mxu0 %v4442
    %7138 = vmatpush.bf16.msra.mxu0 %v4438
    %7139 = vmatpush.bf16.msra.mxu0 %v4434
    %7140 = vmatpush.bf16.msra.mxu0 %v4430
    %7141 = vmatpush.bf16.msra.mxu0 %v4426
    %7142 = vmatpush.bf16.msra.mxu0 %v4422
    %7143 = vmatpush.bf16.msra.mxu0 %v4418
    %7144 = vmatmul.bf16.gmra.mxu0 %v1139
    %v7145 = vpop.f32.mrf.mxu0
    %v7146 = vadd.f32 %v7133, %v7145
    %v7147 = vpop.f32.mrf.mxu0
    %7148 = vdwg.mxu0
    %7149 = vmatpush.bf16.msra.mxu0 %v4478
    %7150 = vmatpush.bf16.msra.mxu0 %v4474
    %7151 = vmatpush.bf16.msra.mxu0 %v4470
    %7152 = vmatpush.bf16.msra.mxu0 %v4466
    %7153 = vmatpush.bf16.msra.mxu0 %v4462
    %7154 = vmatpush.bf16.msra.mxu0 %v4458
    %7155 = vmatpush.bf16.msra.mxu0 %v4454
    %7156 = vmatpush.bf16.msra.mxu0 %v4450
    %7157 = vmatmul.bf16.gmra.mxu0 %v1140
    %v7158 = vpop.f32.mrf.mxu0
    %v7159 = vadd.f32 %v7146, %v7158
    %v7160 = vpop.f32.mrf.mxu0
    %7161 = vdwg.mxu0
    %7162 = vmatpush.bf16.msra.mxu0 %v4510
    %7163 = vmatpush.bf16.msra.mxu0 %v4506
    %7164 = vmatpush.bf16.msra.mxu0 %v4502
    %7165 = vmatpush.bf16.msra.mxu0 %v4498
    %7166 = vmatpush.bf16.msra.mxu0 %v4494
    %7167 = vmatpush.bf16.msra.mxu0 %v4490
    %7168 = vmatpush.bf16.msra.mxu0 %v4486
    %7169 = vmatpush.bf16.msra.mxu0 %v4482
    %7170 = vmatmul.bf16.gmra.mxu0 %v1141
    %v7171 = vpop.f32.mrf.mxu0
    %v7172 = vadd.f32 %v7159, %v7171
    %v7173 = vpop.f32.mrf.mxu0
    %7174 = vdwg.mxu0
    %7175 = vmatpush.bf16.msra.mxu0 %v4542
    %7176 = vmatpush.bf16.msra.mxu0 %v4538
    %7177 = vmatpush.bf16.msra.mxu0 %v4534
    %7178 = vmatpush.bf16.msra.mxu0 %v4530
    %7179 = vmatpush.bf16.msra.mxu0 %v4526
    %7180 = vmatpush.bf16.msra.mxu0 %v4522
    %7181 = vmatpush.bf16.msra.mxu0 %v4518
    %7182 = vmatpush.bf16.msra.mxu0 %v4514
    %7183 = vmatmul.bf16.gmra.mxu0 %v1142
    %v7184 = vpop.f32.mrf.mxu0
    %v7185 = vadd.f32 %v7172, %v7184
    %v7186 = vpop.f32.mrf.mxu0
    %7187 = vdwg.mxu0
    %7188 = vmatpush.bf16.msra.mxu0 %v4574
    %7189 = vmatpush.bf16.msra.mxu0 %v4570
    %7190 = vmatpush.bf16.msra.mxu0 %v4566
    %7191 = vmatpush.bf16.msra.mxu0 %v4562
    %7192 = vmatpush.bf16.msra.mxu0 %v4558
    %7193 = vmatpush.bf16.msra.mxu0 %v4554
    %7194 = vmatpush.bf16.msra.mxu0 %v4550
    %7195 = vmatpush.bf16.msra.mxu0 %v4546
    %7196 = vmatmul.bf16.gmra.mxu0 %v1143
    %v7197 = vpop.f32.mrf.mxu0
    %v7198 = vadd.f32 %v7185, %v7197
    %v7199 = vpop.f32.mrf.mxu0
    %7200 = vdwg.mxu0
    %7201 = vmatpush.bf16.msra.mxu0 %v4606
    %7202 = vmatpush.bf16.msra.mxu0 %v4602
    %7203 = vmatpush.bf16.msra.mxu0 %v4598
    %7204 = vmatpush.bf16.msra.mxu0 %v4594
    %7205 = vmatpush.bf16.msra.mxu0 %v4590
    %7206 = vmatpush.bf16.msra.mxu0 %v4586
    %7207 = vmatpush.bf16.msra.mxu0 %v4582
    %7208 = vmatpush.bf16.msra.mxu0 %v4578
    %7209 = vmatmul.bf16.gmra.mxu0 %v1144
    %v7210 = vpop.f32.mrf.mxu0
    %v7211 = vadd.f32 %v7198, %v7210
    %v7212 = vpop.f32.mrf.mxu0
    %7213 = vdwg.mxu0
    %7214 = vmatpush.bf16.msra.mxu0 %v4638
    %7215 = vmatpush.bf16.msra.mxu0 %v4634
    %7216 = vmatpush.bf16.msra.mxu0 %v4630
    %7217 = vmatpush.bf16.msra.mxu0 %v4626
    %7218 = vmatpush.bf16.msra.mxu0 %v4622
    %7219 = vmatpush.bf16.msra.mxu0 %v4618
    %7220 = vmatpush.bf16.msra.mxu0 %v4614
    %7221 = vmatpush.bf16.msra.mxu0 %v4610
    %7222 = vmatmul.bf16.gmra.mxu0 %v1145
    %v7223 = vpop.f32.mrf.mxu0
    %v7224 = vadd.f32 %v7211, %v7223
    %v7225 = vpop.f32.mrf.mxu0
    %7226 = vdwg.mxu0
    %7227 = vmatpush.bf16.msra.mxu0 %v4670
    %7228 = vmatpush.bf16.msra.mxu0 %v4666
    %7229 = vmatpush.bf16.msra.mxu0 %v4662
    %7230 = vmatpush.bf16.msra.mxu0 %v4658
    %7231 = vmatpush.bf16.msra.mxu0 %v4654
    %7232 = vmatpush.bf16.msra.mxu0 %v4650
    %7233 = vmatpush.bf16.msra.mxu0 %v4646
    %7234 = vmatpush.bf16.msra.mxu0 %v4642
    %7235 = vmatmul.bf16.gmra.mxu0 %v1146
    %v7236 = vpop.f32.mrf.mxu0
    %v7237 = vadd.f32 %v7224, %v7236
    %v7238 = vpop.f32.mrf.mxu0
    %7239 = vdwg.mxu0
    %7240 = vmatpush.bf16.msra.mxu0 %v4702
    %7241 = vmatpush.bf16.msra.mxu0 %v4698
    %7242 = vmatpush.bf16.msra.mxu0 %v4694
    %7243 = vmatpush.bf16.msra.mxu0 %v4690
    %7244 = vmatpush.bf16.msra.mxu0 %v4686
    %7245 = vmatpush.bf16.msra.mxu0 %v4682
    %7246 = vmatpush.bf16.msra.mxu0 %v4678
    %7247 = vmatpush.bf16.msra.mxu0 %v4674
    %7248 = vmatmul.bf16.gmra.mxu0 %v1147
    %v7249 = vpop.f32.mrf.mxu0
    %v7250 = vadd.f32 %v7237, %v7249
    %v7251 = vpop.f32.mrf.mxu0
    %7252 = vdwg.mxu0
    %7253 = vmatpush.bf16.msra.mxu0 %v4734
    %7254 = vmatpush.bf16.msra.mxu0 %v4730
    %7255 = vmatpush.bf16.msra.mxu0 %v4726
    %7256 = vmatpush.bf16.msra.mxu0 %v4722
    %7257 = vmatpush.bf16.msra.mxu0 %v4718
    %7258 = vmatpush.bf16.msra.mxu0 %v4714
    %7259 = vmatpush.bf16.msra.mxu0 %v4710
    %7260 = vmatpush.bf16.msra.mxu0 %v4706
    %7261 = vmatmul.bf16.gmra.mxu0 %v1148
    %v7262 = vpop.f32.mrf.mxu0
    %v7263 = vadd.f32 %v7250, %v7262
    %v7264 = vpop.f32.mrf.mxu0
    %7265 = vdwg.mxu0
    %7266 = vmatpush.bf16.msra.mxu0 %v4766
    %7267 = vmatpush.bf16.msra.mxu0 %v4762
    %7268 = vmatpush.bf16.msra.mxu0 %v4758
    %7269 = vmatpush.bf16.msra.mxu0 %v4754
    %7270 = vmatpush.bf16.msra.mxu0 %v4750
    %7271 = vmatpush.bf16.msra.mxu0 %v4746
    %7272 = vmatpush.bf16.msra.mxu0 %v4742
    %7273 = vmatpush.bf16.msra.mxu0 %v4738
    %7274 = vmatmul.bf16.gmra.mxu0 %v1149
    %v7275 = vpop.f32.mrf.mxu0
    %v7276 = vadd.f32 %v7263, %v7275
    %v7277 = vpop.f32.mrf.mxu0
    %7278 = vdwg.mxu0
    %7279 = vmatpush.bf16.msra.mxu0 %v4798
    %7280 = vmatpush.bf16.msra.mxu0 %v4794
    %7281 = vmatpush.bf16.msra.mxu0 %v4790
    %7282 = vmatpush.bf16.msra.mxu0 %v4786
    %7283 = vmatpush.bf16.msra.mxu0 %v4782
    %7284 = vmatpush.bf16.msra.mxu0 %v4778
    %7285 = vmatpush.bf16.msra.mxu0 %v4774
    %7286 = vmatpush.bf16.msra.mxu0 %v4770
    %7287 = vmatmul.bf16.gmra.mxu0 %v1150
    %v7288 = vpop.f32.mrf.mxu0
    %v7289 = vadd.f32 %v7276, %v7288
    %v7290 = vpop.f32.mrf.mxu0
    %7291 = vdwg.mxu0
    %7292 = vmatpush.bf16.msra.mxu0 %v4830
    %7293 = vmatpush.bf16.msra.mxu0 %v4826
    %7294 = vmatpush.bf16.msra.mxu0 %v4822
    %7295 = vmatpush.bf16.msra.mxu0 %v4818
    %7296 = vmatpush.bf16.msra.mxu0 %v4814
    %7297 = vmatpush.bf16.msra.mxu0 %v4810
    %7298 = vmatpush.bf16.msra.mxu0 %v4806
    %7299 = vmatpush.bf16.msra.mxu0 %v4802
    %7300 = vmatmul.bf16.gmra.mxu0 %v1151
    %v7301 = vpop.f32.mrf.mxu0
    %v7302 = vadd.f32 %v7289, %v7301
    %v7303 = vpop.f32.mrf.mxu0
    %7304 = vdwg.mxu0
    %7305 = vmatpush.bf16.msra.mxu0 %v4862
    %7306 = vmatpush.bf16.msra.mxu0 %v4858
    %7307 = vmatpush.bf16.msra.mxu0 %v4854
    %7308 = vmatpush.bf16.msra.mxu0 %v4850
    %7309 = vmatpush.bf16.msra.mxu0 %v4846
    %7310 = vmatpush.bf16.msra.mxu0 %v4842
    %7311 = vmatpush.bf16.msra.mxu0 %v4838
    %7312 = vmatpush.bf16.msra.mxu0 %v4834
    %7313 = vmatmul.bf16.gmra.mxu0 %v1152
    %v7314 = vpop.f32.mrf.mxu0
    %v7315 = vadd.f32 %v7302, %v7314
    %v7316 = vpop.f32.mrf.mxu0
    %7317 = vdwg.mxu0
    %7318 = vmatpush.bf16.msra.mxu0 %v4894
    %7319 = vmatpush.bf16.msra.mxu0 %v4890
    %7320 = vmatpush.bf16.msra.mxu0 %v4886
    %7321 = vmatpush.bf16.msra.mxu0 %v4882
    %7322 = vmatpush.bf16.msra.mxu0 %v4878
    %7323 = vmatpush.bf16.msra.mxu0 %v4874
    %7324 = vmatpush.bf16.msra.mxu0 %v4870
    %7325 = vmatpush.bf16.msra.mxu0 %v4866
    %7326 = vmatmul.bf16.gmra.mxu0 %v1153
    %v7327 = vpop.f32.mrf.mxu0
    %v7328 = vadd.f32 %v7315, %v7327
    %v7329 = vpop.f32.mrf.mxu0
    %7330 = vdwg.mxu0
    %v7331 = vmax.f32 %v6197, 0.0
    %v7332 = vmax.f32 %v6574, 0.0
    %v7333 = vmax.f32 %v6951, 0.0
    %v7334 = vmax.f32 %v7328, 0.0
    %v7335 = vpack.c.bf16 %v7331, %v7331
    %v7336 = vpack.c.bf16 %v7332, %v7332
    %v7337 = vpack.c.bf16 %v7333, %v7333
    %v7338 = vpack.c.bf16 %v7334, %v7334
    %v7339 = vld [vmem:[#allocation8] sm:$0xf]
    %v7340 = vld [vmem:[#allocation8 + $0x4] sm:$0xf]
    %v7341 = vld [vmem:[#allocation8 + $0x8] sm:$0xf]
    %v7342 = vld [vmem:[#allocation8 + $0xc] sm:$0xf]
    %v7343 = vld [vmem:[#allocation8 + $0x10] sm:$0xf]
    %v7344 = vld [vmem:[#allocation8 + $0x14] sm:$0xf]
    %v7345 = vld [vmem:[#allocation8 + $0x18] sm:$0xf]
    %v7346 = vld [vmem:[#allocation8 + $0x1c] sm:$0xf]
    %v7347 = vld [vmem:[#allocation8 + $0x20] sm:$0xf]
    %v7348 = vld [vmem:[#allocation8 + $0x24] sm:$0xf]
    %v7349 = vld [vmem:[#allocation8 + $0x28] sm:$0xf]
    %v7350 = vld [vmem:[#allocation8 + $0x2c] sm:$0xf]
    %v7351 = vld [vmem:[#allocation8 + $0x30] sm:$0xf]
    %v7352 = vld [vmem:[#allocation8 + $0x34] sm:$0xf]
    %v7353 = vld [vmem:[#allocation8 + $0x38] sm:$0xf]
    %v7354 = vld [vmem:[#allocation8 + $0x3c] sm:$0xf]
    %v7355 = vld [vmem:[#allocation8 + $0x40] sm:$0xf]
    %v7356 = vld [vmem:[#allocation8 + $0x44] sm:$0xf]
    %v7357 = vld [vmem:[#allocation8 + $0x48] sm:$0xf]
    %v7358 = vld [vmem:[#allocation8 + $0x4c] sm:$0xf]
    %v7359 = vld [vmem:[#allocation8 + $0x50] sm:$0xf]
    %v7360 = vld [vmem:[#allocation8 + $0x54] sm:$0xf]
    %v7361 = vld [vmem:[#allocation8 + $0x58] sm:$0xf]
    %v7362 = vld [vmem:[#allocation8 + $0x5c] sm:$0xf]
    %v7363 = vld [vmem:[#allocation8 + $0x60] sm:$0xf]
    %v7364 = vld [vmem:[#allocation8 + $0x64] sm:$0xf]
    %v7365 = vld [vmem:[#allocation8 + $0x68] sm:$0xf]
    %v7366 = vld [vmem:[#allocation8 + $0x6c] sm:$0xf]
    %v7367 = vld [vmem:[#allocation8 + $0x70] sm:$0xf]
    %v7368 = vld [vmem:[#allocation8 + $0x74] sm:$0xf]
    %v7369 = vld [vmem:[#allocation8 + $0x78] sm:$0xf]
    %v7370 = vld [vmem:[#allocation8 + $0x7c] sm:$0xf]
    %v7371 = vld [vmem:[#allocation8 + $0x80] sm:$0xf]
    %v7372 = vld [vmem:[#allocation8 + $0x84] sm:$0xf]
    %v7373 = vld [vmem:[#allocation8 + $0x88] sm:$0xf]
    %v7374 = vld [vmem:[#allocation8 + $0x8c] sm:$0xf]
    %v7375 = vld [vmem:[#allocation8 + $0x90] sm:$0xf]
    %v7376 = vld [vmem:[#allocation8 + $0x94] sm:$0xf]
    %v7377 = vld [vmem:[#allocation8 + $0x98] sm:$0xf]
    %v7378 = vld [vmem:[#allocation8 + $0x9c] sm:$0xf]
    %v7379 = vld [vmem:[#allocation8 + $0xa0] sm:$0xf]
    %v7380 = vld [vmem:[#allocation8 + $0xa4] sm:$0xf]
    %v7381 = vld [vmem:[#allocation8 + $0xa8] sm:$0xf]
    %v7382 = vld [vmem:[#allocation8 + $0xac] sm:$0xf]
    %v7383 = vld [vmem:[#allocation8 + $0xb0] sm:$0xf]
    %v7384 = vld [vmem:[#allocation8 + $0xb4] sm:$0xf]
    %v7385 = vld [vmem:[#allocation8 + $0xb8] sm:$0xf]
    %v7386 = vld [vmem:[#allocation8 + $0xbc] sm:$0xf]
    %v7387 = vld [vmem:[#allocation8 + $0xc0] sm:$0xf]
    %v7388 = vld [vmem:[#allocation8 + $0xc4] sm:$0xf]
    %v7389 = vld [vmem:[#allocation8 + $0xc8] sm:$0xf]
    %v7390 = vld [vmem:[#allocation8 + $0xcc] sm:$0xf]
    %v7391 = vld [vmem:[#allocation8 + $0xd0] sm:$0xf]
    %v7392 = vld [vmem:[#allocation8 + $0xd4] sm:$0xf]
    %v7393 = vld [vmem:[#allocation8 + $0xd8] sm:$0xf]
    %v7394 = vld [vmem:[#allocation8 + $0xdc] sm:$0xf]
    %v7395 = vld [vmem:[#allocation8 + $0xe0] sm:$0xf]
    %v7396 = vld [vmem:[#allocation8 + $0xe4] sm:$0xf]
    %v7397 = vld [vmem:[#allocation8 + $0xe8] sm:$0xf]
    %v7398 = vld [vmem:[#allocation8 + $0xec] sm:$0xf]
    %v7399 = vld [vmem:[#allocation8 + $0xf0] sm:$0xf]
    %v7400 = vld [vmem:[#allocation8 + $0xf4] sm:$0xf]
    %v7401 = vld [vmem:[#allocation8 + $0xf8] sm:$0xf]
    %v7402 = vld [vmem:[#allocation8 + $0xfc] sm:$0xf]
    %v7403 = vld [vmem:[#allocation10] sm:$0x1]
    %v7405 = vperm.slane %v7403, 0
    %v7471 = vunpack.c.l.b16 %v7339
    %v7472 = vunpack.c.l.b16 %v7340
    %v7473 = vunpack.c.l.b16 %v7341
    %v7474 = vunpack.c.l.b16 %v7342
    %v7475 = vunpack.c.l.b16 %v7343
    %v7476 = vunpack.c.l.b16 %v7344
    %v7477 = vunpack.c.l.b16 %v7345
    %v7478 = vunpack.c.l.b16 %v7346
    %v7479 = vunpack.c.l.b16 %v7347
    %v7480 = vunpack.c.l.b16 %v7348
    %v7481 = vunpack.c.l.b16 %v7349
    %v7482 = vunpack.c.l.b16 %v7350
    %v7483 = vunpack.c.l.b16 %v7351
    %v7484 = vunpack.c.l.b16 %v7352
    %v7485 = vunpack.c.l.b16 %v7353
    %v7486 = vunpack.c.l.b16 %v7354
    %v7487 = vunpack.c.l.b16 %v7355
    %v7488 = vunpack.c.l.b16 %v7356
    %v7489 = vunpack.c.l.b16 %v7357
    %v7490 = vunpack.c.l.b16 %v7358
    %v7491 = vunpack.c.l.b16 %v7359
    %v7492 = vunpack.c.l.b16 %v7360
    %v7493 = vunpack.c.l.b16 %v7361
    %v7494 = vunpack.c.l.b16 %v7362
    %v7495 = vunpack.c.l.b16 %v7363
    %v7496 = vunpack.c.l.b16 %v7364
    %v7497 = vunpack.c.l.b16 %v7365
    %v7498 = vunpack.c.l.b16 %v7366
    %v7499 = vunpack.c.l.b16 %v7367
    %v7500 = vunpack.c.l.b16 %v7368
    %v7501 = vunpack.c.l.b16 %v7369
    %v7502 = vunpack.c.l.b16 %v7370
    %v7503 = vunpack.c.l.b16 %v7371
    %v7504 = vunpack.c.l.b16 %v7372
    %v7505 = vunpack.c.l.b16 %v7373
    %v7506 = vunpack.c.l.b16 %v7374
    %v7507 = vunpack.c.l.b16 %v7375
    %v7508 = vunpack.c.l.b16 %v7376
    %v7509 = vunpack.c.l.b16 %v7377
    %v7510 = vunpack.c.l.b16 %v7378
    %v7511 = vunpack.c.l.b16 %v7379
    %v7512 = vunpack.c.l.b16 %v7380
    %v7513 = vunpack.c.l.b16 %v7381
    %v7514 = vunpack.c.l.b16 %v7382
    %v7515 = vunpack.c.l.b16 %v7383
    %v7516 = vunpack.c.l.b16 %v7384
    %v7517 = vunpack.c.l.b16 %v7385
    %v7518 = vunpack.c.l.b16 %v7386
    %v7519 = vunpack.c.l.b16 %v7387
    %v7520 = vunpack.c.l.b16 %v7388
    %v7521 = vunpack.c.l.b16 %v7389
    %v7522 = vunpack.c.l.b16 %v7390
    %v7523 = vunpack.c.l.b16 %v7391
    %v7524 = vunpack.c.l.b16 %v7392
    %v7525 = vunpack.c.l.b16 %v7393
    %v7526 = vunpack.c.l.b16 %v7394
    %v7527 = vunpack.c.l.b16 %v7395
    %v7528 = vunpack.c.l.b16 %v7396
    %v7529 = vunpack.c.l.b16 %v7397
    %v7530 = vunpack.c.l.b16 %v7398
    %v7531 = vunpack.c.l.b16 %v7399
    %v7532 = vunpack.c.l.b16 %v7400
    %v7533 = vunpack.c.l.b16 %v7401
    %v7534 = vunpack.c.l.b16 %v7402
    %v7535 = vpack.c.b16 %v7472, %v7471
    %v7536 = vpack.c.b16 %v7474, %v7473
    %v7537 = vpack.c.b16 %v7476, %v7475
    %v7538 = vpack.c.b16 %v7478, %v7477
    %v7539 = vpack.c.b16 %v7480, %v7479
    %v7540 = vpack.c.b16 %v7482, %v7481
    %v7541 = vpack.c.b16 %v7484, %v7483
    %v7542 = vpack.c.b16 %v7486, %v7485
    %v7543 = vpack.c.b16 %v7488, %v7487
    %v7544 = vpack.c.b16 %v7490, %v7489
    %v7545 = vpack.c.b16 %v7492, %v7491
    %v7546 = vpack.c.b16 %v7494, %v7493
    %v7547 = vpack.c.b16 %v7496, %v7495
    %v7548 = vpack.c.b16 %v7498, %v7497
    %v7549 = vpack.c.b16 %v7500, %v7499
    %v7550 = vpack.c.b16 %v7502, %v7501
    %v7551 = vpack.c.b16 %v7504, %v7503
    %v7552 = vpack.c.b16 %v7506, %v7505
    %v7553 = vpack.c.b16 %v7508, %v7507
    %v7554 = vpack.c.b16 %v7510, %v7509
    %v7555 = vpack.c.b16 %v7512, %v7511
    %v7556 = vpack.c.b16 %v7514, %v7513
    %v7557 = vpack.c.b16 %v7516, %v7515
    %v7558 = vpack.c.b16 %v7518, %v7517
    %v7559 = vpack.c.b16 %v7520, %v7519
    %v7560 = vpack.c.b16 %v7522, %v7521
    %v7561 = vpack.c.b16 %v7524, %v7523
    %v7562 = vpack.c.b16 %v7526, %v7525
    %v7563 = vpack.c.b16 %v7528, %v7527
    %v7564 = vpack.c.b16 %v7530, %v7529
    %v7565 = vpack.c.b16 %v7532, %v7531
    %v7566 = vpack.c.b16 %v7534, %v7533
    %7599 = vmatpush.bf16.msra.mxu0 %v7542
    %7600 = vmatpush.bf16.msra.mxu0 %v7541
    %7601 = vmatpush.bf16.msra.mxu0 %v7540
    %7602 = vmatpush.bf16.msra.mxu0 %v7539
    %7603 = vmatpush.bf16.msra.mxu0 %v7538
    %7604 = vmatpush.bf16.msra.mxu0 %v7537
    %7605 = vmatpush.bf16.msra.mxu0 %v7536
    %7606 = vmatpush.bf16.msra.mxu0 %v7535
    %7607 = vmatmul.bf16.gmra.mxu0 %v7335
    %v7608 = vpop.f32.mrf.mxu0
    %v7609 = vadd.f32 %v7405, %v7608
    %v7610 = vpop.f32.mrf.mxu0
    %7611 = vdwg.mxu0
    %7612 = vmatpush.bf16.msra.mxu0 %v7550
    %7613 = vmatpush.bf16.msra.mxu0 %v7549
    %7614 = vmatpush.bf16.msra.mxu0 %v7548
    %7615 = vmatpush.bf16.msra.mxu0 %v7547
    %7616 = vmatpush.bf16.msra.mxu0 %v7546
    %7617 = vmatpush.bf16.msra.mxu0 %v7545
    %7618 = vmatpush.bf16.msra.mxu0 %v7544
    %7619 = vmatpush.bf16.msra.mxu0 %v7543
    %7620 = vmatmul.bf16.gmra.mxu0 %v7336
    %v7621 = vpop.f32.mrf.mxu0
    %v7622 = vadd.f32 %v7609, %v7621
    %v7623 = vpop.f32.mrf.mxu0
    %7624 = vdwg.mxu0
    %7625 = vmatpush.bf16.msra.mxu0 %v7558
    %7626 = vmatpush.bf16.msra.mxu0 %v7557
    %7627 = vmatpush.bf16.msra.mxu0 %v7556
    %7628 = vmatpush.bf16.msra.mxu0 %v7555
    %7629 = vmatpush.bf16.msra.mxu0 %v7554
    %7630 = vmatpush.bf16.msra.mxu0 %v7553
    %7631 = vmatpush.bf16.msra.mxu0 %v7552
    %7632 = vmatpush.bf16.msra.mxu0 %v7551
    %7633 = vmatmul.bf16.gmra.mxu0 %v7337
    %v7634 = vpop.f32.mrf.mxu0
    %v7635 = vadd.f32 %v7622, %v7634
    %v7636 = vpop.f32.mrf.mxu0
    %7637 = vdwg.mxu0
    %7638 = vmatpush.bf16.msra.mxu0 %v7566
    %7639 = vmatpush.bf16.msra.mxu0 %v7565
    %7640 = vmatpush.bf16.msra.mxu0 %v7564
    %7641 = vmatpush.bf16.msra.mxu0 %v7563
    %7642 = vmatpush.bf16.msra.mxu0 %v7562
    %7643 = vmatpush.bf16.msra.mxu0 %v7561
    %7644 = vmatpush.bf16.msra.mxu0 %v7560
    %7645 = vmatpush.bf16.msra.mxu0 %v7559
    %7646 = vmatmul.bf16.gmra.mxu0 %v7338
    %v7647 = vpop.f32.mrf.mxu0
    %v7648 = vadd.f32 %v7635, %v7647
    %v7649 = vpop.f32.mrf.mxu0
    %7650 = vdwg.mxu0
    %v7651 = vmax.f32 %v7648, 0.0
    %v7652 = vpack.c.bf16 %v7651, %v7651
    %v7653 = vld [vmem:[#allocation11] sm:$0xf]
    %v7654 = vld [vmem:[#allocation11 + $0x4] sm:$0xf]
    %v7655 = vld [vmem:[#allocation11 + $0x8] sm:$0xf]
    %v7656 = vld [vmem:[#allocation11 + $0xc] sm:$0xf]
    %v7657 = vld [vmem:[#allocation11 + $0x10] sm:$0xf]
    %v7658 = vld [vmem:[#allocation11 + $0x14] sm:$0xf]
    %v7659 = vld [vmem:[#allocation11 + $0x18] sm:$0xf]
    %v7660 = vld [vmem:[#allocation11 + $0x1c] sm:$0xf]
    %v7661 = vld [vmem:[#allocation11 + $0x20] sm:$0xf]
    %v7662 = vld [vmem:[#allocation11 + $0x24] sm:$0xf]
    %v7663 = vld [vmem:[#allocation11 + $0x28] sm:$0xf]
    %v7664 = vld [vmem:[#allocation11 + $0x2c] sm:$0xf]
    %v7665 = vld [vmem:[#allocation11 + $0x30] sm:$0xf]
    %v7666 = vld [vmem:[#allocation11 + $0x34] sm:$0xf]
    %v7667 = vld [vmem:[#allocation11 + $0x38] sm:$0xf]
    %v7668 = vld [vmem:[#allocation11 + $0x3c] sm:$0xf]
    %v7669 = vld [vmem:[#allocation13] sm:$0x1]
    %v7671 = vperm.slane %v7669, 0
    %v7689 = vunpack.c.l.b16 %v7653
    %v7690 = vunpack.c.l.b16 %v7654
    %v7691 = vunpack.c.l.b16 %v7655
    %v7692 = vunpack.c.l.b16 %v7656
    %v7693 = vunpack.c.l.b16 %v7657
    %v7694 = vunpack.c.l.b16 %v7658
    %v7695 = vunpack.c.l.b16 %v7659
    %v7696 = vunpack.c.l.b16 %v7660
    %v7697 = vunpack.c.l.b16 %v7661
    %v7698 = vunpack.c.l.b16 %v7662
    %v7699 = vunpack.c.l.b16 %v7663
    %v7700 = vunpack.c.l.b16 %v7664
    %v7701 = vunpack.c.l.b16 %v7665
    %v7702 = vunpack.c.l.b16 %v7666
    %v7703 = vunpack.c.l.b16 %v7667
    %v7704 = vunpack.c.l.b16 %v7668
    %v7705 = vpack.c.b16 %v7690, %v7689
    %v7706 = vpack.c.b16 %v7692, %v7691
    %v7707 = vpack.c.b16 %v7694, %v7693
    %v7708 = vpack.c.b16 %v7696, %v7695
    %v7709 = vpack.c.b16 %v7698, %v7697
    %v7710 = vpack.c.b16 %v7700, %v7699
    %v7711 = vpack.c.b16 %v7702, %v7701
    %v7712 = vpack.c.b16 %v7704, %v7703
    %7721 = vmatpush.bf16.msra.mxu0 %v7712
    %7722 = vmatpush.bf16.msra.mxu0 %v7711
    %7723 = vmatpush.bf16.msra.mxu0 %v7710
    %7724 = vmatpush.bf16.msra.mxu0 %v7709
    %7725 = vmatpush.bf16.msra.mxu0 %v7708
    %7726 = vmatpush.bf16.msra.mxu0 %v7707
    %7727 = vmatpush.bf16.msra.mxu0 %v7706
    %7728 = vmatpush.bf16.msra.mxu0 %v7705
    %7729 = vmatmul.bf16.gmra.mxu0 %v7652
    %v7730 = vpop.f32.mrf.mxu0
    %v7731 = vadd.f32 %v7671, %v7730
    %v7732 = vpop.f32.mrf.mxu0
    %7733 = vdwg.mxu0
    %7734 = vst [vmem:[#allocation14] sm:$0xff] %v7731
    // Predicated region
    $region58: #{tpu_custom_call.1} parent=1 // pred_check
      _
    $region59: #{tpu_custom_call.1} parent=1 // pred_check_branch
      %7736 = sbr.rel (0) target = $region61
    $region60: #{tpu_custom_call.1} parent=1 // pred_region
      %7738 = vsyncadd [#allocation4], 0
      %s7740 = sshll.u32 [#allocation14], 4
      %s7741 = int_to_ptr.vmem [resolvable:$true] %s7740
      %s7742 = sshll.u32 %s7, 4
      %s7743 = int_to_ptr.hbm [resolvable:$true] %s7742
      %7745 = dma.vmem_to_hbm [thread:$0]  %s7741, 128, %s7743, [#allocation4]
    $region61: #{tpu_custom_call.1} parent=1 // pred_fallthru
      _
    // Predicated region
    $region62: #{tpu_custom_call.1} parent=1 // pred_check
      _
    $region63: #{tpu_custom_call.1} parent=1 // pred_check_branch
      %7747 = sbr.rel (0) target = $region65
    $region64: #{tpu_custom_call.1} parent=1 // pred_region
      %7749 = dma.done [#allocation4], 128
    $region65: #{tpu_custom_call.1} parent=1 // pred_fallthru
      _
    %7750 = vsyncpa [#allocation3], 1
    %7751 = vsyncpa [#allocation6], 1
    %7752 = vsyncpa [#allocation9], 1
    %7753 = vsyncpa [#allocation12], 1
    %7754 = vsyncpa [#allocation4], 1

</llo_original>
